<compile_context>
chip_gen: v5e
topology: v5e:2x2
jax: 0.10.0
libtpu: 0.0.40
codegen_flags: <defaults>
</compile_context>

<pallas_src>
import jax
import jax.numpy as jnp
from jax import lax
from jax.experimental import pallas as pl
from jax.experimental.pallas import tpu as pltpu

POOL_KS = (1, 3, 5, 9)
CONV_K = 7
DILATION_RATE = 2
EPS = 1e-5


def _tree_reduce(fn, xs):
    """Pairwise (balanced-tree) reduction to shorten the dependency chain."""
    xs = list(xs)
    while len(xs) > 1:
        nxt = [fn(xs[i], xs[i + 1]) for i in range(0, len(xs) - 1, 2)]
        if len(xs) % 2:
            nxt.append(xs[-1])
        xs = nxt
    return xs[0]


def _shift_zero(a, off, idx):
    """out[:, t] = a[:, t + off] (static off), zero fill out of range.

    `idx` is a hoisted broadcasted_iota over the last axis (reused by all calls).
    Requires |off| < a.shape[1].
    """
    if off == 0:
        return a
    t = a.shape[1]
    rolled = pltpu.roll(a, shift=(-off) % t, axis=1)
    if off > 0:
        valid = idx < (t - off)     # one-sided compare (t + off >= 0 always)
    else:
        valid = idx >= (-off)       # one-sided compare (t + off < T always)
    return jnp.where(valid, rolled, 0.0)


def _enhance_kernel(x_ref, convw_ref, convb_ref, gamma_ref, beta_ref,
                    w2t_ref, b2_ref, o_ref, normed_ref):
    ic = pl.program_id(1)
    BB, CT, T = x_ref.shape
    n_branch = len(POOL_KS)

    # ---- FirstBlock branches + InstanceNorm: once per batch block (ic == 0) ----
    @pl.when(ic == 0)
    def _():
        # xi: first input channel of each batch, packed batch-per-sublane.
        xi = jnp.squeeze(x_ref[:, 0:1, :], axis=1)            # (BB, T)
        idx = lax.broadcasted_iota(jnp.int32, (BB, T), 1)     # hoisted iota

        for bi, pk in enumerate(POOL_KS):
            d = pk // DILATION_RATE + 1
            if pk > 1:
                half = pk // 2
                ax = jnp.abs(xi)
                # max_pool1d(|x|, pk, stride=1, pad=pk//2): zero fill == -inf fill (|x| >= 0)
                mx = _tree_reduce(
                    jnp.maximum,
                    [_shift_zero(ax, o, idx) for o in range(-half, half + 1)])
                # avg_pool1d, count_include_pad=True: always divide by pk, pads add 0
                sm = _tree_reduce(
                    jnp.add,
                    [_shift_zero(mx, o, idx) for o in range(-half, half + 1)])
                trend = sm * (1.0 / pk)
            else:
                trend = xi
            # Dilated Conv1d(1->1, k=7, dilation=d, padding=3d): taps at (j-3)*d.
            taps = [convw_ref[bi, j] * _shift_zero(trend, (j - CONV_K // 2) * d, idx)
                    for j in range(CONV_K)]
            row = _tree_reduce(jnp.add, taps) + convb_ref[bi]          # (BB, T)

            # InstanceNorm1d(4, affine=True): per-(batch, branch) stats over T.
            m = jnp.mean(row, axis=1, keepdims=True)
            cen = row - m
            v = jnp.mean(cen * cen, axis=1, keepdims=True)             # biased var
            normed_ref[bi] = cen * lax.rsqrt(v + EPS) * gamma_ref[bi] + beta_ref[bi]

    # ---- Epilogue for this channel tile: 1x1 Conv1d(4 -> dim) + residual gate ----
    n = [normed_ref[bi] for bi in range(n_branch)]    # 4 x (BB, T), batch-packed
    c0 = ic * CT
    for cl in range(CT):
        co = c0 + cl
        y = ((n[0] * w2t_ref[0, co] + n[1] * w2t_ref[1, co])
             + (n[2] * w2t_ref[2, co] + n[3] * w2t_ref[3, co])
             + b2_ref[co])                                             # (BB, T)
        xr = jnp.squeeze(x_ref[:, cl:cl + 1, :], axis=1)               # (BB, T)
        o_ref[:, cl:cl + 1, :] = (xr + y * xr)[:, None, :]


def _largest_divisor_leq(n, cap):
    for d in range(min(cap, n), 0, -1):
        if n % d == 0:
            return d
    return 1


def _pick_channel_tile(C, BB, T, budget_bytes=24 * 1024 * 1024):
    """Channel tile: full C if C <= 8, else a multiple-of-8 divisor of C bounded
    so the double-buffered x/out blocks stay within a VMEM budget (v7x)."""
    if C <= 8:
        return C
    per_chan = 4 * BB * T * 4          # in + out, double buffered, f32
    limit = max(8, budget_bytes // per_chan)
    best = None
    ct = 8
    while ct <= C:
        if C % ct == 0 and ct <= limit:
            best = ct
        ct += 8
    if best is None:
        best = 8 if C % 8 == 0 else C  # smallest legal tile, else full C
    return best


def simple_enhance_block(x, conv_w, conv_b, gamma, beta, w2, b2, *, channel_tile=None):
    """x: (B, C, T) float32 with C == dim. Returns (B, C, T) = x + y * x."""
    B, C, T = x.shape
    # max conv reach = 3 * max dilation = 15 lanes; roll+mask shift needs |off| < T.
    assert T > 3 * (POOL_KS[-1] // DILATION_RATE + 1), "T too small for shift masks"

    BB = _largest_divisor_leq(B, 8)    # pack up to 8 batch rows into sublanes
    if channel_tile is None:
        CT = _pick_channel_tile(C, BB, T)
    else:
        CT = channel_tile
        assert C % CT == 0 and (CT == C or CT % 8 == 0), "bad channel_tile"

    w2_t = jnp.asarray(w2).T           # (4, dim): long axis last -> no SMEM pad blowup
    smem = pl.BlockSpec(memory_space=pltpu.MemorySpace.SMEM)
    grid = (B // BB, C // CT)

    return pl.pallas_call(
        _enhance_kernel,
        out_shape=jax.ShapeDtypeStruct((B, C, T), x.dtype),
        grid=grid,
        in_specs=[
            pl.BlockSpec((BB, CT, T), lambda ib, ic: (ib, ic, 0)),  # x tile
            smem,  # conv_w (4, 7)
            smem,  # conv_b (4,)
            smem,  # gamma  (4,)
            smem,  # beta   (4,)
            smem,  # w2^T   (4, dim)
            smem,  # b2     (dim,)
        ],
        out_specs=pl.BlockSpec((BB, CT, T), lambda ib, ic: (ib, ic, 0)),
        scratch_shapes=[pltpu.VMEM((len(POOL_KS), BB, T), jnp.float32)],
        compiler_params=pltpu.CompilerParams(
            # Batch-block axis is independent (megacore-parallel). The channel-tile
            # axis reuses the per-batch-block normed scratch, so it stays arbitrary.
            dimension_semantics=("parallel", "arbitrary"),
            vmem_limit_bytes=48 * 1024 * 1024),
    )(x, conv_w, conv_b, gamma, beta, w2_t, b2)


def _reference(x, conv_w, conv_b, gamma, beta, w2, b2):
    """Pure-JAX reference (reduce_window / conv_general_dilated)."""
    xi = x[:, :1, :]
    rows = []
    for bi, pk in enumerate(POOL_KS):
        d = pk // DILATION_RATE + 1
        if pk > 1:
            ax = jnp.abs(xi)
            mx = lax.reduce_window(ax, jnp.float32(-jnp.inf), lax.max,
                                   (1, 1, pk), (1, 1, 1),
                                   [(0, 0), (0, 0), (pk // 2, pk // 2)])
            sm = lax.reduce_window(mx, jnp.float32(0.0), lax.add,
                                   (1, 1, pk), (1, 1, 1),
                                   [(0, 0), (0, 0), (pk // 2, pk // 2)])
            trend = sm / pk
        else:
            trend = xi
        p = (CONV_K - 1) * d // 2
        conv = lax.conv_general_dilated(
            trend, conv_w[bi].reshape(1, 1, CONV_K),
            window_strides=(1,), padding=[(p, p)], rhs_dilation=(d,),
            dimension_numbers=("NCH", "OIH", "NCH"),
            precision=lax.Precision.HIGHEST)
        rows.append(conv + conv_b[bi])
    yi = jnp.concatenate(rows, axis=1)
    m = jnp.mean(yi, axis=-1, keepdims=True)
    v = jnp.mean((yi - m) ** 2, axis=-1, keepdims=True)
    ni = (yi - m) / jnp.sqrt(v + EPS) * gamma[None, :, None] + beta[None, :, None]
    y = jnp.einsum("oc,bct->bot", w2, ni,
                   precision=lax.Precision.HIGHEST) + b2[None, :, None]
    return x + y * x


if __name__ == "__main__":
    import numpy as np

    # Small but representative: B=16 -> two sublane-packed batch blocks of 8,
    # dim=16 with channel_tile=8 -> two channel tiles (exercises scratch reuse),
    # T=256 -> lane-dense output blocks. x must have dim channels (out = x + y*x).
    B, dim, T = 16, 16, 256

    key = jax.random.PRNGKey(0)
    ks = jax.random.split(key, 7)
    x      = jax.random.normal(ks[0], (B, dim, T), jnp.float32)
    conv_w = 0.3 * jax.random.normal(ks[1], (len(POOL_KS), CONV_K), jnp.float32)
    conv_b = 0.1 * jax.random.normal(ks[2], (len(POOL_KS),), jnp.float32)
    gamma  = 1.0 + 0.1 * jax.random.normal(ks[3], (len(POOL_KS),), jnp.float32)
    beta   = 0.1 * jax.random.normal(ks[4], (len(POOL_KS),), jnp.float32)
    w2     = 0.3 * jax.random.normal(ks[5], (dim, len(POOL_KS)), jnp.float32)
    b2     = 0.1 * jax.random.normal(ks[6], (dim,), jnp.float32)

    out = simple_enhance_block(x, conv_w, conv_b, gamma, beta, w2, b2,
                               channel_tile=8)
    out = jax.block_until_ready(out)

    ref = _reference(x, conv_w, conv_b, gamma, beta, w2, b2)
    np.testing.assert_allclose(np.asarray(out), np.asarray(ref),
                               rtol=1e-4, atol=1e-4)
    print("KERNEL_OK")
</pallas_src>

<mosaic_0001>
module attributes {stable_mosaic.version = 11 : i64} {
  func.func @_enhance_kernel(%arg0: i32, %arg1: i32, %arg2: memref<8x8x256xf32, #tpu.memory_space<vmem>>, %arg3: memref<4x7xf32, #tpu.memory_space<smem>>, %arg4: memref<4xf32, #tpu.memory_space<smem>>, %arg5: memref<4xf32, #tpu.memory_space<smem>>, %arg6: memref<4xf32, #tpu.memory_space<smem>>, %arg7: memref<4x16xf32, #tpu.memory_space<smem>>, %arg8: memref<16xf32, #tpu.memory_space<smem>>, %arg9: memref<8x8x256xf32, #tpu.memory_space<vmem>>, %arg10: memref<4x8x256xf32, #tpu.memory_space<vmem>>) attributes {dimension_semantics = [#tpu.dimension_semantics<parallel>, #tpu.dimension_semantics<arbitrary>], iteration_bounds = array<i64: 2, 2>, scalar_prefetch = 0 : i64, scratch_operands = 1 : i64, tpu.core_type = #tpu.core_type<tc>, window_params = [{transform_indices = @transform_0, window_bounds = array<i64: 8, 8, 256>}, {transform_indices = @transform_1, window_bounds = array<i64: 4, 7>}, {transform_indices = @transform_2, window_bounds = array<i64: 4>}, {transform_indices = @transform_3, window_bounds = array<i64: 4>}, {transform_indices = @transform_4, window_bounds = array<i64: 4>}, {transform_indices = @transform_5, window_bounds = array<i64: 4, 16>}, {transform_indices = @transform_6, window_bounds = array<i64: 16>}, {transform_indices = @transform_7, window_bounds = array<i64: 8, 8, 256>}]} {
    %c0_i32 = arith.constant 0 : i32
    %0 = arith.cmpi eq, %arg1, %c0_i32 : i32
    %1 = arith.extui %0 : i1 to i32
    %c0_i32_0 = arith.constant 0 : i32
    %2 = arith.cmpi ne, %1, %c0_i32_0 : i32
    scf.if %2 {
      %c0_86 = arith.constant 0 : index
      %c0_87 = arith.constant 0 : index
      %c0_88 = arith.constant 0 : index
      %252 = vector.load %arg2[%c0_86, %c0_87, %c0_88] : memref<8x8x256xf32, #tpu.memory_space<vmem>>, vector<8x1x256xf32>
      %253 = vector.shape_cast %252 : vector<8x1x256xf32> to vector<8x256xf32>
      %254 = tpu.iota {dimensions = array<i32: 1>} : vector<8x256xi32>
      %c0_89 = arith.constant 0 : index
      %c0_90 = arith.constant 0 : index
      %255 = memref.load %arg3[%c0_89, %c0_90] : memref<4x7xf32, #tpu.memory_space<smem>>
      %c3_i32_91 = arith.constant 3 : i32
      %256 = tpu.dynamic_rotate %253 by %c3_i32_91 dim 1 : vector<8x256xf32>, i32 -> vector<8x256xf32>
      %c3_i32_92 = arith.constant 3 : i32
      %257 = vector.broadcast %c3_i32_92 : i32 to vector<8x256xi32>
      %258 = arith.cmpi sge, %254, %257 : vector<8x256xi32>
      %cst = arith.constant 0.000000e+00 : f32
      %259 = vector.broadcast %cst : f32 to vector<8x256xf32>
      %260 = arith.select %258, %256, %259 : vector<8x256xi1>, vector<8x256xf32>
      %261 = vector.broadcast %255 : f32 to vector<8x256xf32>
      %262 = arith.mulf %261, %260 : vector<8x256xf32>
      %c0_93 = arith.constant 0 : index
      %c1_94 = arith.constant 1 : index
      %263 = memref.load %arg3[%c0_93, %c1_94] : memref<4x7xf32, #tpu.memory_space<smem>>
      %c2_i32_95 = arith.constant 2 : i32
      %264 = tpu.dynamic_rotate %253 by %c2_i32_95 dim 1 : vector<8x256xf32>, i32 -> vector<8x256xf32>
      %c2_i32_96 = arith.constant 2 : i32
      %265 = vector.broadcast %c2_i32_96 : i32 to vector<8x256xi32>
      %266 = arith.cmpi sge, %254, %265 : vector<8x256xi32>
      %cst_97 = arith.constant 0.000000e+00 : f32
      %267 = vector.broadcast %cst_97 : f32 to vector<8x256xf32>
      %268 = arith.select %266, %264, %267 : vector<8x256xi1>, vector<8x256xf32>
      %269 = vector.broadcast %263 : f32 to vector<8x256xf32>
      %270 = arith.mulf %269, %268 : vector<8x256xf32>
      %c0_98 = arith.constant 0 : index
      %c2_99 = arith.constant 2 : index
      %271 = memref.load %arg3[%c0_98, %c2_99] : memref<4x7xf32, #tpu.memory_space<smem>>
      %c1_i32_100 = arith.constant 1 : i32
      %272 = tpu.dynamic_rotate %253 by %c1_i32_100 dim 1 : vector<8x256xf32>, i32 -> vector<8x256xf32>
      %c1_i32_101 = arith.constant 1 : i32
      %273 = vector.broadcast %c1_i32_101 : i32 to vector<8x256xi32>
      %274 = arith.cmpi sge, %254, %273 : vector<8x256xi32>
      %cst_102 = arith.constant 0.000000e+00 : f32
      %275 = vector.broadcast %cst_102 : f32 to vector<8x256xf32>
      %276 = arith.select %274, %272, %275 : vector<8x256xi1>, vector<8x256xf32>
      %277 = vector.broadcast %271 : f32 to vector<8x256xf32>
      %278 = arith.mulf %277, %276 : vector<8x256xf32>
      %c0_103 = arith.constant 0 : index
      %c3_104 = arith.constant 3 : index
      %279 = memref.load %arg3[%c0_103, %c3_104] : memref<4x7xf32, #tpu.memory_space<smem>>
      %280 = vector.broadcast %279 : f32 to vector<8x256xf32>
      %281 = arith.mulf %280, %253 : vector<8x256xf32>
      %c0_105 = arith.constant 0 : index
      %c4_106 = arith.constant 4 : index
      %282 = memref.load %arg3[%c0_105, %c4_106] : memref<4x7xf32, #tpu.memory_space<smem>>
      %c255_i32 = arith.constant 255 : i32
      %283 = tpu.dynamic_rotate %253 by %c255_i32 dim 1 : vector<8x256xf32>, i32 -> vector<8x256xf32>
      %c255_i32_107 = arith.constant 255 : i32
      %284 = vector.broadcast %c255_i32_107 : i32 to vector<8x256xi32>
      %285 = arith.cmpi slt, %254, %284 : vector<8x256xi32>
      %cst_108 = arith.constant 0.000000e+00 : f32
      %286 = vector.broadcast %cst_108 : f32 to vector<8x256xf32>
      %287 = arith.select %285, %283, %286 : vector<8x256xi1>, vector<8x256xf32>
      %288 = vector.broadcast %282 : f32 to vector<8x256xf32>
      %289 = arith.mulf %288, %287 : vector<8x256xf32>
      %c0_109 = arith.constant 0 : index
      %c5_110 = arith.constant 5 : index
      %290 = memref.load %arg3[%c0_109, %c5_110] : memref<4x7xf32, #tpu.memory_space<smem>>
      %c254_i32 = arith.constant 254 : i32
      %291 = tpu.dynamic_rotate %253 by %c254_i32 dim 1 : vector<8x256xf32>, i32 -> vector<8x256xf32>
      %c254_i32_111 = arith.constant 254 : i32
      %292 = vector.broadcast %c254_i32_111 : i32 to vector<8x256xi32>
      %293 = arith.cmpi slt, %254, %292 : vector<8x256xi32>
      %cst_112 = arith.constant 0.000000e+00 : f32
      %294 = vector.broadcast %cst_112 : f32 to vector<8x256xf32>
      %295 = arith.select %293, %291, %294 : vector<8x256xi1>, vector<8x256xf32>
      %296 = vector.broadcast %290 : f32 to vector<8x256xf32>
      %297 = arith.mulf %296, %295 : vector<8x256xf32>
      %c0_113 = arith.constant 0 : index
      %c6_114 = arith.constant 6 : index
      %298 = memref.load %arg3[%c0_113, %c6_114] : memref<4x7xf32, #tpu.memory_space<smem>>
      %c253_i32 = arith.constant 253 : i32
      %299 = tpu.dynamic_rotate %253 by %c253_i32 dim 1 : vector<8x256xf32>, i32 -> vector<8x256xf32>
      %c253_i32_115 = arith.constant 253 : i32
      %300 = vector.broadcast %c253_i32_115 : i32 to vector<8x256xi32>
      %301 = arith.cmpi slt, %254, %300 : vector<8x256xi32>
      %cst_116 = arith.constant 0.000000e+00 : f32
      %302 = vector.broadcast %cst_116 : f32 to vector<8x256xf32>
      %303 = arith.select %301, %299, %302 : vector<8x256xi1>, vector<8x256xf32>
      %304 = vector.broadcast %298 : f32 to vector<8x256xf32>
      %305 = arith.mulf %304, %303 : vector<8x256xf32>
      %306 = arith.addf %262, %270 : vector<8x256xf32>
      %307 = arith.addf %278, %281 : vector<8x256xf32>
      %308 = arith.addf %289, %297 : vector<8x256xf32>
      %309 = arith.addf %306, %307 : vector<8x256xf32>
      %310 = arith.addf %308, %305 : vector<8x256xf32>
      %311 = arith.addf %309, %310 : vector<8x256xf32>
      %c0_117 = arith.constant 0 : index
      %312 = memref.load %arg4[%c0_117] : memref<4xf32, #tpu.memory_space<smem>>
      %313 = vector.broadcast %312 : f32 to vector<8x256xf32>
      %314 = arith.addf %311, %313 : vector<8x256xf32>
      %cst_118 = arith.constant dense<0.000000e+00> : vector<8xf32>
      %315 = vector.multi_reduction <add>, %314, %cst_118 [1] : vector<8x256xf32> to vector<8xf32>
      %316 = vector.shape_cast %315 : vector<8xf32> to vector<8x1xf32>
      %cst_119 = arith.constant 2.560000e+02 : f32
      %317 = vector.broadcast %cst_119 : f32 to vector<8x1xf32>
      %318 = arith.divf %316, %317 : vector<8x1xf32>
      %319 = vector.broadcast %318 : vector<8x1xf32> to vector<8x256xf32>
      %320 = arith.subf %314, %319 : vector<8x256xf32>
      %321 = arith.mulf %320, %320 : vector<8x256xf32>
      %cst_120 = arith.constant dense<0.000000e+00> : vector<8xf32>
      %322 = vector.multi_reduction <add>, %321, %cst_120 [1] : vector<8x256xf32> to vector<8xf32>
      %323 = vector.shape_cast %322 : vector<8xf32> to vector<8x1xf32>
      %cst_121 = arith.constant 2.560000e+02 : f32
      %324 = vector.broadcast %cst_121 : f32 to vector<8x1xf32>
      %325 = arith.divf %323, %324 : vector<8x1xf32>
      %cst_122 = arith.constant 9.99999974E-6 : f32
      %326 = vector.broadcast %cst_122 : f32 to vector<8x1xf32>
      %327 = arith.addf %325, %326 : vector<8x1xf32>
      %328 = math.rsqrt %327 : vector<8x1xf32>
      %329 = vector.broadcast %328 : vector<8x1xf32> to vector<8x256xf32>
      %330 = arith.mulf %320, %329 : vector<8x256xf32>
      %c0_123 = arith.constant 0 : index
      %331 = memref.load %arg5[%c0_123] : memref<4xf32, #tpu.memory_space<smem>>
      %332 = vector.broadcast %331 : f32 to vector<8x256xf32>
      %333 = arith.mulf %330, %332 : vector<8x256xf32>
      %c0_124 = arith.constant 0 : index
      %334 = memref.load %arg6[%c0_124] : memref<4xf32, #tpu.memory_space<smem>>
      %335 = vector.broadcast %334 : f32 to vector<8x256xf32>
      %336 = arith.addf %333, %335 : vector<8x256xf32>
      %c0_125 = arith.constant 0 : index
      %c0_126 = arith.constant 0 : index
      %c0_127 = arith.constant 0 : index
      %337 = vector.load %arg10[%c0_125, %c0_126, %c0_127] : memref<4x8x256xf32, #tpu.memory_space<vmem>>, vector<1x8x256xf32>
      %338 = vector.shape_cast %337 : vector<1x8x256xf32> to vector<8x256xf32>
      %339 = vector.shape_cast %336 : vector<8x256xf32> to vector<1x8x256xf32>
      tpu.vector_store %arg10[%c0_125, %c0_126, %c0_127], %339 {strides = array<i32>} : memref<4x8x256xf32, #tpu.memory_space<vmem>>, vector<1x8x256xf32>,
      %340 = math.absf %253 : vector<8x256xf32>
      %c1_i32_128 = arith.constant 1 : i32
      %341 = tpu.dynamic_rotate %340 by %c1_i32_128 dim 1 : vector<8x256xf32>, i32 -> vector<8x256xf32>
      %c1_i32_129 = arith.constant 1 : i32
      %342 = vector.broadcast %c1_i32_129 : i32 to vector<8x256xi32>
      %343 = arith.cmpi sge, %254, %342 : vector<8x256xi32>
      %cst_130 = arith.constant 0.000000e+00 : f32
      %344 = vector.broadcast %cst_130 : f32 to vector<8x256xf32>
      %345 = arith.select %343, %341, %344 : vector<8x256xi1>, vector<8x256xf32>
      %c255_i32_131 = arith.constant 255 : i32
      %346 = tpu.dynamic_rotate %340 by %c255_i32_131 dim 1 : vector<8x256xf32>, i32 -> vector<8x256xf32>
      %c255_i32_132 = arith.constant 255 : i32
      %347 = vector.broadcast %c255_i32_132 : i32 to vector<8x256xi32>
      %348 = arith.cmpi slt, %254, %347 : vector<8x256xi32>
      %cst_133 = arith.constant 0.000000e+00 : f32
      %349 = vector.broadcast %cst_133 : f32 to vector<8x256xf32>
      %350 = arith.select %348, %346, %349 : vector<8x256xi1>, vector<8x256xf32>
      %351 = arith.maximumf %345, %340 : vector<8x256xf32>
      %352 = arith.maximumf %351, %350 : vector<8x256xf32>
      %c1_i32_134 = arith.constant 1 : i32
      %353 = tpu.dynamic_rotate %352 by %c1_i32_134 dim 1 : vector<8x256xf32>, i32 -> vector<8x256xf32>
      %c1_i32_135 = arith.constant 1 : i32
      %354 = vector.broadcast %c1_i32_135 : i32 to vector<8x256xi32>
      %355 = arith.cmpi sge, %254, %354 : vector<8x256xi32>
      %cst_136 = arith.constant 0.000000e+00 : f32
      %356 = vector.broadcast %cst_136 : f32 to vector<8x256xf32>
      %357 = arith.select %355, %353, %356 : vector<8x256xi1>, vector<8x256xf32>
      %c255_i32_137 = arith.constant 255 : i32
      %358 = tpu.dynamic_rotate %352 by %c255_i32_137 dim 1 : vector<8x256xf32>, i32 -> vector<8x256xf32>
      %c255_i32_138 = arith.constant 255 : i32
      %359 = vector.broadcast %c255_i32_138 : i32 to vector<8x256xi32>
      %360 = arith.cmpi slt, %254, %359 : vector<8x256xi32>
      %cst_139 = arith.constant 0.000000e+00 : f32
      %361 = vector.broadcast %cst_139 : f32 to vector<8x256xf32>
      %362 = arith.select %360, %358, %361 : vector<8x256xi1>, vector<8x256xf32>
      %363 = arith.addf %357, %352 : vector<8x256xf32>
      %364 = arith.addf %363, %362 : vector<8x256xf32>
      %cst_140 = arith.constant 0.333333343 : f32
      %365 = vector.broadcast %cst_140 : f32 to vector<8x256xf32>
      %366 = arith.mulf %364, %365 : vector<8x256xf32>
      %c1_141 = arith.constant 1 : index
      %c0_142 = arith.constant 0 : index
      %367 = memref.load %arg3[%c1_141, %c0_142] : memref<4x7xf32, #tpu.memory_space<smem>>
      %c6_i32_143 = arith.constant 6 : i32
      %368 = tpu.dynamic_rotate %366 by %c6_i32_143 dim 1 : vector<8x256xf32>, i32 -> vector<8x256xf32>
      %c6_i32_144 = arith.constant 6 : i32
      %369 = vector.broadcast %c6_i32_144 : i32 to vector<8x256xi32>
      %370 = arith.cmpi sge, %254, %369 : vector<8x256xi32>
      %cst_145 = arith.constant 0.000000e+00 : f32
      %371 = vector.broadcast %cst_145 : f32 to vector<8x256xf32>
      %372 = arith.select %370, %368, %371 : vector<8x256xi1>, vector<8x256xf32>
      %373 = vector.broadcast %367 : f32 to vector<8x256xf32>
      %374 = arith.mulf %373, %372 : vector<8x256xf32>
      %c1_146 = arith.constant 1 : index
      %c1_147 = arith.constant 1 : index
      %375 = memref.load %arg3[%c1_146, %c1_147] : memref<4x7xf32, #tpu.memory_space<smem>>
      %c4_i32_148 = arith.constant 4 : i32
      %376 = tpu.dynamic_rotate %366 by %c4_i32_148 dim 1 : vector<8x256xf32>, i32 -> vector<8x256xf32>
      %c4_i32_149 = arith.constant 4 : i32
      %377 = vector.broadcast %c4_i32_149 : i32 to vector<8x256xi32>
      %378 = arith.cmpi sge, %254, %377 : vector<8x256xi32>
      %cst_150 = arith.constant 0.000000e+00 : f32
      %379 = vector.broadcast %cst_150 : f32 to vector<8x256xf32>
      %380 = arith.select %378, %376, %379 : vector<8x256xi1>, vector<8x256xf32>
      %381 = vector.broadcast %375 : f32 to vector<8x256xf32>
      %382 = arith.mulf %381, %380 : vector<8x256xf32>
      %c1_151 = arith.constant 1 : index
      %c2_152 = arith.constant 2 : index
      %383 = memref.load %arg3[%c1_151, %c2_152] : memref<4x7xf32, #tpu.memory_space<smem>>
      %c2_i32_153 = arith.constant 2 : i32
      %384 = tpu.dynamic_rotate %366 by %c2_i32_153 dim 1 : vector<8x256xf32>, i32 -> vector<8x256xf32>
      %c2_i32_154 = arith.constant 2 : i32
      %385 = vector.broadcast %c2_i32_154 : i32 to vector<8x256xi32>
      %386 = arith.cmpi sge, %254, %385 : vector<8x256xi32>
      %cst_155 = arith.constant 0.000000e+00 : f32
      %387 = vector.broadcast %cst_155 : f32 to vector<8x256xf32>
      %388 = arith.select %386, %384, %387 : vector<8x256xi1>, vector<8x256xf32>
      %389 = vector.broadcast %383 : f32 to vector<8x256xf32>
      %390 = arith.mulf %389, %388 : vector<8x256xf32>
      %c1_156 = arith.constant 1 : index
      %c3_157 = arith.constant 3 : index
      %391 = memref.load %arg3[%c1_156, %c3_157] : memref<4x7xf32, #tpu.memory_space<smem>>
      %392 = vector.broadcast %391 : f32 to vector<8x256xf32>
      %393 = arith.mulf %392, %366 : vector<8x256xf32>
      %c1_158 = arith.constant 1 : index
      %c4_159 = arith.constant 4 : index
      %394 = memref.load %arg3[%c1_158, %c4_159] : memref<4x7xf32, #tpu.memory_space<smem>>
      %c254_i32_160 = arith.constant 254 : i32
      %395 = tpu.dynamic_rotate %366 by %c254_i32_160 dim 1 : vector<8x256xf32>, i32 -> vector<8x256xf32>
      %c254_i32_161 = arith.constant 254 : i32
      %396 = vector.broadcast %c254_i32_161 : i32 to vector<8x256xi32>
      %397 = arith.cmpi slt, %254, %396 : vector<8x256xi32>
      %cst_162 = arith.constant 0.000000e+00 : f32
      %398 = vector.broadcast %cst_162 : f32 to vector<8x256xf32>
      %399 = arith.select %397, %395, %398 : vector<8x256xi1>, vector<8x256xf32>
      %400 = vector.broadcast %394 : f32 to vector<8x256xf32>
      %401 = arith.mulf %400, %399 : vector<8x256xf32>
      %c1_163 = arith.constant 1 : index
      %c5_164 = arith.constant 5 : index
      %402 = memref.load %arg3[%c1_163, %c5_164] : memref<4x7xf32, #tpu.memory_space<smem>>
      %c252_i32 = arith.constant 252 : i32
      %403 = tpu.dynamic_rotate %366 by %c252_i32 dim 1 : vector<8x256xf32>, i32 -> vector<8x256xf32>
      %c252_i32_165 = arith.constant 252 : i32
      %404 = vector.broadcast %c252_i32_165 : i32 to vector<8x256xi32>
      %405 = arith.cmpi slt, %254, %404 : vector<8x256xi32>
      %cst_166 = arith.constant 0.000000e+00 : f32
      %406 = vector.broadcast %cst_166 : f32 to vector<8x256xf32>
      %407 = arith.select %405, %403, %406 : vector<8x256xi1>, vector<8x256xf32>
      %408 = vector.broadcast %402 : f32 to vector<8x256xf32>
      %409 = arith.mulf %408, %407 : vector<8x256xf32>
      %c1_167 = arith.constant 1 : index
      %c6_168 = arith.constant 6 : index
      %410 = memref.load %arg3[%c1_167, %c6_168] : memref<4x7xf32, #tpu.memory_space<smem>>
      %c250_i32 = arith.constant 250 : i32
      %411 = tpu.dynamic_rotate %366 by %c250_i32 dim 1 : vector<8x256xf32>, i32 -> vector<8x256xf32>
      %c250_i32_169 = arith.constant 250 : i32
      %412 = vector.broadcast %c250_i32_169 : i32 to vector<8x256xi32>
      %413 = arith.cmpi slt, %254, %412 : vector<8x256xi32>
      %cst_170 = arith.constant 0.000000e+00 : f32
      %414 = vector.broadcast %cst_170 : f32 to vector<8x256xf32>
      %415 = arith.select %413, %411, %414 : vector<8x256xi1>, vector<8x256xf32>
      %416 = vector.broadcast %410 : f32 to vector<8x256xf32>
      %417 = arith.mulf %416, %415 : vector<8x256xf32>
      %418 = arith.addf %374, %382 : vector<8x256xf32>
      %419 = arith.addf %390, %393 : vector<8x256xf32>
      %420 = arith.addf %401, %409 : vector<8x256xf32>
      %421 = arith.addf %418, %419 : vector<8x256xf32>
      %422 = arith.addf %420, %417 : vector<8x256xf32>
      %423 = arith.addf %421, %422 : vector<8x256xf32>
      %c1_171 = arith.constant 1 : index
      %424 = memref.load %arg4[%c1_171] : memref<4xf32, #tpu.memory_space<smem>>
      %425 = vector.broadcast %424 : f32 to vector<8x256xf32>
      %426 = arith.addf %423, %425 : vector<8x256xf32>
      %cst_172 = arith.constant dense<0.000000e+00> : vector<8xf32>
      %427 = vector.multi_reduction <add>, %426, %cst_172 [1] : vector<8x256xf32> to vector<8xf32>
      %428 = vector.shape_cast %427 : vector<8xf32> to vector<8x1xf32>
      %cst_173 = arith.constant 2.560000e+02 : f32
      %429 = vector.broadcast %cst_173 : f32 to vector<8x1xf32>
      %430 = arith.divf %428, %429 : vector<8x1xf32>
      %431 = vector.broadcast %430 : vector<8x1xf32> to vector<8x256xf32>
      %432 = arith.subf %426, %431 : vector<8x256xf32>
      %433 = arith.mulf %432, %432 : vector<8x256xf32>
      %cst_174 = arith.constant dense<0.000000e+00> : vector<8xf32>
      %434 = vector.multi_reduction <add>, %433, %cst_174 [1] : vector<8x256xf32> to vector<8xf32>
      %435 = vector.shape_cast %434 : vector<8xf32> to vector<8x1xf32>
      %cst_175 = arith.constant 2.560000e+02 : f32
      %436 = vector.broadcast %cst_175 : f32 to vector<8x1xf32>
      %437 = arith.divf %435, %436 : vector<8x1xf32>
      %cst_176 = arith.constant 9.99999974E-6 : f32
      %438 = vector.broadcast %cst_176 : f32 to vector<8x1xf32>
      %439 = arith.addf %437, %438 : vector<8x1xf32>
      %440 = math.rsqrt %439 : vector<8x1xf32>
      %441 = vector.broadcast %440 : vector<8x1xf32> to vector<8x256xf32>
      %442 = arith.mulf %432, %441 : vector<8x256xf32>
      %c1_177 = arith.constant 1 : index
      %443 = memref.load %arg5[%c1_177] : memref<4xf32, #tpu.memory_space<smem>>
      %444 = vector.broadcast %443 : f32 to vector<8x256xf32>
      %445 = arith.mulf %442, %444 : vector<8x256xf32>
      %c1_178 = arith.constant 1 : index
      %446 = memref.load %arg6[%c1_178] : memref<4xf32, #tpu.memory_space<smem>>
      %447 = vector.broadcast %446 : f32 to vector<8x256xf32>
      %448 = arith.addf %445, %447 : vector<8x256xf32>
      %c1_179 = arith.constant 1 : index
      %c0_180 = arith.constant 0 : index
      %c0_181 = arith.constant 0 : index
      %449 = vector.load %arg10[%c1_179, %c0_180, %c0_181] : memref<4x8x256xf32, #tpu.memory_space<vmem>>, vector<1x8x256xf32>
      %450 = vector.shape_cast %449 : vector<1x8x256xf32> to vector<8x256xf32>
      %451 = vector.shape_cast %448 : vector<8x256xf32> to vector<1x8x256xf32>
      tpu.vector_store %arg10[%c1_179, %c0_180, %c0_181], %451 {strides = array<i32>} : memref<4x8x256xf32, #tpu.memory_space<vmem>>, vector<1x8x256xf32>,
      %452 = math.absf %253 : vector<8x256xf32>
      %c2_i32_182 = arith.constant 2 : i32
      %453 = tpu.dynamic_rotate %452 by %c2_i32_182 dim 1 : vector<8x256xf32>, i32 -> vector<8x256xf32>
      %c2_i32_183 = arith.constant 2 : i32
      %454 = vector.broadcast %c2_i32_183 : i32 to vector<8x256xi32>
      %455 = arith.cmpi sge, %254, %454 : vector<8x256xi32>
      %cst_184 = arith.constant 0.000000e+00 : f32
      %456 = vector.broadcast %cst_184 : f32 to vector<8x256xf32>
      %457 = arith.select %455, %453, %456 : vector<8x256xi1>, vector<8x256xf32>
      %c1_i32_185 = arith.constant 1 : i32
      %458 = tpu.dynamic_rotate %452 by %c1_i32_185 dim 1 : vector<8x256xf32>, i32 -> vector<8x256xf32>
      %c1_i32_186 = arith.constant 1 : i32
      %459 = vector.broadcast %c1_i32_186 : i32 to vector<8x256xi32>
      %460 = arith.cmpi sge, %254, %459 : vector<8x256xi32>
      %cst_187 = arith.constant 0.000000e+00 : f32
      %461 = vector.broadcast %cst_187 : f32 to vector<8x256xf32>
      %462 = arith.select %460, %458, %461 : vector<8x256xi1>, vector<8x256xf32>
      %c255_i32_188 = arith.constant 255 : i32
      %463 = tpu.dynamic_rotate %452 by %c255_i32_188 dim 1 : vector<8x256xf32>, i32 -> vector<8x256xf32>
      %c255_i32_189 = arith.constant 255 : i32
      %464 = vector.broadcast %c255_i32_189 : i32 to vector<8x256xi32>
      %465 = arith.cmpi slt, %254, %464 : vector<8x256xi32>
      %cst_190 = arith.constant 0.000000e+00 : f32
      %466 = vector.broadcast %cst_190 : f32 to vector<8x256xf32>
      %467 = arith.select %465, %463, %466 : vector<8x256xi1>, vector<8x256xf32>
      %c254_i32_191 = arith.constant 254 : i32
      %468 = tpu.dynamic_rotate %452 by %c254_i32_191 dim 1 : vector<8x256xf32>, i32 -> vector<8x256xf32>
      %c254_i32_192 = arith.constant 254 : i32
      %469 = vector.broadcast %c254_i32_192 : i32 to vector<8x256xi32>
      %470 = arith.cmpi slt, %254, %469 : vector<8x256xi32>
      %cst_193 = arith.constant 0.000000e+00 : f32
      %471 = vector.broadcast %cst_193 : f32 to vector<8x256xf32>
      %472 = arith.select %470, %468, %471 : vector<8x256xi1>, vector<8x256xf32>
      %473 = arith.maximumf %457, %462 : vector<8x256xf32>
      %474 = arith.maximumf %452, %467 : vector<8x256xf32>
      %475 = arith.maximumf %473, %474 : vector<8x256xf32>
      %476 = arith.maximumf %475, %472 : vector<8x256xf32>
      %c2_i32_194 = arith.constant 2 : i32
      %477 = tpu.dynamic_rotate %476 by %c2_i32_194 dim 1 : vector<8x256xf32>, i32 -> vector<8x256xf32>
      %c2_i32_195 = arith.constant 2 : i32
      %478 = vector.broadcast %c2_i32_195 : i32 to vector<8x256xi32>
      %479 = arith.cmpi sge, %254, %478 : vector<8x256xi32>
      %cst_196 = arith.constant 0.000000e+00 : f32
      %480 = vector.broadcast %cst_196 : f32 to vector<8x256xf32>
      %481 = arith.select %479, %477, %480 : vector<8x256xi1>, vector<8x256xf32>
      %c1_i32_197 = arith.constant 1 : i32
      %482 = tpu.dynamic_rotate %476 by %c1_i32_197 dim 1 : vector<8x256xf32>, i32 -> vector<8x256xf32>
      %c1_i32_198 = arith.constant 1 : i32
      %483 = vector.broadcast %c1_i32_198 : i32 to vector<8x256xi32>
      %484 = arith.cmpi sge, %254, %483 : vector<8x256xi32>
      %cst_199 = arith.constant 0.000000e+00 : f32
      %485 = vector.broadcast %cst_199 : f32 to vector<8x256xf32>
      %486 = arith.select %484, %482, %485 : vector<8x256xi1>, vector<8x256xf32>
      %c255_i32_200 = arith.constant 255 : i32
      %487 = tpu.dynamic_rotate %476 by %c255_i32_200 dim 1 : vector<8x256xf32>, i32 -> vector<8x256xf32>
      %c255_i32_201 = arith.constant 255 : i32
      %488 = vector.broadcast %c255_i32_201 : i32 to vector<8x256xi32>
      %489 = arith.cmpi slt, %254, %488 : vector<8x256xi32>
      %cst_202 = arith.constant 0.000000e+00 : f32
      %490 = vector.broadcast %cst_202 : f32 to vector<8x256xf32>
      %491 = arith.select %489, %487, %490 : vector<8x256xi1>, vector<8x256xf32>
      %c254_i32_203 = arith.constant 254 : i32
      %492 = tpu.dynamic_rotate %476 by %c254_i32_203 dim 1 : vector<8x256xf32>, i32 -> vector<8x256xf32>
      %c254_i32_204 = arith.constant 254 : i32
      %493 = vector.broadcast %c254_i32_204 : i32 to vector<8x256xi32>
      %494 = arith.cmpi slt, %254, %493 : vector<8x256xi32>
      %cst_205 = arith.constant 0.000000e+00 : f32
      %495 = vector.broadcast %cst_205 : f32 to vector<8x256xf32>
      %496 = arith.select %494, %492, %495 : vector<8x256xi1>, vector<8x256xf32>
      %497 = arith.addf %481, %486 : vector<8x256xf32>
      %498 = arith.addf %476, %491 : vector<8x256xf32>
      %499 = arith.addf %497, %498 : vector<8x256xf32>
      %500 = arith.addf %499, %496 : vector<8x256xf32>
      %cst_206 = arith.constant 2.000000e-01 : f32
      %501 = vector.broadcast %cst_206 : f32 to vector<8x256xf32>
      %502 = arith.mulf %500, %501 : vector<8x256xf32>
      %c2_207 = arith.constant 2 : index
      %c0_208 = arith.constant 0 : index
      %503 = memref.load %arg3[%c2_207, %c0_208] : memref<4x7xf32, #tpu.memory_space<smem>>
      %c9_i32 = arith.constant 9 : i32
      %504 = tpu.dynamic_rotate %502 by %c9_i32 dim 1 : vector<8x256xf32>, i32 -> vector<8x256xf32>
      %c9_i32_209 = arith.constant 9 : i32
      %505 = vector.broadcast %c9_i32_209 : i32 to vector<8x256xi32>
      %506 = arith.cmpi sge, %254, %505 : vector<8x256xi32>
      %cst_210 = arith.constant 0.000000e+00 : f32
      %507 = vector.broadcast %cst_210 : f32 to vector<8x256xf32>
      %508 = arith.select %506, %504, %507 : vector<8x256xi1>, vector<8x256xf32>
      %509 = vector.broadcast %503 : f32 to vector<8x256xf32>
      %510 = arith.mulf %509, %508 : vector<8x256xf32>
      %c2_211 = arith.constant 2 : index
      %c1_212 = arith.constant 1 : index
      %511 = memref.load %arg3[%c2_211, %c1_212] : memref<4x7xf32, #tpu.memory_space<smem>>
      %c6_i32_213 = arith.constant 6 : i32
      %512 = tpu.dynamic_rotate %502 by %c6_i32_213 dim 1 : vector<8x256xf32>, i32 -> vector<8x256xf32>
      %c6_i32_214 = arith.constant 6 : i32
      %513 = vector.broadcast %c6_i32_214 : i32 to vector<8x256xi32>
      %514 = arith.cmpi sge, %254, %513 : vector<8x256xi32>
      %cst_215 = arith.constant 0.000000e+00 : f32
      %515 = vector.broadcast %cst_215 : f32 to vector<8x256xf32>
      %516 = arith.select %514, %512, %515 : vector<8x256xi1>, vector<8x256xf32>
      %517 = vector.broadcast %511 : f32 to vector<8x256xf32>
      %518 = arith.mulf %517, %516 : vector<8x256xf32>
      %c2_216 = arith.constant 2 : index
      %c2_217 = arith.constant 2 : index
      %519 = memref.load %arg3[%c2_216, %c2_217] : memref<4x7xf32, #tpu.memory_space<smem>>
      %c3_i32_218 = arith.constant 3 : i32
      %520 = tpu.dynamic_rotate %502 by %c3_i32_218 dim 1 : vector<8x256xf32>, i32 -> vector<8x256xf32>
      %c3_i32_219 = arith.constant 3 : i32
      %521 = vector.broadcast %c3_i32_219 : i32 to vector<8x256xi32>
      %522 = arith.cmpi sge, %254, %521 : vector<8x256xi32>
      %cst_220 = arith.constant 0.000000e+00 : f32
      %523 = vector.broadcast %cst_220 : f32 to vector<8x256xf32>
      %524 = arith.select %522, %520, %523 : vector<8x256xi1>, vector<8x256xf32>
      %525 = vector.broadcast %519 : f32 to vector<8x256xf32>
      %526 = arith.mulf %525, %524 : vector<8x256xf32>
      %c2_221 = arith.constant 2 : index
      %c3_222 = arith.constant 3 : index
      %527 = memref.load %arg3[%c2_221, %c3_222] : memref<4x7xf32, #tpu.memory_space<smem>>
      %528 = vector.broadcast %527 : f32 to vector<8x256xf32>
      %529 = arith.mulf %528, %502 : vector<8x256xf32>
      %c2_223 = arith.constant 2 : index
      %c4_224 = arith.constant 4 : index
      %530 = memref.load %arg3[%c2_223, %c4_224] : memref<4x7xf32, #tpu.memory_space<smem>>
      %c253_i32_225 = arith.constant 253 : i32
      %531 = tpu.dynamic_rotate %502 by %c253_i32_225 dim 1 : vector<8x256xf32>, i32 -> vector<8x256xf32>
      %c253_i32_226 = arith.constant 253 : i32
      %532 = vector.broadcast %c253_i32_226 : i32 to vector<8x256xi32>
      %533 = arith.cmpi slt, %254, %532 : vector<8x256xi32>
      %cst_227 = arith.constant 0.000000e+00 : f32
      %534 = vector.broadcast %cst_227 : f32 to vector<8x256xf32>
      %535 = arith.select %533, %531, %534 : vector<8x256xi1>, vector<8x256xf32>
      %536 = vector.broadcast %530 : f32 to vector<8x256xf32>
      %537 = arith.mulf %536, %535 : vector<8x256xf32>
      %c2_228 = arith.constant 2 : index
      %c5_229 = arith.constant 5 : index
      %538 = memref.load %arg3[%c2_228, %c5_229] : memref<4x7xf32, #tpu.memory_space<smem>>
      %c250_i32_230 = arith.constant 250 : i32
      %539 = tpu.dynamic_rotate %502 by %c250_i32_230 dim 1 : vector<8x256xf32>, i32 -> vector<8x256xf32>
      %c250_i32_231 = arith.constant 250 : i32
      %540 = vector.broadcast %c250_i32_231 : i32 to vector<8x256xi32>
      %541 = arith.cmpi slt, %254, %540 : vector<8x256xi32>
      %cst_232 = arith.constant 0.000000e+00 : f32
      %542 = vector.broadcast %cst_232 : f32 to vector<8x256xf32>
      %543 = arith.select %541, %539, %542 : vector<8x256xi1>, vector<8x256xf32>
      %544 = vector.broadcast %538 : f32 to vector<8x256xf32>
      %545 = arith.mulf %544, %543 : vector<8x256xf32>
      %c2_233 = arith.constant 2 : index
      %c6_234 = arith.constant 6 : index
      %546 = memref.load %arg3[%c2_233, %c6_234] : memref<4x7xf32, #tpu.memory_space<smem>>
      %c247_i32 = arith.constant 247 : i32
      %547 = tpu.dynamic_rotate %502 by %c247_i32 dim 1 : vector<8x256xf32>, i32 -> vector<8x256xf32>
      %c247_i32_235 = arith.constant 247 : i32
      %548 = vector.broadcast %c247_i32_235 : i32 to vector<8x256xi32>
      %549 = arith.cmpi slt, %254, %548 : vector<8x256xi32>
      %cst_236 = arith.constant 0.000000e+00 : f32
      %550 = vector.broadcast %cst_236 : f32 to vector<8x256xf32>
      %551 = arith.select %549, %547, %550 : vector<8x256xi1>, vector<8x256xf32>
      %552 = vector.broadcast %546 : f32 to vector<8x256xf32>
      %553 = arith.mulf %552, %551 : vector<8x256xf32>
      %554 = arith.addf %510, %518 : vector<8x256xf32>
      %555 = arith.addf %526, %529 : vector<8x256xf32>
      %556 = arith.addf %537, %545 : vector<8x256xf32>
      %557 = arith.addf %554, %555 : vector<8x256xf32>
      %558 = arith.addf %556, %553 : vector<8x256xf32>
      %559 = arith.addf %557, %558 : vector<8x256xf32>
      %c2_237 = arith.constant 2 : index
      %560 = memref.load %arg4[%c2_237] : memref<4xf32, #tpu.memory_space<smem>>
      %561 = vector.broadcast %560 : f32 to vector<8x256xf32>
      %562 = arith.addf %559, %561 : vector<8x256xf32>
      %cst_238 = arith.constant dense<0.000000e+00> : vector<8xf32>
      %563 = vector.multi_reduction <add>, %562, %cst_238 [1] : vector<8x256xf32> to vector<8xf32>
      %564 = vector.shape_cast %563 : vector<8xf32> to vector<8x1xf32>
      %cst_239 = arith.constant 2.560000e+02 : f32
      %565 = vector.broadcast %cst_239 : f32 to vector<8x1xf32>
      %566 = arith.divf %564, %565 : vector<8x1xf32>
      %567 = vector.broadcast %566 : vector<8x1xf32> to vector<8x256xf32>
      %568 = arith.subf %562, %567 : vector<8x256xf32>
      %569 = arith.mulf %568, %568 : vector<8x256xf32>
      %cst_240 = arith.constant dense<0.000000e+00> : vector<8xf32>
      %570 = vector.multi_reduction <add>, %569, %cst_240 [1] : vector<8x256xf32> to vector<8xf32>
      %571 = vector.shape_cast %570 : vector<8xf32> to vector<8x1xf32>
      %cst_241 = arith.constant 2.560000e+02 : f32
      %572 = vector.broadcast %cst_241 : f32 to vector<8x1xf32>
      %573 = arith.divf %571, %572 : vector<8x1xf32>
      %cst_242 = arith.constant 9.99999974E-6 : f32
      %574 = vector.broadcast %cst_242 : f32 to vector<8x1xf32>
      %575 = arith.addf %573, %574 : vector<8x1xf32>
      %576 = math.rsqrt %575 : vector<8x1xf32>
      %577 = vector.broadcast %576 : vector<8x1xf32> to vector<8x256xf32>
      %578 = arith.mulf %568, %577 : vector<8x256xf32>
      %c2_243 = arith.constant 2 : index
      %579 = memref.load %arg5[%c2_243] : memref<4xf32, #tpu.memory_space<smem>>
      %580 = vector.broadcast %579 : f32 to vector<8x256xf32>
      %581 = arith.mulf %578, %580 : vector<8x256xf32>
      %c2_244 = arith.constant 2 : index
      %582 = memref.load %arg6[%c2_244] : memref<4xf32, #tpu.memory_space<smem>>
      %583 = vector.broadcast %582 : f32 to vector<8x256xf32>
      %584 = arith.addf %581, %583 : vector<8x256xf32>
      %c2_245 = arith.constant 2 : index
      %c0_246 = arith.constant 0 : index
      %c0_247 = arith.constant 0 : index
      %585 = vector.load %arg10[%c2_245, %c0_246, %c0_247] : memref<4x8x256xf32, #tpu.memory_space<vmem>>, vector<1x8x256xf32>
      %586 = vector.shape_cast %585 : vector<1x8x256xf32> to vector<8x256xf32>
      %587 = vector.shape_cast %584 : vector<8x256xf32> to vector<1x8x256xf32>
      tpu.vector_store %arg10[%c2_245, %c0_246, %c0_247], %587 {strides = array<i32>} : memref<4x8x256xf32, #tpu.memory_space<vmem>>, vector<1x8x256xf32>,
      %588 = math.absf %253 : vector<8x256xf32>
      %c4_i32_248 = arith.constant 4 : i32
      %589 = tpu.dynamic_rotate %588 by %c4_i32_248 dim 1 : vector<8x256xf32>, i32 -> vector<8x256xf32>
      %c4_i32_249 = arith.constant 4 : i32
      %590 = vector.broadcast %c4_i32_249 : i32 to vector<8x256xi32>
      %591 = arith.cmpi sge, %254, %590 : vector<8x256xi32>
      %cst_250 = arith.constant 0.000000e+00 : f32
      %592 = vector.broadcast %cst_250 : f32 to vector<8x256xf32>
      %593 = arith.select %591, %589, %592 : vector<8x256xi1>, vector<8x256xf32>
      %c3_i32_251 = arith.constant 3 : i32
      %594 = tpu.dynamic_rotate %588 by %c3_i32_251 dim 1 : vector<8x256xf32>, i32 -> vector<8x256xf32>
      %c3_i32_252 = arith.constant 3 : i32
      %595 = vector.broadcast %c3_i32_252 : i32 to vector<8x256xi32>
      %596 = arith.cmpi sge, %254, %595 : vector<8x256xi32>
      %cst_253 = arith.constant 0.000000e+00 : f32
      %597 = vector.broadcast %cst_253 : f32 to vector<8x256xf32>
      %598 = arith.select %596, %594, %597 : vector<8x256xi1>, vector<8x256xf32>
      %c2_i32_254 = arith.constant 2 : i32
      %599 = tpu.dynamic_rotate %588 by %c2_i32_254 dim 1 : vector<8x256xf32>, i32 -> vector<8x256xf32>
      %c2_i32_255 = arith.constant 2 : i32
      %600 = vector.broadcast %c2_i32_255 : i32 to vector<8x256xi32>
      %601 = arith.cmpi sge, %254, %600 : vector<8x256xi32>
      %cst_256 = arith.constant 0.000000e+00 : f32
      %602 = vector.broadcast %cst_256 : f32 to vector<8x256xf32>
      %603 = arith.select %601, %599, %602 : vector<8x256xi1>, vector<8x256xf32>
      %c1_i32_257 = arith.constant 1 : i32
      %604 = tpu.dynamic_rotate %588 by %c1_i32_257 dim 1 : vector<8x256xf32>, i32 -> vector<8x256xf32>
      %c1_i32_258 = arith.constant 1 : i32
      %605 = vector.broadcast %c1_i32_258 : i32 to vector<8x256xi32>
      %606 = arith.cmpi sge, %254, %605 : vector<8x256xi32>
      %cst_259 = arith.constant 0.000000e+00 : f32
      %607 = vector.broadcast %cst_259 : f32 to vector<8x256xf32>
      %608 = arith.select %606, %604, %607 : vector<8x256xi1>, vector<8x256xf32>
      %c255_i32_260 = arith.constant 255 : i32
      %609 = tpu.dynamic_rotate %588 by %c255_i32_260 dim 1 : vector<8x256xf32>, i32 -> vector<8x256xf32>
      %c255_i32_261 = arith.constant 255 : i32
      %610 = vector.broadcast %c255_i32_261 : i32 to vector<8x256xi32>
      %611 = arith.cmpi slt, %254, %610 : vector<8x256xi32>
      %cst_262 = arith.constant 0.000000e+00 : f32
      %612 = vector.broadcast %cst_262 : f32 to vector<8x256xf32>
      %613 = arith.select %611, %609, %612 : vector<8x256xi1>, vector<8x256xf32>
      %c254_i32_263 = arith.constant 254 : i32
      %614 = tpu.dynamic_rotate %588 by %c254_i32_263 dim 1 : vector<8x256xf32>, i32 -> vector<8x256xf32>
      %c254_i32_264 = arith.constant 254 : i32
      %615 = vector.broadcast %c254_i32_264 : i32 to vector<8x256xi32>
      %616 = arith.cmpi slt, %254, %615 : vector<8x256xi32>
      %cst_265 = arith.constant 0.000000e+00 : f32
      %617 = vector.broadcast %cst_265 : f32 to vector<8x256xf32>
      %618 = arith.select %616, %614, %617 : vector<8x256xi1>, vector<8x256xf32>
      %c253_i32_266 = arith.constant 253 : i32
      %619 = tpu.dynamic_rotate %588 by %c253_i32_266 dim 1 : vector<8x256xf32>, i32 -> vector<8x256xf32>
      %c253_i32_267 = arith.constant 253 : i32
      %620 = vector.broadcast %c253_i32_267 : i32 to vector<8x256xi32>
      %621 = arith.cmpi slt, %254, %620 : vector<8x256xi32>
      %cst_268 = arith.constant 0.000000e+00 : f32
      %622 = vector.broadcast %cst_268 : f32 to vector<8x256xf32>
      %623 = arith.select %621, %619, %622 : vector<8x256xi1>, vector<8x256xf32>
      %c252_i32_269 = arith.constant 252 : i32
      %624 = tpu.dynamic_rotate %588 by %c252_i32_269 dim 1 : vector<8x256xf32>, i32 -> vector<8x256xf32>
      %c252_i32_270 = arith.constant 252 : i32
      %625 = vector.broadcast %c252_i32_270 : i32 to vector<8x256xi32>
      %626 = arith.cmpi slt, %254, %625 : vector<8x256xi32>
      %cst_271 = arith.constant 0.000000e+00 : f32
      %627 = vector.broadcast %cst_271 : f32 to vector<8x256xf32>
      %628 = arith.select %626, %624, %627 : vector<8x256xi1>, vector<8x256xf32>
      %629 = arith.maximumf %593, %598 : vector<8x256xf32>
      %630 = arith.maximumf %603, %608 : vector<8x256xf32>
      %631 = arith.maximumf %588, %613 : vector<8x256xf32>
      %632 = arith.maximumf %618, %623 : vector<8x256xf32>
      %633 = arith.maximumf %629, %630 : vector<8x256xf32>
      %634 = arith.maximumf %631, %632 : vector<8x256xf32>
      %635 = arith.maximumf %633, %634 : vector<8x256xf32>
      %636 = arith.maximumf %635, %628 : vector<8x256xf32>
      %c4_i32_272 = arith.constant 4 : i32
      %637 = tpu.dynamic_rotate %636 by %c4_i32_272 dim 1 : vector<8x256xf32>, i32 -> vector<8x256xf32>
      %c4_i32_273 = arith.constant 4 : i32
      %638 = vector.broadcast %c4_i32_273 : i32 to vector<8x256xi32>
      %639 = arith.cmpi sge, %254, %638 : vector<8x256xi32>
      %cst_274 = arith.constant 0.000000e+00 : f32
      %640 = vector.broadcast %cst_274 : f32 to vector<8x256xf32>
      %641 = arith.select %639, %637, %640 : vector<8x256xi1>, vector<8x256xf32>
      %c3_i32_275 = arith.constant 3 : i32
      %642 = tpu.dynamic_rotate %636 by %c3_i32_275 dim 1 : vector<8x256xf32>, i32 -> vector<8x256xf32>
      %c3_i32_276 = arith.constant 3 : i32
      %643 = vector.broadcast %c3_i32_276 : i32 to vector<8x256xi32>
      %644 = arith.cmpi sge, %254, %643 : vector<8x256xi32>
      %cst_277 = arith.constant 0.000000e+00 : f32
      %645 = vector.broadcast %cst_277 : f32 to vector<8x256xf32>
      %646 = arith.select %644, %642, %645 : vector<8x256xi1>, vector<8x256xf32>
      %c2_i32_278 = arith.constant 2 : i32
      %647 = tpu.dynamic_rotate %636 by %c2_i32_278 dim 1 : vector<8x256xf32>, i32 -> vector<8x256xf32>
      %c2_i32_279 = arith.constant 2 : i32
      %648 = vector.broadcast %c2_i32_279 : i32 to vector<8x256xi32>
      %649 = arith.cmpi sge, %254, %648 : vector<8x256xi32>
      %cst_280 = arith.constant 0.000000e+00 : f32
      %650 = vector.broadcast %cst_280 : f32 to vector<8x256xf32>
      %651 = arith.select %649, %647, %650 : vector<8x256xi1>, vector<8x256xf32>
      %c1_i32_281 = arith.constant 1 : i32
      %652 = tpu.dynamic_rotate %636 by %c1_i32_281 dim 1 : vector<8x256xf32>, i32 -> vector<8x256xf32>
      %c1_i32_282 = arith.constant 1 : i32
      %653 = vector.broadcast %c1_i32_282 : i32 to vector<8x256xi32>
      %654 = arith.cmpi sge, %254, %653 : vector<8x256xi32>
      %cst_283 = arith.constant 0.000000e+00 : f32
      %655 = vector.broadcast %cst_283 : f32 to vector<8x256xf32>
      %656 = arith.select %654, %652, %655 : vector<8x256xi1>, vector<8x256xf32>
      %c255_i32_284 = arith.constant 255 : i32
      %657 = tpu.dynamic_rotate %636 by %c255_i32_284 dim 1 : vector<8x256xf32>, i32 -> vector<8x256xf32>
      %c255_i32_285 = arith.constant 255 : i32
      %658 = vector.broadcast %c255_i32_285 : i32 to vector<8x256xi32>
      %659 = arith.cmpi slt, %254, %658 : vector<8x256xi32>
      %cst_286 = arith.constant 0.000000e+00 : f32
      %660 = vector.broadcast %cst_286 : f32 to vector<8x256xf32>
      %661 = arith.select %659, %657, %660 : vector<8x256xi1>, vector<8x256xf32>
      %c254_i32_287 = arith.constant 254 : i32
      %662 = tpu.dynamic_rotate %636 by %c254_i32_287 dim 1 : vector<8x256xf32>, i32 -> vector<8x256xf32>
      %c254_i32_288 = arith.constant 254 : i32
      %663 = vector.broadcast %c254_i32_288 : i32 to vector<8x256xi32>
      %664 = arith.cmpi slt, %254, %663 : vector<8x256xi32>
      %cst_289 = arith.constant 0.000000e+00 : f32
      %665 = vector.broadcast %cst_289 : f32 to vector<8x256xf32>
      %666 = arith.select %664, %662, %665 : vector<8x256xi1>, vector<8x256xf32>
      %c253_i32_290 = arith.constant 253 : i32
      %667 = tpu.dynamic_rotate %636 by %c253_i32_290 dim 1 : vector<8x256xf32>, i32 -> vector<8x256xf32>
      %c253_i32_291 = arith.constant 253 : i32
      %668 = vector.broadcast %c253_i32_291 : i32 to vector<8x256xi32>
      %669 = arith.cmpi slt, %254, %668 : vector<8x256xi32>
      %cst_292 = arith.constant 0.000000e+00 : f32
      %670 = vector.broadcast %cst_292 : f32 to vector<8x256xf32>
      %671 = arith.select %669, %667, %670 : vector<8x256xi1>, vector<8x256xf32>
      %c252_i32_293 = arith.constant 252 : i32
      %672 = tpu.dynamic_rotate %636 by %c252_i32_293 dim 1 : vector<8x256xf32>, i32 -> vector<8x256xf32>
      %c252_i32_294 = arith.constant 252 : i32
      %673 = vector.broadcast %c252_i32_294 : i32 to vector<8x256xi32>
      %674 = arith.cmpi slt, %254, %673 : vector<8x256xi32>
      %cst_295 = arith.constant 0.000000e+00 : f32
      %675 = vector.broadcast %cst_295 : f32 to vector<8x256xf32>
      %676 = arith.select %674, %672, %675 : vector<8x256xi1>, vector<8x256xf32>
      %677 = arith.addf %641, %646 : vector<8x256xf32>
      %678 = arith.addf %651, %656 : vector<8x256xf32>
      %679 = arith.addf %636, %661 : vector<8x256xf32>
      %680 = arith.addf %666, %671 : vector<8x256xf32>
      %681 = arith.addf %677, %678 : vector<8x256xf32>
      %682 = arith.addf %679, %680 : vector<8x256xf32>
      %683 = arith.addf %681, %682 : vector<8x256xf32>
      %684 = arith.addf %683, %676 : vector<8x256xf32>
      %cst_296 = arith.constant 0.111111112 : f32
      %685 = vector.broadcast %cst_296 : f32 to vector<8x256xf32>
      %686 = arith.mulf %684, %685 : vector<8x256xf32>
      %c3_297 = arith.constant 3 : index
      %c0_298 = arith.constant 0 : index
      %687 = memref.load %arg3[%c3_297, %c0_298] : memref<4x7xf32, #tpu.memory_space<smem>>
      %c15_i32 = arith.constant 15 : i32
      %688 = tpu.dynamic_rotate %686 by %c15_i32 dim 1 : vector<8x256xf32>, i32 -> vector<8x256xf32>
      %c15_i32_299 = arith.constant 15 : i32
      %689 = vector.broadcast %c15_i32_299 : i32 to vector<8x256xi32>
      %690 = arith.cmpi sge, %254, %689 : vector<8x256xi32>
      %cst_300 = arith.constant 0.000000e+00 : f32
      %691 = vector.broadcast %cst_300 : f32 to vector<8x256xf32>
      %692 = arith.select %690, %688, %691 : vector<8x256xi1>, vector<8x256xf32>
      %693 = vector.broadcast %687 : f32 to vector<8x256xf32>
      %694 = arith.mulf %693, %692 : vector<8x256xf32>
      %c3_301 = arith.constant 3 : index
      %c1_302 = arith.constant 1 : index
      %695 = memref.load %arg3[%c3_301, %c1_302] : memref<4x7xf32, #tpu.memory_space<smem>>
      %c10_i32 = arith.constant 10 : i32
      %696 = tpu.dynamic_rotate %686 by %c10_i32 dim 1 : vector<8x256xf32>, i32 -> vector<8x256xf32>
      %c10_i32_303 = arith.constant 10 : i32
      %697 = vector.broadcast %c10_i32_303 : i32 to vector<8x256xi32>
      %698 = arith.cmpi sge, %254, %697 : vector<8x256xi32>
      %cst_304 = arith.constant 0.000000e+00 : f32
      %699 = vector.broadcast %cst_304 : f32 to vector<8x256xf32>
      %700 = arith.select %698, %696, %699 : vector<8x256xi1>, vector<8x256xf32>
      %701 = vector.broadcast %695 : f32 to vector<8x256xf32>
      %702 = arith.mulf %701, %700 : vector<8x256xf32>
      %c3_305 = arith.constant 3 : index
      %c2_306 = arith.constant 2 : index
      %703 = memref.load %arg3[%c3_305, %c2_306] : memref<4x7xf32, #tpu.memory_space<smem>>
      %c5_i32_307 = arith.constant 5 : i32
      %704 = tpu.dynamic_rotate %686 by %c5_i32_307 dim 1 : vector<8x256xf32>, i32 -> vector<8x256xf32>
      %c5_i32_308 = arith.constant 5 : i32
      %705 = vector.broadcast %c5_i32_308 : i32 to vector<8x256xi32>
      %706 = arith.cmpi sge, %254, %705 : vector<8x256xi32>
      %cst_309 = arith.constant 0.000000e+00 : f32
      %707 = vector.broadcast %cst_309 : f32 to vector<8x256xf32>
      %708 = arith.select %706, %704, %707 : vector<8x256xi1>, vector<8x256xf32>
      %709 = vector.broadcast %703 : f32 to vector<8x256xf32>
      %710 = arith.mulf %709, %708 : vector<8x256xf32>
      %c3_310 = arith.constant 3 : index
      %c3_311 = arith.constant 3 : index
      %711 = memref.load %arg3[%c3_310, %c3_311] : memref<4x7xf32, #tpu.memory_space<smem>>
      %712 = vector.broadcast %711 : f32 to vector<8x256xf32>
      %713 = arith.mulf %712, %686 : vector<8x256xf32>
      %c3_312 = arith.constant 3 : index
      %c4_313 = arith.constant 4 : index
      %714 = memref.load %arg3[%c3_312, %c4_313] : memref<4x7xf32, #tpu.memory_space<smem>>
      %c251_i32 = arith.constant 251 : i32
      %715 = tpu.dynamic_rotate %686 by %c251_i32 dim 1 : vector<8x256xf32>, i32 -> vector<8x256xf32>
      %c251_i32_314 = arith.constant 251 : i32
      %716 = vector.broadcast %c251_i32_314 : i32 to vector<8x256xi32>
      %717 = arith.cmpi slt, %254, %716 : vector<8x256xi32>
      %cst_315 = arith.constant 0.000000e+00 : f32
      %718 = vector.broadcast %cst_315 : f32 to vector<8x256xf32>
      %719 = arith.select %717, %715, %718 : vector<8x256xi1>, vector<8x256xf32>
      %720 = vector.broadcast %714 : f32 to vector<8x256xf32>
      %721 = arith.mulf %720, %719 : vector<8x256xf32>
      %c3_316 = arith.constant 3 : index
      %c5_317 = arith.constant 5 : index
      %722 = memref.load %arg3[%c3_316, %c5_317] : memref<4x7xf32, #tpu.memory_space<smem>>
      %c246_i32 = arith.constant 246 : i32
      %723 = tpu.dynamic_rotate %686 by %c246_i32 dim 1 : vector<8x256xf32>, i32 -> vector<8x256xf32>
      %c246_i32_318 = arith.constant 246 : i32
      %724 = vector.broadcast %c246_i32_318 : i32 to vector<8x256xi32>
      %725 = arith.cmpi slt, %254, %724 : vector<8x256xi32>
      %cst_319 = arith.constant 0.000000e+00 : f32
      %726 = vector.broadcast %cst_319 : f32 to vector<8x256xf32>
      %727 = arith.select %725, %723, %726 : vector<8x256xi1>, vector<8x256xf32>
      %728 = vector.broadcast %722 : f32 to vector<8x256xf32>
      %729 = arith.mulf %728, %727 : vector<8x256xf32>
      %c3_320 = arith.constant 3 : index
      %c6_321 = arith.constant 6 : index
      %730 = memref.load %arg3[%c3_320, %c6_321] : memref<4x7xf32, #tpu.memory_space<smem>>
      %c241_i32 = arith.constant 241 : i32
      %731 = tpu.dynamic_rotate %686 by %c241_i32 dim 1 : vector<8x256xf32>, i32 -> vector<8x256xf32>
      %c241_i32_322 = arith.constant 241 : i32
      %732 = vector.broadcast %c241_i32_322 : i32 to vector<8x256xi32>
      %733 = arith.cmpi slt, %254, %732 : vector<8x256xi32>
      %cst_323 = arith.constant 0.000000e+00 : f32
      %734 = vector.broadcast %cst_323 : f32 to vector<8x256xf32>
      %735 = arith.select %733, %731, %734 : vector<8x256xi1>, vector<8x256xf32>
      %736 = vector.broadcast %730 : f32 to vector<8x256xf32>
      %737 = arith.mulf %736, %735 : vector<8x256xf32>
      %738 = arith.addf %694, %702 : vector<8x256xf32>
      %739 = arith.addf %710, %713 : vector<8x256xf32>
      %740 = arith.addf %721, %729 : vector<8x256xf32>
      %741 = arith.addf %738, %739 : vector<8x256xf32>
      %742 = arith.addf %740, %737 : vector<8x256xf32>
      %743 = arith.addf %741, %742 : vector<8x256xf32>
      %c3_324 = arith.constant 3 : index
      %744 = memref.load %arg4[%c3_324] : memref<4xf32, #tpu.memory_space<smem>>
      %745 = vector.broadcast %744 : f32 to vector<8x256xf32>
      %746 = arith.addf %743, %745 : vector<8x256xf32>
      %cst_325 = arith.constant dense<0.000000e+00> : vector<8xf32>
      %747 = vector.multi_reduction <add>, %746, %cst_325 [1] : vector<8x256xf32> to vector<8xf32>
      %748 = vector.shape_cast %747 : vector<8xf32> to vector<8x1xf32>
      %cst_326 = arith.constant 2.560000e+02 : f32
      %749 = vector.broadcast %cst_326 : f32 to vector<8x1xf32>
      %750 = arith.divf %748, %749 : vector<8x1xf32>
      %751 = vector.broadcast %750 : vector<8x1xf32> to vector<8x256xf32>
      %752 = arith.subf %746, %751 : vector<8x256xf32>
      %753 = arith.mulf %752, %752 : vector<8x256xf32>
      %cst_327 = arith.constant dense<0.000000e+00> : vector<8xf32>
      %754 = vector.multi_reduction <add>, %753, %cst_327 [1] : vector<8x256xf32> to vector<8xf32>
      %755 = vector.shape_cast %754 : vector<8xf32> to vector<8x1xf32>
      %cst_328 = arith.constant 2.560000e+02 : f32
      %756 = vector.broadcast %cst_328 : f32 to vector<8x1xf32>
      %757 = arith.divf %755, %756 : vector<8x1xf32>
      %cst_329 = arith.constant 9.99999974E-6 : f32
      %758 = vector.broadcast %cst_329 : f32 to vector<8x1xf32>
      %759 = arith.addf %757, %758 : vector<8x1xf32>
      %760 = math.rsqrt %759 : vector<8x1xf32>
      %761 = vector.broadcast %760 : vector<8x1xf32> to vector<8x256xf32>
      %762 = arith.mulf %752, %761 : vector<8x256xf32>
      %c3_330 = arith.constant 3 : index
      %763 = memref.load %arg5[%c3_330] : memref<4xf32, #tpu.memory_space<smem>>
      %764 = vector.broadcast %763 : f32 to vector<8x256xf32>
      %765 = arith.mulf %762, %764 : vector<8x256xf32>
      %c3_331 = arith.constant 3 : index
      %766 = memref.load %arg6[%c3_331] : memref<4xf32, #tpu.memory_space<smem>>
      %767 = vector.broadcast %766 : f32 to vector<8x256xf32>
      %768 = arith.addf %765, %767 : vector<8x256xf32>
      %c3_332 = arith.constant 3 : index
      %c0_333 = arith.constant 0 : index
      %c0_334 = arith.constant 0 : index
      %769 = vector.load %arg10[%c3_332, %c0_333, %c0_334] : memref<4x8x256xf32, #tpu.memory_space<vmem>>, vector<1x8x256xf32>
      %770 = vector.shape_cast %769 : vector<1x8x256xf32> to vector<8x256xf32>
      %771 = vector.shape_cast %768 : vector<8x256xf32> to vector<1x8x256xf32>
      tpu.vector_store %arg10[%c3_332, %c0_333, %c0_334], %771 {strides = array<i32>} : memref<4x8x256xf32, #tpu.memory_space<vmem>>, vector<1x8x256xf32>,
    } else {
    }
    %c0 = arith.constant 0 : index
    %c0_1 = arith.constant 0 : index
    %c0_2 = arith.constant 0 : index
    %3 = vector.load %arg10[%c0, %c0_1, %c0_2] : memref<4x8x256xf32, #tpu.memory_space<vmem>>, vector<1x8x256xf32>
    %4 = vector.shape_cast %3 : vector<1x8x256xf32> to vector<8x256xf32>
    %c1 = arith.constant 1 : index
    %c0_3 = arith.constant 0 : index
    %c0_4 = arith.constant 0 : index
    %5 = vector.load %arg10[%c1, %c0_3, %c0_4] : memref<4x8x256xf32, #tpu.memory_space<vmem>>, vector<1x8x256xf32>
    %6 = vector.shape_cast %5 : vector<1x8x256xf32> to vector<8x256xf32>
    %c2 = arith.constant 2 : index
    %c0_5 = arith.constant 0 : index
    %c0_6 = arith.constant 0 : index
    %7 = vector.load %arg10[%c2, %c0_5, %c0_6] : memref<4x8x256xf32, #tpu.memory_space<vmem>>, vector<1x8x256xf32>
    %8 = vector.shape_cast %7 : vector<1x8x256xf32> to vector<8x256xf32>
    %c3 = arith.constant 3 : index
    %c0_7 = arith.constant 0 : index
    %c0_8 = arith.constant 0 : index
    %9 = vector.load %arg10[%c3, %c0_7, %c0_8] : memref<4x8x256xf32, #tpu.memory_space<vmem>>, vector<1x8x256xf32>
    %10 = vector.shape_cast %9 : vector<1x8x256xf32> to vector<8x256xf32>
    %c8_i32 = arith.constant 8 : i32
    %11 = arith.muli %arg1, %c8_i32 : i32
    %c0_i32_9 = arith.constant 0 : i32
    %12 = arith.addi %11, %c0_i32_9 : i32
    %c0_10 = arith.constant 0 : index
    %13 = arith.index_cast %12 : i32 to index
    %14 = memref.load %arg7[%c0_10, %13] : memref<4x16xf32, #tpu.memory_space<smem>>
    %15 = vector.broadcast %14 : f32 to vector<8x256xf32>
    %16 = arith.mulf %4, %15 : vector<8x256xf32>
    %c1_11 = arith.constant 1 : index
    %17 = arith.index_cast %12 : i32 to index
    %18 = memref.load %arg7[%c1_11, %17] : memref<4x16xf32, #tpu.memory_space<smem>>
    %19 = vector.broadcast %18 : f32 to vector<8x256xf32>
    %20 = arith.mulf %6, %19 : vector<8x256xf32>
    %21 = arith.addf %16, %20 : vector<8x256xf32>
    %c2_12 = arith.constant 2 : index
    %22 = arith.index_cast %12 : i32 to index
    %23 = memref.load %arg7[%c2_12, %22] : memref<4x16xf32, #tpu.memory_space<smem>>
    %24 = vector.broadcast %23 : f32 to vector<8x256xf32>
    %25 = arith.mulf %8, %24 : vector<8x256xf32>
    %c3_13 = arith.constant 3 : index
    %26 = arith.index_cast %12 : i32 to index
    %27 = memref.load %arg7[%c3_13, %26] : memref<4x16xf32, #tpu.memory_space<smem>>
    %28 = vector.broadcast %27 : f32 to vector<8x256xf32>
    %29 = arith.mulf %10, %28 : vector<8x256xf32>
    %30 = arith.addf %25, %29 : vector<8x256xf32>
    %31 = arith.addf %21, %30 : vector<8x256xf32>
    %32 = arith.index_cast %12 : i32 to index
    %33 = memref.load %arg8[%32] : memref<16xf32, #tpu.memory_space<smem>>
    %34 = vector.broadcast %33 : f32 to vector<8x256xf32>
    %35 = arith.addf %31, %34 : vector<8x256xf32>
    %c0_14 = arith.constant 0 : index
    %c0_15 = arith.constant 0 : index
    %c0_16 = arith.constant 0 : index
    %36 = vector.load %arg2[%c0_14, %c0_15, %c0_16] : memref<8x8x256xf32, #tpu.memory_space<vmem>>, vector<8x1x256xf32>
    %37 = vector.shape_cast %36 : vector<8x1x256xf32> to vector<8x256xf32>
    %38 = arith.mulf %35, %37 : vector<8x256xf32>
    %39 = arith.addf %37, %38 : vector<8x256xf32>
    %40 = vector.shape_cast %39 : vector<8x256xf32> to vector<8x1x256xf32>
    %c0_17 = arith.constant 0 : index
    %c0_18 = arith.constant 0 : index
    %c0_19 = arith.constant 0 : index
    %41 = vector.load %arg9[%c0_17, %c0_18, %c0_19] : memref<8x8x256xf32, #tpu.memory_space<vmem>>, vector<8x1x256xf32>
    tpu.vector_store %arg9[%c0_17, %c0_18, %c0_19], %40 {strides = array<i32>} : memref<8x8x256xf32, #tpu.memory_space<vmem>>, vector<8x1x256xf32>,
    %c1_i32 = arith.constant 1 : i32
    %42 = arith.addi %11, %c1_i32 : i32
    %c0_20 = arith.constant 0 : index
    %43 = arith.index_cast %42 : i32 to index
    %44 = memref.load %arg7[%c0_20, %43] : memref<4x16xf32, #tpu.memory_space<smem>>
    %45 = vector.broadcast %44 : f32 to vector<8x256xf32>
    %46 = arith.mulf %4, %45 : vector<8x256xf32>
    %c1_21 = arith.constant 1 : index
    %47 = arith.index_cast %42 : i32 to index
    %48 = memref.load %arg7[%c1_21, %47] : memref<4x16xf32, #tpu.memory_space<smem>>
    %49 = vector.broadcast %48 : f32 to vector<8x256xf32>
    %50 = arith.mulf %6, %49 : vector<8x256xf32>
    %51 = arith.addf %46, %50 : vector<8x256xf32>
    %c2_22 = arith.constant 2 : index
    %52 = arith.index_cast %42 : i32 to index
    %53 = memref.load %arg7[%c2_22, %52] : memref<4x16xf32, #tpu.memory_space<smem>>
    %54 = vector.broadcast %53 : f32 to vector<8x256xf32>
    %55 = arith.mulf %8, %54 : vector<8x256xf32>
    %c3_23 = arith.constant 3 : index
    %56 = arith.index_cast %42 : i32 to index
    %57 = memref.load %arg7[%c3_23, %56] : memref<4x16xf32, #tpu.memory_space<smem>>
    %58 = vector.broadcast %57 : f32 to vector<8x256xf32>
    %59 = arith.mulf %10, %58 : vector<8x256xf32>
    %60 = arith.addf %55, %59 : vector<8x256xf32>
    %61 = arith.addf %51, %60 : vector<8x256xf32>
    %62 = arith.index_cast %42 : i32 to index
    %63 = memref.load %arg8[%62] : memref<16xf32, #tpu.memory_space<smem>>
    %64 = vector.broadcast %63 : f32 to vector<8x256xf32>
    %65 = arith.addf %61, %64 : vector<8x256xf32>
    %c0_24 = arith.constant 0 : index
    %c1_25 = arith.constant 1 : index
    %c0_26 = arith.constant 0 : index
    %66 = vector.load %arg2[%c0_24, %c1_25, %c0_26] : memref<8x8x256xf32, #tpu.memory_space<vmem>>, vector<8x1x256xf32>
    %67 = vector.shape_cast %66 : vector<8x1x256xf32> to vector<8x256xf32>
    %68 = arith.mulf %65, %67 : vector<8x256xf32>
    %69 = arith.addf %67, %68 : vector<8x256xf32>
    %70 = vector.shape_cast %69 : vector<8x256xf32> to vector<8x1x256xf32>
    %c0_27 = arith.constant 0 : index
    %c1_28 = arith.constant 1 : index
    %c0_29 = arith.constant 0 : index
    %71 = vector.load %arg9[%c0_27, %c1_28, %c0_29] : memref<8x8x256xf32, #tpu.memory_space<vmem>>, vector<8x1x256xf32>
    tpu.vector_store %arg9[%c0_27, %c1_28, %c0_29], %70 {strides = array<i32>} : memref<8x8x256xf32, #tpu.memory_space<vmem>>, vector<8x1x256xf32>,
    %c2_i32 = arith.constant 2 : i32
    %72 = arith.addi %11, %c2_i32 : i32
    %c0_30 = arith.constant 0 : index
    %73 = arith.index_cast %72 : i32 to index
    %74 = memref.load %arg7[%c0_30, %73] : memref<4x16xf32, #tpu.memory_space<smem>>
    %75 = vector.broadcast %74 : f32 to vector<8x256xf32>
    %76 = arith.mulf %4, %75 : vector<8x256xf32>
    %c1_31 = arith.constant 1 : index
    %77 = arith.index_cast %72 : i32 to index
    %78 = memref.load %arg7[%c1_31, %77] : memref<4x16xf32, #tpu.memory_space<smem>>
    %79 = vector.broadcast %78 : f32 to vector<8x256xf32>
    %80 = arith.mulf %6, %79 : vector<8x256xf32>
    %81 = arith.addf %76, %80 : vector<8x256xf32>
    %c2_32 = arith.constant 2 : index
    %82 = arith.index_cast %72 : i32 to index
    %83 = memref.load %arg7[%c2_32, %82] : memref<4x16xf32, #tpu.memory_space<smem>>
    %84 = vector.broadcast %83 : f32 to vector<8x256xf32>
    %85 = arith.mulf %8, %84 : vector<8x256xf32>
    %c3_33 = arith.constant 3 : index
    %86 = arith.index_cast %72 : i32 to index
    %87 = memref.load %arg7[%c3_33, %86] : memref<4x16xf32, #tpu.memory_space<smem>>
    %88 = vector.broadcast %87 : f32 to vector<8x256xf32>
    %89 = arith.mulf %10, %88 : vector<8x256xf32>
    %90 = arith.addf %85, %89 : vector<8x256xf32>
    %91 = arith.addf %81, %90 : vector<8x256xf32>
    %92 = arith.index_cast %72 : i32 to index
    %93 = memref.load %arg8[%92] : memref<16xf32, #tpu.memory_space<smem>>
    %94 = vector.broadcast %93 : f32 to vector<8x256xf32>
    %95 = arith.addf %91, %94 : vector<8x256xf32>
    %c0_34 = arith.constant 0 : index
    %c2_35 = arith.constant 2 : index
    %c0_36 = arith.constant 0 : index
    %96 = vector.load %arg2[%c0_34, %c2_35, %c0_36] : memref<8x8x256xf32, #tpu.memory_space<vmem>>, vector<8x1x256xf32>
    %97 = vector.shape_cast %96 : vector<8x1x256xf32> to vector<8x256xf32>
    %98 = arith.mulf %95, %97 : vector<8x256xf32>
    %99 = arith.addf %97, %98 : vector<8x256xf32>
    %100 = vector.shape_cast %99 : vector<8x256xf32> to vector<8x1x256xf32>
    %c0_37 = arith.constant 0 : index
    %c2_38 = arith.constant 2 : index
    %c0_39 = arith.constant 0 : index
    %101 = vector.load %arg9[%c0_37, %c2_38, %c0_39] : memref<8x8x256xf32, #tpu.memory_space<vmem>>, vector<8x1x256xf32>
    tpu.vector_store %arg9[%c0_37, %c2_38, %c0_39], %100 {strides = array<i32>} : memref<8x8x256xf32, #tpu.memory_space<vmem>>, vector<8x1x256xf32>,
    %c3_i32 = arith.constant 3 : i32
    %102 = arith.addi %11, %c3_i32 : i32
    %c0_40 = arith.constant 0 : index
    %103 = arith.index_cast %102 : i32 to index
    %104 = memref.load %arg7[%c0_40, %103] : memref<4x16xf32, #tpu.memory_space<smem>>
    %105 = vector.broadcast %104 : f32 to vector<8x256xf32>
    %106 = arith.mulf %4, %105 : vector<8x256xf32>
    %c1_41 = arith.constant 1 : index
    %107 = arith.index_cast %102 : i32 to index
    %108 = memref.load %arg7[%c1_41, %107] : memref<4x16xf32, #tpu.memory_space<smem>>
    %109 = vector.broadcast %108 : f32 to vector<8x256xf32>
    %110 = arith.mulf %6, %109 : vector<8x256xf32>
    %111 = arith.addf %106, %110 : vector<8x256xf32>
    %c2_42 = arith.constant 2 : index
    %112 = arith.index_cast %102 : i32 to index
    %113 = memref.load %arg7[%c2_42, %112] : memref<4x16xf32, #tpu.memory_space<smem>>
    %114 = vector.broadcast %113 : f32 to vector<8x256xf32>
    %115 = arith.mulf %8, %114 : vector<8x256xf32>
    %c3_43 = arith.constant 3 : index
    %116 = arith.index_cast %102 : i32 to index
    %117 = memref.load %arg7[%c3_43, %116] : memref<4x16xf32, #tpu.memory_space<smem>>
    %118 = vector.broadcast %117 : f32 to vector<8x256xf32>
    %119 = arith.mulf %10, %118 : vector<8x256xf32>
    %120 = arith.addf %115, %119 : vector<8x256xf32>
    %121 = arith.addf %111, %120 : vector<8x256xf32>
    %122 = arith.index_cast %102 : i32 to index
    %123 = memref.load %arg8[%122] : memref<16xf32, #tpu.memory_space<smem>>
    %124 = vector.broadcast %123 : f32 to vector<8x256xf32>
    %125 = arith.addf %121, %124 : vector<8x256xf32>
    %c0_44 = arith.constant 0 : index
    %c3_45 = arith.constant 3 : index
    %c0_46 = arith.constant 0 : index
    %126 = vector.load %arg2[%c0_44, %c3_45, %c0_46] : memref<8x8x256xf32, #tpu.memory_space<vmem>>, vector<8x1x256xf32>
    %127 = vector.shape_cast %126 : vector<8x1x256xf32> to vector<8x256xf32>
    %128 = arith.mulf %125, %127 : vector<8x256xf32>
    %129 = arith.addf %127, %128 : vector<8x256xf32>
    %130 = vector.shape_cast %129 : vector<8x256xf32> to vector<8x1x256xf32>
    %c0_47 = arith.constant 0 : index
    %c3_48 = arith.constant 3 : index
    %c0_49 = arith.constant 0 : index
    %131 = vector.load %arg9[%c0_47, %c3_48, %c0_49] : memref<8x8x256xf32, #tpu.memory_space<vmem>>, vector<8x1x256xf32>
    tpu.vector_store %arg9[%c0_47, %c3_48, %c0_49], %130 {strides = array<i32>} : memref<8x8x256xf32, #tpu.memory_space<vmem>>, vector<8x1x256xf32>,
    %c4_i32 = arith.constant 4 : i32
    %132 = arith.addi %11, %c4_i32 : i32
    %c0_50 = arith.constant 0 : index
    %133 = arith.index_cast %132 : i32 to index
    %134 = memref.load %arg7[%c0_50, %133] : memref<4x16xf32, #tpu.memory_space<smem>>
    %135 = vector.broadcast %134 : f32 to vector<8x256xf32>
    %136 = arith.mulf %4, %135 : vector<8x256xf32>
    %c1_51 = arith.constant 1 : index
    %137 = arith.index_cast %132 : i32 to index
    %138 = memref.load %arg7[%c1_51, %137] : memref<4x16xf32, #tpu.memory_space<smem>>
    %139 = vector.broadcast %138 : f32 to vector<8x256xf32>
    %140 = arith.mulf %6, %139 : vector<8x256xf32>
    %141 = arith.addf %136, %140 : vector<8x256xf32>
    %c2_52 = arith.constant 2 : index
    %142 = arith.index_cast %132 : i32 to index
    %143 = memref.load %arg7[%c2_52, %142] : memref<4x16xf32, #tpu.memory_space<smem>>
    %144 = vector.broadcast %143 : f32 to vector<8x256xf32>
    %145 = arith.mulf %8, %144 : vector<8x256xf32>
    %c3_53 = arith.constant 3 : index
    %146 = arith.index_cast %132 : i32 to index
    %147 = memref.load %arg7[%c3_53, %146] : memref<4x16xf32, #tpu.memory_space<smem>>
    %148 = vector.broadcast %147 : f32 to vector<8x256xf32>
    %149 = arith.mulf %10, %148 : vector<8x256xf32>
    %150 = arith.addf %145, %149 : vector<8x256xf32>
    %151 = arith.addf %141, %150 : vector<8x256xf32>
    %152 = arith.index_cast %132 : i32 to index
    %153 = memref.load %arg8[%152] : memref<16xf32, #tpu.memory_space<smem>>
    %154 = vector.broadcast %153 : f32 to vector<8x256xf32>
    %155 = arith.addf %151, %154 : vector<8x256xf32>
    %c0_54 = arith.constant 0 : index
    %c4 = arith.constant 4 : index
    %c0_55 = arith.constant 0 : index
    %156 = vector.load %arg2[%c0_54, %c4, %c0_55] : memref<8x8x256xf32, #tpu.memory_space<vmem>>, vector<8x1x256xf32>
    %157 = vector.shape_cast %156 : vector<8x1x256xf32> to vector<8x256xf32>
    %158 = arith.mulf %155, %157 : vector<8x256xf32>
    %159 = arith.addf %157, %158 : vector<8x256xf32>
    %160 = vector.shape_cast %159 : vector<8x256xf32> to vector<8x1x256xf32>
    %c0_56 = arith.constant 0 : index
    %c4_57 = arith.constant 4 : index
    %c0_58 = arith.constant 0 : index
    %161 = vector.load %arg9[%c0_56, %c4_57, %c0_58] : memref<8x8x256xf32, #tpu.memory_space<vmem>>, vector<8x1x256xf32>
    tpu.vector_store %arg9[%c0_56, %c4_57, %c0_58], %160 {strides = array<i32>} : memref<8x8x256xf32, #tpu.memory_space<vmem>>, vector<8x1x256xf32>,
    %c5_i32 = arith.constant 5 : i32
    %162 = arith.addi %11, %c5_i32 : i32
    %c0_59 = arith.constant 0 : index
    %163 = arith.index_cast %162 : i32 to index
    %164 = memref.load %arg7[%c0_59, %163] : memref<4x16xf32, #tpu.memory_space<smem>>
    %165 = vector.broadcast %164 : f32 to vector<8x256xf32>
    %166 = arith.mulf %4, %165 : vector<8x256xf32>
    %c1_60 = arith.constant 1 : index
    %167 = arith.index_cast %162 : i32 to index
    %168 = memref.load %arg7[%c1_60, %167] : memref<4x16xf32, #tpu.memory_space<smem>>
    %169 = vector.broadcast %168 : f32 to vector<8x256xf32>
    %170 = arith.mulf %6, %169 : vector<8x256xf32>
    %171 = arith.addf %166, %170 : vector<8x256xf32>
    %c2_61 = arith.constant 2 : index
    %172 = arith.index_cast %162 : i32 to index
    %173 = memref.load %arg7[%c2_61, %172] : memref<4x16xf32, #tpu.memory_space<smem>>
    %174 = vector.broadcast %173 : f32 to vector<8x256xf32>
    %175 = arith.mulf %8, %174 : vector<8x256xf32>
    %c3_62 = arith.constant 3 : index
    %176 = arith.index_cast %162 : i32 to index
    %177 = memref.load %arg7[%c3_62, %176] : memref<4x16xf32, #tpu.memory_space<smem>>
    %178 = vector.broadcast %177 : f32 to vector<8x256xf32>
    %179 = arith.mulf %10, %178 : vector<8x256xf32>
    %180 = arith.addf %175, %179 : vector<8x256xf32>
    %181 = arith.addf %171, %180 : vector<8x256xf32>
    %182 = arith.index_cast %162 : i32 to index
    %183 = memref.load %arg8[%182] : memref<16xf32, #tpu.memory_space<smem>>
    %184 = vector.broadcast %183 : f32 to vector<8x256xf32>
    %185 = arith.addf %181, %184 : vector<8x256xf32>
    %c0_63 = arith.constant 0 : index
    %c5 = arith.constant 5 : index
    %c0_64 = arith.constant 0 : index
    %186 = vector.load %arg2[%c0_63, %c5, %c0_64] : memref<8x8x256xf32, #tpu.memory_space<vmem>>, vector<8x1x256xf32>
    %187 = vector.shape_cast %186 : vector<8x1x256xf32> to vector<8x256xf32>
    %188 = arith.mulf %185, %187 : vector<8x256xf32>
    %189 = arith.addf %187, %188 : vector<8x256xf32>
    %190 = vector.shape_cast %189 : vector<8x256xf32> to vector<8x1x256xf32>
    %c0_65 = arith.constant 0 : index
    %c5_66 = arith.constant 5 : index
    %c0_67 = arith.constant 0 : index
    %191 = vector.load %arg9[%c0_65, %c5_66, %c0_67] : memref<8x8x256xf32, #tpu.memory_space<vmem>>, vector<8x1x256xf32>
    tpu.vector_store %arg9[%c0_65, %c5_66, %c0_67], %190 {strides = array<i32>} : memref<8x8x256xf32, #tpu.memory_space<vmem>>, vector<8x1x256xf32>,
    %c6_i32 = arith.constant 6 : i32
    %192 = arith.addi %11, %c6_i32 : i32
    %c0_68 = arith.constant 0 : index
    %193 = arith.index_cast %192 : i32 to index
    %194 = memref.load %arg7[%c0_68, %193] : memref<4x16xf32, #tpu.memory_space<smem>>
    %195 = vector.broadcast %194 : f32 to vector<8x256xf32>
    %196 = arith.mulf %4, %195 : vector<8x256xf32>
    %c1_69 = arith.constant 1 : index
    %197 = arith.index_cast %192 : i32 to index
    %198 = memref.load %arg7[%c1_69, %197] : memref<4x16xf32, #tpu.memory_space<smem>>
    %199 = vector.broadcast %198 : f32 to vector<8x256xf32>
    %200 = arith.mulf %6, %199 : vector<8x256xf32>
    %201 = arith.addf %196, %200 : vector<8x256xf32>
    %c2_70 = arith.constant 2 : index
    %202 = arith.index_cast %192 : i32 to index
    %203 = memref.load %arg7[%c2_70, %202] : memref<4x16xf32, #tpu.memory_space<smem>>
    %204 = vector.broadcast %203 : f32 to vector<8x256xf32>
    %205 = arith.mulf %8, %204 : vector<8x256xf32>
    %c3_71 = arith.constant 3 : index
    %206 = arith.index_cast %192 : i32 to index
    %207 = memref.load %arg7[%c3_71, %206] : memref<4x16xf32, #tpu.memory_space<smem>>
    %208 = vector.broadcast %207 : f32 to vector<8x256xf32>
    %209 = arith.mulf %10, %208 : vector<8x256xf32>
    %210 = arith.addf %205, %209 : vector<8x256xf32>
    %211 = arith.addf %201, %210 : vector<8x256xf32>
    %212 = arith.index_cast %192 : i32 to index
    %213 = memref.load %arg8[%212] : memref<16xf32, #tpu.memory_space<smem>>
    %214 = vector.broadcast %213 : f32 to vector<8x256xf32>
    %215 = arith.addf %211, %214 : vector<8x256xf32>
    %c0_72 = arith.constant 0 : index
    %c6 = arith.constant 6 : index
    %c0_73 = arith.constant 0 : index
    %216 = vector.load %arg2[%c0_72, %c6, %c0_73] : memref<8x8x256xf32, #tpu.memory_space<vmem>>, vector<8x1x256xf32>
    %217 = vector.shape_cast %216 : vector<8x1x256xf32> to vector<8x256xf32>
    %218 = arith.mulf %215, %217 : vector<8x256xf32>
    %219 = arith.addf %217, %218 : vector<8x256xf32>
    %220 = vector.shape_cast %219 : vector<8x256xf32> to vector<8x1x256xf32>
    %c0_74 = arith.constant 0 : index
    %c6_75 = arith.constant 6 : index
    %c0_76 = arith.constant 0 : index
    %221 = vector.load %arg9[%c0_74, %c6_75, %c0_76] : memref<8x8x256xf32, #tpu.memory_space<vmem>>, vector<8x1x256xf32>
    tpu.vector_store %arg9[%c0_74, %c6_75, %c0_76], %220 {strides = array<i32>} : memref<8x8x256xf32, #tpu.memory_space<vmem>>, vector<8x1x256xf32>,
    %c7_i32 = arith.constant 7 : i32
    %222 = arith.addi %11, %c7_i32 : i32
    %c0_77 = arith.constant 0 : index
    %223 = arith.index_cast %222 : i32 to index
    %224 = memref.load %arg7[%c0_77, %223] : memref<4x16xf32, #tpu.memory_space<smem>>
    %225 = vector.broadcast %224 : f32 to vector<8x256xf32>
    %226 = arith.mulf %4, %225 : vector<8x256xf32>
    %c1_78 = arith.constant 1 : index
    %227 = arith.index_cast %222 : i32 to index
    %228 = memref.load %arg7[%c1_78, %227] : memref<4x16xf32, #tpu.memory_space<smem>>
    %229 = vector.broadcast %228 : f32 to vector<8x256xf32>
    %230 = arith.mulf %6, %229 : vector<8x256xf32>
    %231 = arith.addf %226, %230 : vector<8x256xf32>
    %c2_79 = arith.constant 2 : index
    %232 = arith.index_cast %222 : i32 to index
    %233 = memref.load %arg7[%c2_79, %232] : memref<4x16xf32, #tpu.memory_space<smem>>
    %234 = vector.broadcast %233 : f32 to vector<8x256xf32>
    %235 = arith.mulf %8, %234 : vector<8x256xf32>
    %c3_80 = arith.constant 3 : index
    %236 = arith.index_cast %222 : i32 to index
    %237 = memref.load %arg7[%c3_80, %236] : memref<4x16xf32, #tpu.memory_space<smem>>
    %238 = vector.broadcast %237 : f32 to vector<8x256xf32>
    %239 = arith.mulf %10, %238 : vector<8x256xf32>
    %240 = arith.addf %235, %239 : vector<8x256xf32>
    %241 = arith.addf %231, %240 : vector<8x256xf32>
    %242 = arith.index_cast %222 : i32 to index
    %243 = memref.load %arg8[%242] : memref<16xf32, #tpu.memory_space<smem>>
    %244 = vector.broadcast %243 : f32 to vector<8x256xf32>
    %245 = arith.addf %241, %244 : vector<8x256xf32>
    %c0_81 = arith.constant 0 : index
    %c7 = arith.constant 7 : index
    %c0_82 = arith.constant 0 : index
    %246 = vector.load %arg2[%c0_81, %c7, %c0_82] : memref<8x8x256xf32, #tpu.memory_space<vmem>>, vector<8x1x256xf32>
    %247 = vector.shape_cast %246 : vector<8x1x256xf32> to vector<8x256xf32>
    %248 = arith.mulf %245, %247 : vector<8x256xf32>
    %249 = arith.addf %247, %248 : vector<8x256xf32>
    %250 = vector.shape_cast %249 : vector<8x256xf32> to vector<8x1x256xf32>
    %c0_83 = arith.constant 0 : index
    %c7_84 = arith.constant 7 : index
    %c0_85 = arith.constant 0 : index
    %251 = vector.load %arg9[%c0_83, %c7_84, %c0_85] : memref<8x8x256xf32, #tpu.memory_space<vmem>>, vector<8x1x256xf32>
    tpu.vector_store %arg9[%c0_83, %c7_84, %c0_85], %250 {strides = array<i32>} : memref<8x8x256xf32, #tpu.memory_space<vmem>>, vector<8x1x256xf32>,
    return
  }
  func.func @transform_0(%arg0: i32, %arg1: i32) -> (i32, i32, i32) {
    %c0_i32 = arith.constant 0 : i32
    %c0_i32_0 = arith.constant 0 : i32
    return %arg0, %arg1, %c0_i32 : i32, i32, i32
  }
  func.func @transform_1(%arg0: i32, %arg1: i32) -> (i32, i32) {
    %c0_i32 = arith.constant 0 : i32
    %c0_i32_0 = arith.constant 0 : i32
    %c0_i32_1 = arith.constant 0 : i32
    return %c0_i32, %c0_i32_0 : i32, i32
  }
  func.func @transform_2(%arg0: i32, %arg1: i32) -> i32 {
    %c0_i32 = arith.constant 0 : i32
    %c0_i32_0 = arith.constant 0 : i32
    return %c0_i32 : i32
  }
  func.func @transform_3(%arg0: i32, %arg1: i32) -> i32 {
    %c0_i32 = arith.constant 0 : i32
    %c0_i32_0 = arith.constant 0 : i32
    return %c0_i32 : i32
  }
  func.func @transform_4(%arg0: i32, %arg1: i32) -> i32 {
    %c0_i32 = arith.constant 0 : i32
    %c0_i32_0 = arith.constant 0 : i32
    return %c0_i32 : i32
  }
  func.func @transform_5(%arg0: i32, %arg1: i32) -> (i32, i32) {
    %c0_i32 = arith.constant 0 : i32
    %c0_i32_0 = arith.constant 0 : i32
    %c0_i32_1 = arith.constant 0 : i32
    return %c0_i32, %c0_i32_0 : i32, i32
  }
  func.func @transform_6(%arg0: i32, %arg1: i32) -> i32 {
    %c0_i32 = arith.constant 0 : i32
    %c0_i32_0 = arith.constant 0 : i32
    return %c0_i32 : i32
  }
  func.func @transform_7(%arg0: i32, %arg1: i32) -> (i32, i32, i32) {
    %c0_i32 = arith.constant 0 : i32
    %c0_i32_0 = arith.constant 0 : i32
    return %arg0, %arg1, %c0_i32 : i32, i32, i32
  }
}

</mosaic_0001>

<llo_original>
// kernel: tpu_custom_call.1
$region0: #{tpu_custom_call.1}
  #allocation0 [shape = 'u32[]', space=smem, size = 0x4, offset = 0x4, fixed_abs, tag = 'smem constant byte address 0x4 - core index']
  #allocation1 [shape = 'u32[72,128]{1,0:T(1,128)}', space=vmem, size = 0x9000, scoped, tag = 'internal scratch']
  #allocation2 [shape = 'f32[4,8,256]{2,1,0:T(8,128)}', space=vmem, size = 0x8000, scoped, tag = 'scratch operand']
  %s0 = inlined_call_operand.hbm [shape: f32[16,16,256], index: 0, kind: input, shape index: {}]
  %s1 = inlined_call_operand.hbm [shape: f32[4,7], index: 1, kind: input, shape index: {}]
  %s2 = inlined_call_operand.hbm [shape: f32[4], index: 2, kind: input, shape index: {}]
  %s3 = inlined_call_operand.hbm [shape: f32[4], index: 3, kind: input, shape index: {}]
  %s4 = inlined_call_operand.hbm [shape: f32[4], index: 4, kind: input, shape index: {}]
  %s5 = inlined_call_operand.vmem [shape: f32[4,16], index: 5, kind: input, shape index: {}]
  %s6 = inlined_call_operand.vmem [shape: f32[16], index: 6, kind: input, shape index: {}]
  %s7 = inlined_call_operand.hbm [shape: f32[16,16,256], index: 7, kind: output, shape index: {}]
  %s8 = sld [smem:[#allocation0]]
  $region93: #{tpu_custom_call.1} parent=0
    _
  %s10 = ssub.s32 1, %s8
  %s11 = scalar_select 0, %s10, %s8
  $region1: #{tpu_custom_call.1} parent=0
    #allocation3 [shape = 'u8[131072]{0}', space=vmem, size = 0x20000, scoped, tag = 'input window, operand 0']
    #allocation4 [shape = 's32[2]{0}', space=sflag, size = 0x8, scoped, tag = 'scoped memory for tpu_custom_call.1']
    #allocation5 [shape = 's32[2]{0}', space=sflag, size = 0x8, scoped, tag = 'scoped memory for tpu_custom_call.1']
    #allocation6 [shape = 's32[2]{0}', space=sflag, size = 0x8, scoped, tag = 'scoped memory for tpu_custom_call.1']
    #allocation7 [shape = 's32[2]{0}', space=sflag, size = 0x8, scoped, tag = 'scoped memory for tpu_custom_call.1']
    #allocation8 [shape = 'u8[2048]{0}', space=smem, size = 0x800, scoped, tag = 'input window, operand 1, single buffered']
    #allocation9 [shape = 'u8[512]{0}', space=smem, size = 0x200, scoped, tag = 'input window, operand 2, single buffered']
    #allocation10 [shape = 's32[1]{0}', space=sflag, size = 0x4, scoped, tag = 'scoped memory for tpu_custom_call.1']
    #allocation11 [shape = 'u8[512]{0}', space=smem, size = 0x200, scoped, tag = 'input window, operand 3, single buffered']
    #allocation12 [shape = 'u8[512]{0}', space=smem, size = 0x200, scoped, tag = 'input window, operand 4, single buffered']
    #allocation13 [shape = 's32[1]{0}', space=sflag, size = 0x4, scoped, tag = 'scoped memory for tpu_custom_call.1']
    #allocation14 [shape = 'u8[2048]{0}', space=smem, size = 0x800, scoped, tag = 'input window, operand 5, single buffered']
    #allocation15 [shape = 'u8[512]{0}', space=smem, size = 0x200, scoped, tag = 'input window, operand 6, single buffered']
    #allocation16 [shape = 's32[1]{0}', space=sflag, size = 0x4, scoped, tag = 'scoped memory for tpu_custom_call.1']
    #allocation17 [shape = 'u8[131072]{0}', space=vmem, size = 0x20000, scoped, tag = 'output window, operand 0']
    %12 = vsyncpa [#allocation4], 0
    %s13 = scalar_lea.sflag [#allocation4], 1
    %14 = vsyncpa %s13, 0
    %15 = vsyncpa [#allocation6], 0
    %16 = vsyncpa [#allocation10], 0
    %17 = vsyncpa [#allocation13], 0
    %18 = vsyncpa [#allocation7], 0
    %19 = vsyncpa [#allocation16], 0
    %20 = vsyncpa [#allocation5], 0
    %s21 = scalar_lea.sflag [#allocation5], 1
    %22 = vsyncpa %s21, 0
    loop: start=0, step=1, limit=6
    $region2: #{tpu_custom_call.1} parent=1 // loop_pre_header
      _
    $region3: #{tpu_custom_call.1} parent=1 // loop_header
      %s24 = sphi 0, %s28
      %p25 = scmp.ge.s32.totalorder %s24, 6
      %s31 = sphi 0, %s43
      %s32 = sphi 0, %s39
      %s33 = sphi 0, %s31
      %s34 = sphi 0, %s32
      %s35 = sphi 0, %s33
      %s36 = sphi 0, %s34
      %s48 = sphi 0, %s50
      %s51 = sphi 0, %s48
      %s52 = sphi 0, %s51
      %s68 = sphi 0, %s52
      %s72 = sphi 0, %s72
      %s74 = sphi 0, %s72
      %s75 = sphi 0, %s74
      %s89 = sphi 0, %s75
      %s93 = sphi 0, %s93
      %s95 = sphi 0, %s93
      %s96 = sphi 0, %s95
      %s110 = sphi 0, %s96
      %s114 = sphi 0, %s114
      %s116 = sphi 0, %s114
      %s117 = sphi 0, %s116
      %s131 = sphi 0, %s117
      %s135 = sphi 0, %s135
      %s137 = sphi 0, %s135
      %s138 = sphi 0, %s137
      %s152 = sphi 0, %s138
      %s156 = sphi 0, %s156
      %s158 = sphi 0, %s156
      %s159 = sphi 0, %s158
      %s173 = sphi 0, %s159
      %s177 = sphi 0, %s177
      %s179 = sphi 0, %s177
      %s180 = sphi 0, %s179
      %s194 = sphi 0, %s180
      %s202 = sphi 0, %s204
      %s205 = sphi 0, %s202
      %s206 = sphi 0, %s205
      %s222 = sphi 0, %s206
    $region4: #{tpu_custom_call.1} parent=1 // loop_header_branch
      %27 = sbr.rel (%p25) target = $region8
    $region5: #{tpu_custom_call.1} parent=1 // loop_body
      %s29 = ssub.s32 %s24, 1
      %s30 = ssub.s32 %s24, 2
      %s37 = sadd.s32 1, %s32
      %p38 = scmp.ge.s32.totalorder %s37, 2
      %s39 = scalar_select %p38, 0, %s37
      %s40 = sadd.s32 1, %s31
      %s41 = scalar_select %p38, %s40, %s31
      %p42 = scmp.ge.s32.totalorder %s41, 2
      %s43 = scalar_select %p42, 0, %s41
      %s44 = ssub.s32 %s31, %s43
      %s45 = ssub.s32 %s32, %s39
      %s46 = sor.u32 %s44, %s45
      %p47 = scmp.eq.s32.totalorder %s46, 0
      %s49 = sadd.s32 %s48, 1
      %s50 = scalar_select %p47, %s48, %s49
      %p53 = pneg %p47
      %p54 = scmp.eq.s32.totalorder %s24, 3
      %p55 = por %p53, %p54
      %p56 = scmp.ne.s32.totalorder %s48, %s51
      %p57 = scmp.eq.s32.totalorder %s24, 0
      %p58 = por %p56, %p57
      %p59 = scmp.ne.s32.totalorder %s48, %s51
      %p60 = scmp.eq.s32.totalorder %s29, 3
      %p61 = por %p59, %p60
      %p62 = scmp.ne.s32.totalorder %s51, %s52
      %p63 = scmp.eq.s32.totalorder %s29, 0
      %p64 = por %p62, %p63
      %p65 = scmp.ne.s32.totalorder %s51, %s52
      %p66 = scmp.eq.s32.totalorder %s30, 3
      %p67 = por %p65, %p66
      %p69 = scmp.ne.s32.totalorder %s52, %s68
      %p70 = scmp.eq.s32.totalorder %s30, 0
      %p71 = por %p69, %p70
      %s73 = sadd.s32 %s72, 1
      %p76 = scmp.eq.s32.totalorder %s24, 3
      %p77 = scmp.ne.s32.totalorder %s72, %s74
      %p78 = scmp.eq.s32.totalorder %s24, 0
      %p79 = por %p77, %p78
      %p80 = scmp.ne.s32.totalorder %s72, %s74
      %p81 = scmp.eq.s32.totalorder %s29, 3
      %p82 = por %p80, %p81
      %p83 = scmp.ne.s32.totalorder %s74, %s75
      %p84 = scmp.eq.s32.totalorder %s29, 0
      %p85 = por %p83, %p84
      %p86 = scmp.ne.s32.totalorder %s74, %s75
      %p87 = scmp.eq.s32.totalorder %s30, 3
      %p88 = por %p86, %p87
      %p90 = scmp.ne.s32.totalorder %s75, %s89
      %p91 = scmp.eq.s32.totalorder %s30, 0
      %p92 = por %p90, %p91
      %s94 = sadd.s32 %s93, 1
      %p97 = scmp.eq.s32.totalorder %s24, 3
      %p98 = scmp.ne.s32.totalorder %s93, %s95
      %p99 = scmp.eq.s32.totalorder %s24, 0
      %p100 = por %p98, %p99
      %p101 = scmp.ne.s32.totalorder %s93, %s95
      %p102 = scmp.eq.s32.totalorder %s29, 3
      %p103 = por %p101, %p102
      %p104 = scmp.ne.s32.totalorder %s95, %s96
      %p105 = scmp.eq.s32.totalorder %s29, 0
      %p106 = por %p104, %p105
      %p107 = scmp.ne.s32.totalorder %s95, %s96
      %p108 = scmp.eq.s32.totalorder %s30, 3
      %p109 = por %p107, %p108
      %p111 = scmp.ne.s32.totalorder %s96, %s110
      %p112 = scmp.eq.s32.totalorder %s30, 0
      %p113 = por %p111, %p112
      %s115 = sadd.s32 %s114, 1
      %p118 = scmp.eq.s32.totalorder %s24, 3
      %p119 = scmp.ne.s32.totalorder %s114, %s116
      %p120 = scmp.eq.s32.totalorder %s24, 0
      %p121 = por %p119, %p120
      %p122 = scmp.ne.s32.totalorder %s114, %s116
      %p123 = scmp.eq.s32.totalorder %s29, 3
      %p124 = por %p122, %p123
      %p125 = scmp.ne.s32.totalorder %s116, %s117
      %p126 = scmp.eq.s32.totalorder %s29, 0
      %p127 = por %p125, %p126
      %p128 = scmp.ne.s32.totalorder %s116, %s117
      %p129 = scmp.eq.s32.totalorder %s30, 3
      %p130 = por %p128, %p129
      %p132 = scmp.ne.s32.totalorder %s117, %s131
      %p133 = scmp.eq.s32.totalorder %s30, 0
      %p134 = por %p132, %p133
      %s136 = sadd.s32 %s135, 1
      %p139 = scmp.eq.s32.totalorder %s24, 3
      %p140 = scmp.ne.s32.totalorder %s135, %s137
      %p141 = scmp.eq.s32.totalorder %s24, 0
      %p142 = por %p140, %p141
      %p143 = scmp.ne.s32.totalorder %s135, %s137
      %p144 = scmp.eq.s32.totalorder %s29, 3
      %p145 = por %p143, %p144
      %p146 = scmp.ne.s32.totalorder %s137, %s138
      %p147 = scmp.eq.s32.totalorder %s29, 0
      %p148 = por %p146, %p147
      %p149 = scmp.ne.s32.totalorder %s137, %s138
      %p150 = scmp.eq.s32.totalorder %s30, 3
      %p151 = por %p149, %p150
      %p153 = scmp.ne.s32.totalorder %s138, %s152
      %p154 = scmp.eq.s32.totalorder %s30, 0
      %p155 = por %p153, %p154
      %s157 = sadd.s32 %s156, 1
      %p160 = scmp.eq.s32.totalorder %s24, 3
      %p161 = scmp.ne.s32.totalorder %s156, %s158
      %p162 = scmp.eq.s32.totalorder %s24, 0
      %p163 = por %p161, %p162
      %p164 = scmp.ne.s32.totalorder %s156, %s158
      %p165 = scmp.eq.s32.totalorder %s29, 3
      %p166 = por %p164, %p165
      %p167 = scmp.ne.s32.totalorder %s158, %s159
      %p168 = scmp.eq.s32.totalorder %s29, 0
      %p169 = por %p167, %p168
      %p170 = scmp.ne.s32.totalorder %s158, %s159
      %p171 = scmp.eq.s32.totalorder %s30, 3
      %p172 = por %p170, %p171
      %p174 = scmp.ne.s32.totalorder %s159, %s173
      %p175 = scmp.eq.s32.totalorder %s30, 0
      %p176 = por %p174, %p175
      %s178 = sadd.s32 %s177, 1
      %p181 = scmp.eq.s32.totalorder %s24, 3
      %p182 = scmp.ne.s32.totalorder %s177, %s179
      %p183 = scmp.eq.s32.totalorder %s24, 0
      %p184 = por %p182, %p183
      %p185 = scmp.ne.s32.totalorder %s177, %s179
      %p186 = scmp.eq.s32.totalorder %s29, 3
      %p187 = por %p185, %p186
      %p188 = scmp.ne.s32.totalorder %s179, %s180
      %p189 = scmp.eq.s32.totalorder %s29, 0
      %p190 = por %p188, %p189
      %p191 = scmp.ne.s32.totalorder %s179, %s180
      %p192 = scmp.eq.s32.totalorder %s30, 3
      %p193 = por %p191, %p192
      %p195 = scmp.ne.s32.totalorder %s180, %s194
      %p196 = scmp.eq.s32.totalorder %s30, 0
      %p197 = por %p195, %p196
      %s198 = ssub.s32 %s31, %s43
      %s199 = ssub.s32 %s32, %s39
      %s200 = sor.u32 %s198, %s199
      %p201 = scmp.eq.s32.totalorder %s200, 0
      %s203 = sadd.s32 %s202, 1
      %s204 = scalar_select %p201, %s202, %s203
      %p207 = pneg %p201
      %p208 = scmp.eq.s32.totalorder %s24, 3
      %p209 = por %p207, %p208
      %p210 = scmp.ne.s32.totalorder %s202, %s205
      %p211 = scmp.eq.s32.totalorder %s24, 0
      %p212 = por %p210, %p211
      %p213 = scmp.ne.s32.totalorder %s202, %s205
      %p214 = scmp.eq.s32.totalorder %s29, 3
      %p215 = por %p213, %p214
      %p216 = scmp.ne.s32.totalorder %s205, %s206
      %p217 = scmp.eq.s32.totalorder %s29, 0
      %p218 = por %p216, %p217
      %p219 = scmp.ne.s32.totalorder %s205, %s206
      %p220 = scmp.eq.s32.totalorder %s30, 3
      %p221 = por %p219, %p220
      %p223 = scmp.ne.s32.totalorder %s206, %s222
      %p224 = scmp.eq.s32.totalorder %s30, 0
      %p225 = por %p223, %p224
      %p226 = scmp.le.s32.totalorder 1, %s24
      %p227 = scmp.lt.s32.totalorder %s24, 5
      %p228 = pnand %p226, %p227
      %p229 = pneg %p228
      // Predicated region
      $region9: #{tpu_custom_call.1} parent=5 // pred_check
        _
      $region10: #{tpu_custom_call.1} parent=5 // pred_check_branch
        %231 = sbr.rel (%p228) target = $region12
      $region11: #{tpu_custom_call.1} parent=5 // pred_region
        %s232 = ssub.s32 %s24, 1
        // Predicated region
        $region13: #{tpu_custom_call.1} parent=11 // pred_check
          %p233 = pneg %p85
        $region14: #{tpu_custom_call.1} parent=11 // pred_check_branch
          %235 = sbr.rel (%p233) target = $region16
        $region15: #{tpu_custom_call.1} parent=11 // pred_region
          %237 = vsyncadd [#allocation6], 0
          %s239 = sshll.u32 %s1, 4
          %s240 = int_to_ptr.hbm [resolvable:$true] %s239
          %242 = dma.hbm_to_smem %s240, 64, [#allocation8], [#allocation6]
        $region16: #{tpu_custom_call.1} parent=11 // pred_fallthru
          _
        // Predicated region
        $region17: #{tpu_custom_call.1} parent=11 // pred_check
          %p243 = pneg %p106
        $region18: #{tpu_custom_call.1} parent=11 // pred_check_branch
          %245 = sbr.rel (%p243) target = $region20
        $region19: #{tpu_custom_call.1} parent=11 // pred_region
          %247 = vsyncadd [#allocation10], 0
          %s249 = sshll.u32 %s2, 4
          %s250 = int_to_ptr.hbm [resolvable:$true] %s249
          %252 = dma.hbm_to_smem %s250, 16, [#allocation9], [#allocation10]
        $region20: #{tpu_custom_call.1} parent=11 // pred_fallthru
          _
        // Predicated region
        $region21: #{tpu_custom_call.1} parent=11 // pred_check
          %p253 = pneg %p127
        $region22: #{tpu_custom_call.1} parent=11 // pred_check_branch
          %255 = sbr.rel (%p253) target = $region24
        $region23: #{tpu_custom_call.1} parent=11 // pred_region
          %257 = vsyncadd [#allocation10], 0
          %s259 = sshll.u32 %s3, 4
          %s260 = int_to_ptr.hbm [resolvable:$true] %s259
          %262 = dma.hbm_to_smem %s260, 16, [#allocation11], [#allocation10]
        $region24: #{tpu_custom_call.1} parent=11 // pred_fallthru
          _
        // Predicated region
        $region25: #{tpu_custom_call.1} parent=11 // pred_check
          %p263 = pneg %p148
        $region26: #{tpu_custom_call.1} parent=11 // pred_check_branch
          %265 = sbr.rel (%p263) target = $region28
        $region27: #{tpu_custom_call.1} parent=11 // pred_region
          %267 = vsyncadd [#allocation13], 0
          %s269 = sshll.u32 %s4, 4
          %s270 = int_to_ptr.hbm [resolvable:$true] %s269
          %272 = dma.hbm_to_smem %s270, 16, [#allocation12], [#allocation13]
        $region28: #{tpu_custom_call.1} parent=11 // pred_fallthru
          _
        // Predicated region
        $region29: #{tpu_custom_call.1} parent=11 // pred_check
          %p273 = pneg %p169
        $region30: #{tpu_custom_call.1} parent=11 // pred_check_branch
          %275 = sbr.rel (%p273) target = $region32
        $region31: #{tpu_custom_call.1} parent=11 // pred_region
          %277 = vsyncadd [#allocation7], 0
          %s279 = sshll.u32 %s5, 4
          %s280 = int_to_ptr.vmem [resolvable:$true] %s279
          %282 = dma.vmem_to_smem %s280, 64, [#allocation14], [#allocation7]
        $region32: #{tpu_custom_call.1} parent=11 // pred_fallthru
          _
        // Predicated region
        $region33: #{tpu_custom_call.1} parent=11 // pred_check
          %p283 = pneg %p190
        $region34: #{tpu_custom_call.1} parent=11 // pred_check_branch
          %285 = sbr.rel (%p283) target = $region36
        $region35: #{tpu_custom_call.1} parent=11 // pred_region
          %287 = vsyncadd [#allocation16], 0
          %s289 = sshll.u32 %s6, 4
          %s290 = int_to_ptr.vmem [resolvable:$true] %s289
          %292 = dma.vmem_to_smem %s290, 16, [#allocation15], [#allocation16]
        $region36: #{tpu_custom_call.1} parent=11 // pred_fallthru
          _
      $region12: #{tpu_custom_call.1} parent=5 // pred_fallthru
        _
      %p293 = scmp.lt.s32.totalorder %s24, 4
      // Predicated region
      $region37: #{tpu_custom_call.1} parent=5 // pred_check
        %p294 = pneg %p293
      $region38: #{tpu_custom_call.1} parent=5 // pred_check_branch
        %296 = sbr.rel (%p294) target = $region40
      $region39: #{tpu_custom_call.1} parent=5 // pred_region
        // Predicated region
        $region41: #{tpu_custom_call.1} parent=39 // pred_check
          %p297 = pneg %p58
        $region42: #{tpu_custom_call.1} parent=39 // pred_check_branch
          %299 = sbr.rel (%p297) target = $region44
        $region43: #{tpu_custom_call.1} parent=39 // pred_region
          %s300 = sand.u32 %s48, 1
          %s301 = scalar_lea.sflag [#allocation4], %s300
          %s302 = sand.u32 %s48, 1
          %s303 = smul.addr %s302, 128
          %s304 = scalar_lea.vmem [#allocation3], %s303
          %s305 = smul.u32 8, %s31
          %307 = vsyncadd %s301, 0
          %s308 = smul.addr %s32, 2
          %s309 = smul.addr %s305, 4
          %s310 = sadd.s32 %s308, %s309
          %s311 = smul.addr %s310, 8
          %s312 = scalar_lea.hbm %s0, %s311
          %s313 = sshll.u32 %s312, 4
          %s314 = int_to_ptr.hbm [resolvable:$true] %s313
          %s315 = sshll.u32 %s304, 4
          %s316 = int_to_ptr.vmem [resolvable:$true] %s315
          %321 = dma.hbm_to_vmem [thread:$0]  %s314, 2048, %s316, %s301, 512, 256, 16
        $region44: #{tpu_custom_call.1} parent=39 // pred_fallthru
          _
      $region40: #{tpu_custom_call.1} parent=5 // pred_fallthru
        _
      %p322 = scmp.le.s32.totalorder 1, %s24
      %p323 = scmp.lt.s32.totalorder %s24, 5
      %p324 = pnand %p322, %p323
      %p325 = pneg %p324
      // Predicated region
      $region45: #{tpu_custom_call.1} parent=5 // pred_check
        _
      $region46: #{tpu_custom_call.1} parent=5 // pred_check_branch
        %327 = sbr.rel (%p324) target = $region48
      $region47: #{tpu_custom_call.1} parent=5 // pred_region
        %s328 = ssub.s32 %s24, 1
        %s329 = sand.u32 %s51, 1
        %s330 = scalar_lea.sflag [#allocation4], %s329
        %s331 = sand.u32 %s51, 1
        %s332 = smul.addr %s331, 128
        %s333 = scalar_lea.vmem [#allocation3], %s332
        // Predicated region
        $region49: #{tpu_custom_call.1} parent=47 // pred_check
          %p334 = pneg %p64
        $region50: #{tpu_custom_call.1} parent=47 // pred_check_branch
          %336 = sbr.rel (%p334) target = $region52
        $region51: #{tpu_custom_call.1} parent=47 // pred_region
          %338 = dma.done %s330, 2048
        $region52: #{tpu_custom_call.1} parent=47 // pred_fallthru
          _
        // Predicated region
        $region53: #{tpu_custom_call.1} parent=47 // pred_check
          %p339 = pneg %p85
        $region54: #{tpu_custom_call.1} parent=47 // pred_check_branch
          %341 = sbr.rel (%p339) target = $region56
        $region55: #{tpu_custom_call.1} parent=47 // pred_region
          %343 = dma.done [#allocation6], 64
        $region56: #{tpu_custom_call.1} parent=47 // pred_fallthru
          _
        // Predicated region
        $region57: #{tpu_custom_call.1} parent=47 // pred_check
          %p344 = pneg %p106
        $region58: #{tpu_custom_call.1} parent=47 // pred_check_branch
          %346 = sbr.rel (%p344) target = $region60
        $region59: #{tpu_custom_call.1} parent=47 // pred_region
          %348 = dma.done [#allocation10], 16
        $region60: #{tpu_custom_call.1} parent=47 // pred_fallthru
          _
        // Predicated region
        $region61: #{tpu_custom_call.1} parent=47 // pred_check
          %p349 = pneg %p127
        $region62: #{tpu_custom_call.1} parent=47 // pred_check_branch
          %351 = sbr.rel (%p349) target = $region64
        $region63: #{tpu_custom_call.1} parent=47 // pred_region
          %353 = dma.done [#allocation10], 16
        $region64: #{tpu_custom_call.1} parent=47 // pred_fallthru
          _
        // Predicated region
        $region65: #{tpu_custom_call.1} parent=47 // pred_check
          %p354 = pneg %p148
        $region66: #{tpu_custom_call.1} parent=47 // pred_check_branch
          %356 = sbr.rel (%p354) target = $region68
        $region67: #{tpu_custom_call.1} parent=47 // pred_region
          %358 = dma.done [#allocation13], 16
        $region68: #{tpu_custom_call.1} parent=47 // pred_fallthru
          _
        // Predicated region
        $region69: #{tpu_custom_call.1} parent=47 // pred_check
          %p359 = pneg %p169
        $region70: #{tpu_custom_call.1} parent=47 // pred_check_branch
          %361 = sbr.rel (%p359) target = $region72
        $region71: #{tpu_custom_call.1} parent=47 // pred_region
          %363 = dma.done [#allocation7], 64
        $region72: #{tpu_custom_call.1} parent=47 // pred_fallthru
          _
        // Predicated region
        $region73: #{tpu_custom_call.1} parent=47 // pred_check
          %p364 = pneg %p190
        $region74: #{tpu_custom_call.1} parent=47 // pred_check_branch
          %366 = sbr.rel (%p364) target = $region76
        $region75: #{tpu_custom_call.1} parent=47 // pred_region
          %368 = dma.done [#allocation16], 16
        $region76: #{tpu_custom_call.1} parent=47 // pred_fallthru
          _
        %369 = sfence
        %s370 = sand.u32 %s51, 1
        %s371 = scalar_lea.sflag [#allocation4], %s370
        %s372 = sand.u32 %s51, 1
        %s373 = smul.addr %s372, 128
        %s374 = scalar_lea.vmem [#allocation3], %s373
        %p375 = pneg %p64
        %p376 = pneg %p61
        %p377 = pneg %p85
        %p378 = pneg %p82
        %p379 = pneg %p106
        %p380 = pneg %p103
        %p381 = pneg %p127
        %p382 = pneg %p124
        %p383 = pneg %p148
        %p384 = pneg %p145
        %p385 = pneg %p169
        %p386 = pneg %p166
        %p387 = pneg %p190
        %p388 = pneg %p187
        %p389 = pneg %p218
        %p390 = pneg %p215
        %s391 = sand.u32 %s205, 1
        %s392 = scalar_lea.sflag [#allocation5], %s391
        %s393 = sand.u32 %s205, 1
        %s394 = smul.addr %s393, 128
        %s395 = scalar_lea.vmem [#allocation17], %s394
        %s396 = smul.u32 8, %s33
        %s397 = smul.u32 8, %s33
        %p398 = scmp.eq.s32.totalorder %s34, 0
        // Predicated region
        $region77: #{tpu_custom_call.1} parent=47 // pred_check
          %p399 = pneg %p398
        $region78: #{tpu_custom_call.1} parent=47 // pred_check_branch
          %401 = sbr.rel (%p399) target = $region80
        $region79: #{tpu_custom_call.1} parent=47 // pred_region
          %v402 = vld [vmem:[%s333] ss:$8 sm:$0x3]
          %s403 = scalar_lea.vmem %s333, 16 [#allocation3]
          %v404 = vld [vmem:[%s403] ss:$8 sm:$0x3]
          %s405 = scalar_lea.vmem %s333, 32 [#allocation3]
          %v406 = vld [vmem:[%s405] ss:$8 sm:$0x3]
          %s407 = scalar_lea.vmem %s333, 48 [#allocation3]
          %v408 = vld [vmem:[%s407] ss:$8 sm:$0x3]
          %s409 = scalar_lea.vmem %s333, 64 [#allocation3]
          %v410 = vld [vmem:[%s409] ss:$8 sm:$0x3]
          %s411 = scalar_lea.vmem %s333, 80 [#allocation3]
          %v412 = vld [vmem:[%s411] ss:$8 sm:$0x3]
          %s413 = scalar_lea.vmem %s333, 96 [#allocation3]
          %v414 = vld [vmem:[%s413] ss:$8 sm:$0x3]
          %s415 = scalar_lea.vmem %s333, 112 [#allocation3]
          %v416 = vld [vmem:[%s415] ss:$8 sm:$0x3]
          %v417 = vlaneseq
          %v418 = vand.u32 %v417, 127
          %v419 = vadd.s32 %v418, 128
          %s420 = sld [smem:[#allocation8]]
          %429 = vst [vmem:[#allocation1] ss:$9 sm:$0xff] %v402
          %s430 = scalar_lea.vmem [#allocation1], 1
          %431 = vst [vmem:[%s430] ss:$9 sm:$0xff] %v404
          %s432 = scalar_lea.vmem [#allocation1], 2
          %433 = vst [vmem:[%s432] ss:$9 sm:$0xff] %v406
          %s434 = scalar_lea.vmem [#allocation1], 3
          %435 = vst [vmem:[%s434] ss:$9 sm:$0xff] %v408
          %s436 = scalar_lea.vmem [#allocation1], 4
          %437 = vst [vmem:[%s436] ss:$9 sm:$0xff] %v410
          %s438 = scalar_lea.vmem [#allocation1], 5
          %439 = vst [vmem:[%s438] ss:$9 sm:$0xff] %v412
          %s440 = scalar_lea.vmem [#allocation1], 6
          %441 = vst [vmem:[%s440] ss:$9 sm:$0xff] %v414
          %s442 = scalar_lea.vmem [#allocation1], 7
          %443 = vst [vmem:[%s442] ss:$9 sm:$0xff] %v416
          %v444 = vld [vmem:[#allocation1] sm:$0xff]
          %v445 = vld [vmem:[#allocation1 + $0x9] sm:$0xff]
          %448 = vrot.lane.b32.xlu0 %v444, 3
          %v449 = vpop.permute.xlu0 %448
          %450 = vrot.lane.b32.xlu0 %v445, 3
          %v451 = vpop.permute.xlu0 %450
          %vm452 = vcmp.lt.s32.totalorder %v418, 3
          %v453 = vsel %vm452, %v449, %v451
          %v454 = vsel %vm452, %v451, %v449
          %vm455 = vcmp.ge.s32.totalorder %v418, 3
          %vm456 = vcmp.ge.s32.totalorder %v419, 3
          %v457 = vsel %vm455, %v454, 0.0
          %v458 = vsel %vm456, %v453, 0.0
          %v459 = vstv %s420
          %v460 = vmul.f32 %v459, %v457
          %v461 = vmul.f32 %v459, %v458
          %s462 = sld [smem:[#allocation8 + $0x1]]
          %463 = vst [vmem:[#allocation1] ss:$9 sm:$0xff] %v402
          %s464 = scalar_lea.vmem [#allocation1], 1
          %465 = vst [vmem:[%s464] ss:$9 sm:$0xff] %v404
          %s466 = scalar_lea.vmem [#allocation1], 2
          %467 = vst [vmem:[%s466] ss:$9 sm:$0xff] %v406
          %s468 = scalar_lea.vmem [#allocation1], 3
          %469 = vst [vmem:[%s468] ss:$9 sm:$0xff] %v408
          %s470 = scalar_lea.vmem [#allocation1], 4
          %471 = vst [vmem:[%s470] ss:$9 sm:$0xff] %v410
          %s472 = scalar_lea.vmem [#allocation1], 5
          %473 = vst [vmem:[%s472] ss:$9 sm:$0xff] %v412
          %s474 = scalar_lea.vmem [#allocation1], 6
          %475 = vst [vmem:[%s474] ss:$9 sm:$0xff] %v414
          %s476 = scalar_lea.vmem [#allocation1], 7
          %477 = vst [vmem:[%s476] ss:$9 sm:$0xff] %v416
          %v478 = vld [vmem:[#allocation1] sm:$0xff]
          %v479 = vld [vmem:[#allocation1 + $0x9] sm:$0xff]
          %482 = vrot.lane.b32.xlu0 %v478, 2
          %v483 = vpop.permute.xlu0 %482
          %484 = vrot.lane.b32.xlu0 %v479, 2
          %v485 = vpop.permute.xlu0 %484
          %vm486 = vcmp.lt.s32.totalorder %v418, 2
          %v487 = vsel %vm486, %v483, %v485
          %v488 = vsel %vm486, %v485, %v483
          %vm489 = vcmp.ge.s32.totalorder %v418, 2
          %vm490 = vcmp.ge.s32.totalorder %v419, 2
          %v491 = vsel %vm489, %v488, 0.0
          %v492 = vsel %vm490, %v487, 0.0
          %v493 = vstv %s462
          %v494 = vmul.f32 %v493, %v491
          %v495 = vmul.f32 %v493, %v492
          %s496 = sld [smem:[#allocation8 + $0x2]]
          %497 = vst [vmem:[#allocation1] ss:$9 sm:$0xff] %v402
          %s498 = scalar_lea.vmem [#allocation1], 1
          %499 = vst [vmem:[%s498] ss:$9 sm:$0xff] %v404
          %s500 = scalar_lea.vmem [#allocation1], 2
          %501 = vst [vmem:[%s500] ss:$9 sm:$0xff] %v406
          %s502 = scalar_lea.vmem [#allocation1], 3
          %503 = vst [vmem:[%s502] ss:$9 sm:$0xff] %v408
          %s504 = scalar_lea.vmem [#allocation1], 4
          %505 = vst [vmem:[%s504] ss:$9 sm:$0xff] %v410
          %s506 = scalar_lea.vmem [#allocation1], 5
          %507 = vst [vmem:[%s506] ss:$9 sm:$0xff] %v412
          %s508 = scalar_lea.vmem [#allocation1], 6
          %509 = vst [vmem:[%s508] ss:$9 sm:$0xff] %v414
          %s510 = scalar_lea.vmem [#allocation1], 7
          %511 = vst [vmem:[%s510] ss:$9 sm:$0xff] %v416
          %v512 = vld [vmem:[#allocation1] sm:$0xff]
          %v513 = vld [vmem:[#allocation1 + $0x9] sm:$0xff]
          %516 = vrot.lane.b32.xlu0 %v512, 1
          %v517 = vpop.permute.xlu0 %516
          %518 = vrot.lane.b32.xlu0 %v513, 1
          %v519 = vpop.permute.xlu0 %518
          %vm520 = vcmp.lt.s32.totalorder %v418, 1
          %v521 = vsel %vm520, %v517, %v519
          %v522 = vsel %vm520, %v519, %v517
          %vm523 = vcmp.ge.s32.totalorder %v418, 1
          %vm524 = vcmp.ge.s32.totalorder %v419, 1
          %v525 = vsel %vm523, %v522, 0.0
          %v526 = vsel %vm524, %v521, 0.0
          %v527 = vstv %s496
          %v528 = vmul.f32 %v527, %v525
          %v529 = vmul.f32 %v527, %v526
          %s530 = sld [smem:[#allocation8 + $0x3]]
          %v531 = vstv %s530
          %v532 = vmul.f32 %v531, %v402
          %v533 = vmul.f32 %v531, %v404
          %v534 = vmul.f32 %v531, %v406
          %v535 = vmul.f32 %v531, %v408
          %v536 = vmul.f32 %v531, %v410
          %v537 = vmul.f32 %v531, %v412
          %v538 = vmul.f32 %v531, %v414
          %v539 = vmul.f32 %v531, %v416
          %s540 = sld [smem:[#allocation8 + $0x4]]
          %541 = vst [vmem:[#allocation1] ss:$9 sm:$0xff] %v402
          %s542 = scalar_lea.vmem [#allocation1], 1
          %543 = vst [vmem:[%s542] ss:$9 sm:$0xff] %v404
          %s544 = scalar_lea.vmem [#allocation1], 2
          %545 = vst [vmem:[%s544] ss:$9 sm:$0xff] %v406
          %s546 = scalar_lea.vmem [#allocation1], 3
          %547 = vst [vmem:[%s546] ss:$9 sm:$0xff] %v408
          %s548 = scalar_lea.vmem [#allocation1], 4
          %549 = vst [vmem:[%s548] ss:$9 sm:$0xff] %v410
          %s550 = scalar_lea.vmem [#allocation1], 5
          %551 = vst [vmem:[%s550] ss:$9 sm:$0xff] %v412
          %s552 = scalar_lea.vmem [#allocation1], 6
          %553 = vst [vmem:[%s552] ss:$9 sm:$0xff] %v414
          %s554 = scalar_lea.vmem [#allocation1], 7
          %555 = vst [vmem:[%s554] ss:$9 sm:$0xff] %v416
          %v556 = vld [vmem:[#allocation1] sm:$0xff]
          %v557 = vld [vmem:[#allocation1 + $0x9] sm:$0xff]
          %560 = vrot.lane.b32.xlu0 %v556, 127
          %v561 = vpop.permute.xlu0 %560
          %562 = vrot.lane.b32.xlu0 %v557, 127
          %v563 = vpop.permute.xlu0 %562
          %vm564 = vcmp.lt.s32.totalorder %v418, 127
          %v565 = vsel %vm564, %v561, %v563
          %v566 = vsel %vm564, %v563, %v561
          %vm567 = vcmp.lt.s32.totalorder %v418, 255
          %vm568 = vcmp.lt.s32.totalorder %v419, 255
          %v569 = vsel %vm567, %v565, 0.0
          %v570 = vsel %vm568, %v566, 0.0
          %v571 = vstv %s540
          %v572 = vmul.f32 %v571, %v569
          %v573 = vmul.f32 %v571, %v570
          %s574 = sld [smem:[#allocation8 + $0x5]]
          %575 = vst [vmem:[#allocation1] ss:$9 sm:$0xff] %v402
          %s576 = scalar_lea.vmem [#allocation1], 1
          %577 = vst [vmem:[%s576] ss:$9 sm:$0xff] %v404
          %s578 = scalar_lea.vmem [#allocation1], 2
          %579 = vst [vmem:[%s578] ss:$9 sm:$0xff] %v406
          %s580 = scalar_lea.vmem [#allocation1], 3
          %581 = vst [vmem:[%s580] ss:$9 sm:$0xff] %v408
          %s582 = scalar_lea.vmem [#allocation1], 4
          %583 = vst [vmem:[%s582] ss:$9 sm:$0xff] %v410
          %s584 = scalar_lea.vmem [#allocation1], 5
          %585 = vst [vmem:[%s584] ss:$9 sm:$0xff] %v412
          %s586 = scalar_lea.vmem [#allocation1], 6
          %587 = vst [vmem:[%s586] ss:$9 sm:$0xff] %v414
          %s588 = scalar_lea.vmem [#allocation1], 7
          %589 = vst [vmem:[%s588] ss:$9 sm:$0xff] %v416
          %v590 = vld [vmem:[#allocation1] sm:$0xff]
          %v591 = vld [vmem:[#allocation1 + $0x9] sm:$0xff]
          %594 = vrot.lane.b32.xlu0 %v590, 126
          %v595 = vpop.permute.xlu0 %594
          %596 = vrot.lane.b32.xlu0 %v591, 126
          %v597 = vpop.permute.xlu0 %596
          %vm598 = vcmp.lt.s32.totalorder %v418, 126
          %v599 = vsel %vm598, %v595, %v597
          %v600 = vsel %vm598, %v597, %v595
          %vm601 = vcmp.lt.s32.totalorder %v418, 254
          %vm602 = vcmp.lt.s32.totalorder %v419, 254
          %v603 = vsel %vm601, %v599, 0.0
          %v604 = vsel %vm602, %v600, 0.0
          %v605 = vstv %s574
          %v606 = vmul.f32 %v605, %v603
          %v607 = vmul.f32 %v605, %v604
          %s608 = sld [smem:[#allocation8 + $0x6]]
          %609 = vst [vmem:[#allocation1] ss:$9 sm:$0xff] %v402
          %s610 = scalar_lea.vmem [#allocation1], 1
          %611 = vst [vmem:[%s610] ss:$9 sm:$0xff] %v404
          %s612 = scalar_lea.vmem [#allocation1], 2
          %613 = vst [vmem:[%s612] ss:$9 sm:$0xff] %v406
          %s614 = scalar_lea.vmem [#allocation1], 3
          %615 = vst [vmem:[%s614] ss:$9 sm:$0xff] %v408
          %s616 = scalar_lea.vmem [#allocation1], 4
          %617 = vst [vmem:[%s616] ss:$9 sm:$0xff] %v410
          %s618 = scalar_lea.vmem [#allocation1], 5
          %619 = vst [vmem:[%s618] ss:$9 sm:$0xff] %v412
          %s620 = scalar_lea.vmem [#allocation1], 6
          %621 = vst [vmem:[%s620] ss:$9 sm:$0xff] %v414
          %s622 = scalar_lea.vmem [#allocation1], 7
          %623 = vst [vmem:[%s622] ss:$9 sm:$0xff] %v416
          %v624 = vld [vmem:[#allocation1] sm:$0xff]
          %v625 = vld [vmem:[#allocation1 + $0x9] sm:$0xff]
          %628 = vrot.lane.b32.xlu0 %v624, 125
          %v629 = vpop.permute.xlu0 %628
          %630 = vrot.lane.b32.xlu0 %v625, 125
          %v631 = vpop.permute.xlu0 %630
          %vm632 = vcmp.lt.s32.totalorder %v418, 125
          %v633 = vsel %vm632, %v629, %v631
          %v634 = vsel %vm632, %v631, %v629
          %vm635 = vcmp.lt.s32.totalorder %v418, 253
          %vm636 = vcmp.lt.s32.totalorder %v419, 253
          %v637 = vsel %vm635, %v633, 0.0
          %v638 = vsel %vm636, %v634, 0.0
          %v639 = vstv %s608
          %v640 = vmul.f32 %v639, %v637
          %v641 = vmul.f32 %v639, %v638
          %v642 = vadd.f32 %v460, %v494
          %v643 = vadd.f32 %v461, %v495
          %652 = vst [vmem:[#allocation1] ss:$9 sm:$0xff] %v532
          %s653 = scalar_lea.vmem [#allocation1], 1
          %654 = vst [vmem:[%s653] ss:$9 sm:$0xff] %v533
          %s655 = scalar_lea.vmem [#allocation1], 2
          %656 = vst [vmem:[%s655] ss:$9 sm:$0xff] %v534
          %s657 = scalar_lea.vmem [#allocation1], 3
          %658 = vst [vmem:[%s657] ss:$9 sm:$0xff] %v535
          %s659 = scalar_lea.vmem [#allocation1], 4
          %660 = vst [vmem:[%s659] ss:$9 sm:$0xff] %v536
          %s661 = scalar_lea.vmem [#allocation1], 5
          %662 = vst [vmem:[%s661] ss:$9 sm:$0xff] %v537
          %s663 = scalar_lea.vmem [#allocation1], 6
          %664 = vst [vmem:[%s663] ss:$9 sm:$0xff] %v538
          %s665 = scalar_lea.vmem [#allocation1], 7
          %666 = vst [vmem:[%s665] ss:$9 sm:$0xff] %v539
          %v667 = vld [vmem:[#allocation1] sm:$0xff]
          %v668 = vld [vmem:[#allocation1 + $0x9] sm:$0xff]
          %v671 = vadd.f32 %v528, %v667
          %v672 = vadd.f32 %v529, %v668
          %v673 = vadd.f32 %v572, %v606
          %v674 = vadd.f32 %v573, %v607
          %v675 = vadd.f32 %v642, %v671
          %v676 = vadd.f32 %v643, %v672
          %v677 = vadd.f32 %v673, %v640
          %v678 = vadd.f32 %v674, %v641
          %v679 = vadd.f32 %v675, %v677
          %v680 = vadd.f32 %v676, %v678
          %s681 = sld [smem:[#allocation9]]
          %v682 = vstv %s681
          %v683 = vadd.f32 %v679, %v682
          %v684 = vadd.f32 %v680, %v682
          %v685 = vadd.f32 %v683, %v684
          %686 = vadd.xlane.f32.xlu0 %v685
          %v687 = vpop.xlane.xlu0 %686
          %v688 = vrcp.pop 256.0
          %v689 = vmul.f32 256.0, %v688
          %v690 = vsub.f32 1.0, %v689
          %v691 = vmul.f32 %v688, %v690
          %v692 = vadd.f32 %v688, %v691
          %vm693 = vweird.f32 %v688
          %v694 = vsel %vm693, %v688, %v692
          %v695 = vmul.f32 %v687, %v694
          %v696 = vsub.f32 %v683, %v695
          %v697 = vsub.f32 %v684, %v695
          %v698 = vmul.f32 %v696, %v696
          %v699 = vmul.f32 %v697, %v697
          %v700 = vadd.f32 %v698, %v699
          %701 = vadd.xlane.f32.xlu0 %v700
          %v702 = vpop.xlane.xlu0 %701
          %v703 = vmul.f32 %v702, %v694
          %v704 = vadd.f32 %v703, 1e-05
          %v705 = vrsqrt.pop %v704
          %v706 = vmul.f32 %v705, %v704
          %v707 = vmul.f32 %v706, %v705
          %v708 = vmul.f32 0.5, %v707
          %v709 = vsub.f32 1.5, %v708
          %v710 = vmul.f32 %v705, %v709
          %vm711 = vweird.f32 %v704
          %vm712 = vweird.f32 %v705
          %vm713 = vmor %vm711, %vm712
          %v714 = vsel %vm713, %v705, %v710
          %v715 = vmul.f32 %v696, %v714
          %v716 = vmul.f32 %v697, %v714
          %s717 = sld [smem:[#allocation11]]
          %v718 = vstv %s717
          %v719 = vmul.f32 %v715, %v718
          %v720 = vmul.f32 %v716, %v718
          %s721 = sld [smem:[#allocation12]]
          %v722 = vstv %s721
          %v723 = vadd.f32 %v719, %v722
          %v724 = vadd.f32 %v720, %v722
          %725 = vst [vmem:[#allocation2] sm:$0xff] %v723
          %726 = vst [vmem:[#allocation2 + $0x8] sm:$0xff] %v724
          %v727 = vand.u32 2147483647, %v402
          %v728 = vand.u32 2147483647, %v404
          %v729 = vand.u32 2147483647, %v406
          %v730 = vand.u32 2147483647, %v408
          %v731 = vand.u32 2147483647, %v410
          %v732 = vand.u32 2147483647, %v412
          %v733 = vand.u32 2147483647, %v414
          %v734 = vand.u32 2147483647, %v416
          %743 = vst [vmem:[#allocation1] ss:$9 sm:$0xff] %v727
          %s744 = scalar_lea.vmem [#allocation1], 1
          %745 = vst [vmem:[%s744] ss:$9 sm:$0xff] %v728
          %s746 = scalar_lea.vmem [#allocation1], 2
          %747 = vst [vmem:[%s746] ss:$9 sm:$0xff] %v729
          %s748 = scalar_lea.vmem [#allocation1], 3
          %749 = vst [vmem:[%s748] ss:$9 sm:$0xff] %v730
          %s750 = scalar_lea.vmem [#allocation1], 4
          %751 = vst [vmem:[%s750] ss:$9 sm:$0xff] %v731
          %s752 = scalar_lea.vmem [#allocation1], 5
          %753 = vst [vmem:[%s752] ss:$9 sm:$0xff] %v732
          %s754 = scalar_lea.vmem [#allocation1], 6
          %755 = vst [vmem:[%s754] ss:$9 sm:$0xff] %v733
          %s756 = scalar_lea.vmem [#allocation1], 7
          %757 = vst [vmem:[%s756] ss:$9 sm:$0xff] %v734
          %v758 = vld [vmem:[#allocation1] sm:$0xff]
          %v759 = vld [vmem:[#allocation1 + $0x9] sm:$0xff]
          %762 = vrot.lane.b32.xlu0 %v758, 1
          %v763 = vpop.permute.xlu0 %762
          %764 = vrot.lane.b32.xlu0 %v759, 1
          %v765 = vpop.permute.xlu0 %764
          %v766 = vsel %vm520, %v763, %v765
          %v767 = vsel %vm520, %v765, %v763
          %v768 = vsel %vm523, %v767, 0.0
          %v769 = vsel %vm524, %v766, 0.0
          %770 = vst [vmem:[#allocation1] ss:$9 sm:$0xff] %v727
          %s771 = scalar_lea.vmem [#allocation1], 1
          %772 = vst [vmem:[%s771] ss:$9 sm:$0xff] %v728
          %s773 = scalar_lea.vmem [#allocation1], 2
          %774 = vst [vmem:[%s773] ss:$9 sm:$0xff] %v729
          %s775 = scalar_lea.vmem [#allocation1], 3
          %776 = vst [vmem:[%s775] ss:$9 sm:$0xff] %v730
          %s777 = scalar_lea.vmem [#allocation1], 4
          %778 = vst [vmem:[%s777] ss:$9 sm:$0xff] %v731
          %s779 = scalar_lea.vmem [#allocation1], 5
          %780 = vst [vmem:[%s779] ss:$9 sm:$0xff] %v732
          %s781 = scalar_lea.vmem [#allocation1], 6
          %782 = vst [vmem:[%s781] ss:$9 sm:$0xff] %v733
          %s783 = scalar_lea.vmem [#allocation1], 7
          %784 = vst [vmem:[%s783] ss:$9 sm:$0xff] %v734
          %v785 = vld [vmem:[#allocation1] sm:$0xff]
          %v786 = vld [vmem:[#allocation1 + $0x9] sm:$0xff]
          %789 = vrot.lane.b32.xlu0 %v785, 127
          %v790 = vpop.permute.xlu0 %789
          %791 = vrot.lane.b32.xlu0 %v786, 127
          %v792 = vpop.permute.xlu0 %791
          %v793 = vsel %vm564, %v790, %v792
          %v794 = vsel %vm564, %v792, %v790
          %v795 = vsel %vm567, %v793, 0.0
          %v796 = vsel %vm568, %v794, 0.0
          %797 = vst [vmem:[#allocation1] ss:$9 sm:$0xff] %v727
          %s798 = scalar_lea.vmem [#allocation1], 1
          %799 = vst [vmem:[%s798] ss:$9 sm:$0xff] %v728
          %s800 = scalar_lea.vmem [#allocation1], 2
          %801 = vst [vmem:[%s800] ss:$9 sm:$0xff] %v729
          %s802 = scalar_lea.vmem [#allocation1], 3
          %803 = vst [vmem:[%s802] ss:$9 sm:$0xff] %v730
          %s804 = scalar_lea.vmem [#allocation1], 4
          %805 = vst [vmem:[%s804] ss:$9 sm:$0xff] %v731
          %s806 = scalar_lea.vmem [#allocation1], 5
          %807 = vst [vmem:[%s806] ss:$9 sm:$0xff] %v732
          %s808 = scalar_lea.vmem [#allocation1], 6
          %809 = vst [vmem:[%s808] ss:$9 sm:$0xff] %v733
          %s810 = scalar_lea.vmem [#allocation1], 7
          %811 = vst [vmem:[%s810] ss:$9 sm:$0xff] %v734
          %v812 = vld [vmem:[#allocation1] sm:$0xff]
          %v813 = vld [vmem:[#allocation1 + $0x9] sm:$0xff]
          %v816 = vmax.f32 %v768, %v812
          %v817 = vmax.f32 %v769, %v813
          %v818 = vmax.f32 %v816, %v795
          %v819 = vmax.f32 %v817, %v796
          %820 = vrot.lane.b32.xlu0 %v818, 1
          %v821 = vpop.permute.xlu0 %820
          %822 = vrot.lane.b32.xlu0 %v819, 1
          %v823 = vpop.permute.xlu0 %822
          %v824 = vsel %vm520, %v821, %v823
          %v825 = vsel %vm520, %v823, %v821
          %v826 = vsel %vm523, %v825, 0.0
          %v827 = vsel %vm524, %v824, 0.0
          %828 = vrot.lane.b32.xlu0 %v818, 127
          %v829 = vpop.permute.xlu0 %828
          %830 = vrot.lane.b32.xlu0 %v819, 127
          %v831 = vpop.permute.xlu0 %830
          %v832 = vsel %vm564, %v829, %v831
          %v833 = vsel %vm564, %v831, %v829
          %v834 = vsel %vm567, %v832, 0.0
          %v835 = vsel %vm568, %v833, 0.0
          %v836 = vadd.f32 %v826, %v818
          %v837 = vadd.f32 %v827, %v819
          %v838 = vadd.f32 %v836, %v834
          %v839 = vadd.f32 %v837, %v835
          %v840 = vmul.f32 %v838, 0.33333334
          %v841 = vmul.f32 %v839, 0.33333334
          %s842 = sld [smem:[#allocation8 + $0x80]]
          %843 = vrot.lane.b32.xlu0 %v840, 6
          %v844 = vpop.permute.xlu0 %843
          %845 = vrot.lane.b32.xlu0 %v841, 6
          %v846 = vpop.permute.xlu0 %845
          %vm847 = vcmp.lt.s32.totalorder %v418, 6
          %v848 = vsel %vm847, %v844, %v846
          %v849 = vsel %vm847, %v846, %v844
          %vm850 = vcmp.ge.s32.totalorder %v418, 6
          %vm851 = vcmp.ge.s32.totalorder %v419, 6
          %v852 = vsel %vm850, %v849, 0.0
          %v853 = vsel %vm851, %v848, 0.0
          %v854 = vstv %s842
          %v855 = vmul.f32 %v854, %v852
          %v856 = vmul.f32 %v854, %v853
          %s857 = sld [smem:[#allocation8 + $0x81]]
          %858 = vrot.lane.b32.xlu0 %v840, 4
          %v859 = vpop.permute.xlu0 %858
          %860 = vrot.lane.b32.xlu0 %v841, 4
          %v861 = vpop.permute.xlu0 %860
          %vm862 = vcmp.lt.s32.totalorder %v418, 4
          %v863 = vsel %vm862, %v859, %v861
          %v864 = vsel %vm862, %v861, %v859
          %vm865 = vcmp.ge.s32.totalorder %v418, 4
          %vm866 = vcmp.ge.s32.totalorder %v419, 4
          %v867 = vsel %vm865, %v864, 0.0
          %v868 = vsel %vm866, %v863, 0.0
          %v869 = vstv %s857
          %v870 = vmul.f32 %v869, %v867
          %v871 = vmul.f32 %v869, %v868
          %s872 = sld [smem:[#allocation8 + $0x82]]
          %873 = vrot.lane.b32.xlu0 %v840, 2
          %v874 = vpop.permute.xlu0 %873
          %875 = vrot.lane.b32.xlu0 %v841, 2
          %v876 = vpop.permute.xlu0 %875
          %v877 = vsel %vm486, %v874, %v876
          %v878 = vsel %vm486, %v876, %v874
          %v879 = vsel %vm489, %v878, 0.0
          %v880 = vsel %vm490, %v877, 0.0
          %v881 = vstv %s872
          %v882 = vmul.f32 %v881, %v879
          %v883 = vmul.f32 %v881, %v880
          %s884 = sld [smem:[#allocation8 + $0x83]]
          %v885 = vstv %s884
          %v886 = vmul.f32 %v885, %v840
          %v887 = vmul.f32 %v885, %v841
          %s888 = sld [smem:[#allocation8 + $0x84]]
          %889 = vrot.lane.b32.xlu0 %v840, 126
          %v890 = vpop.permute.xlu0 %889
          %891 = vrot.lane.b32.xlu0 %v841, 126
          %v892 = vpop.permute.xlu0 %891
          %v893 = vsel %vm598, %v890, %v892
          %v894 = vsel %vm598, %v892, %v890
          %v895 = vsel %vm601, %v893, 0.0
          %v896 = vsel %vm602, %v894, 0.0
          %v897 = vstv %s888
          %v898 = vmul.f32 %v897, %v895
          %v899 = vmul.f32 %v897, %v896
          %s900 = sld [smem:[#allocation8 + $0x85]]
          %901 = vrot.lane.b32.xlu0 %v840, 124
          %v902 = vpop.permute.xlu0 %901
          %903 = vrot.lane.b32.xlu0 %v841, 124
          %v904 = vpop.permute.xlu0 %903
          %vm905 = vcmp.lt.s32.totalorder %v418, 124
          %v906 = vsel %vm905, %v902, %v904
          %v907 = vsel %vm905, %v904, %v902
          %vm908 = vcmp.lt.s32.totalorder %v418, 252
          %vm909 = vcmp.lt.s32.totalorder %v419, 252
          %v910 = vsel %vm908, %v906, 0.0
          %v911 = vsel %vm909, %v907, 0.0
          %v912 = vstv %s900
          %v913 = vmul.f32 %v912, %v910
          %v914 = vmul.f32 %v912, %v911
          %s915 = sld [smem:[#allocation8 + $0x86]]
          %916 = vrot.lane.b32.xlu0 %v840, 122
          %v917 = vpop.permute.xlu0 %916
          %918 = vrot.lane.b32.xlu0 %v841, 122
          %v919 = vpop.permute.xlu0 %918
          %vm920 = vcmp.lt.s32.totalorder %v418, 122
          %v921 = vsel %vm920, %v917, %v919
          %v922 = vsel %vm920, %v919, %v917
          %vm923 = vcmp.lt.s32.totalorder %v418, 250
          %vm924 = vcmp.lt.s32.totalorder %v419, 250
          %v925 = vsel %vm923, %v921, 0.0
          %v926 = vsel %vm924, %v922, 0.0
          %v927 = vstv %s915
          %v928 = vmul.f32 %v927, %v925
          %v929 = vmul.f32 %v927, %v926
          %v930 = vadd.f32 %v855, %v870
          %v931 = vadd.f32 %v856, %v871
          %v932 = vadd.f32 %v882, %v886
          %v933 = vadd.f32 %v883, %v887
          %v934 = vadd.f32 %v898, %v913
          %v935 = vadd.f32 %v899, %v914
          %v936 = vadd.f32 %v930, %v932
          %v937 = vadd.f32 %v931, %v933
          %v938 = vadd.f32 %v934, %v928
          %v939 = vadd.f32 %v935, %v929
          %v940 = vadd.f32 %v936, %v938
          %v941 = vadd.f32 %v937, %v939
          %s942 = sld [smem:[#allocation9 + $0x1]]
          %v943 = vstv %s942
          %v944 = vadd.f32 %v940, %v943
          %v945 = vadd.f32 %v941, %v943
          %v946 = vadd.f32 %v944, %v945
          %947 = vadd.xlane.f32.xlu0 %v946
          %v948 = vpop.xlane.xlu0 %947
          %v949 = vmul.f32 %v948, %v694
          %v950 = vsub.f32 %v944, %v949
          %v951 = vsub.f32 %v945, %v949
          %v952 = vmul.f32 %v950, %v950
          %v953 = vmul.f32 %v951, %v951
          %v954 = vadd.f32 %v952, %v953
          %955 = vadd.xlane.f32.xlu0 %v954
          %v956 = vpop.xlane.xlu0 %955
          %v957 = vmul.f32 %v956, %v694
          %v958 = vadd.f32 %v957, 1e-05
          %v959 = vrsqrt.pop %v958
          %v960 = vmul.f32 %v959, %v958
          %v961 = vmul.f32 %v960, %v959
          %v962 = vmul.f32 0.5, %v961
          %v963 = vsub.f32 1.5, %v962
          %v964 = vmul.f32 %v959, %v963
          %vm965 = vweird.f32 %v958
          %vm966 = vweird.f32 %v959
          %vm967 = vmor %vm965, %vm966
          %v968 = vsel %vm967, %v959, %v964
          %v969 = vmul.f32 %v950, %v968
          %v970 = vmul.f32 %v951, %v968
          %s971 = sld [smem:[#allocation11 + $0x1]]
          %v972 = vstv %s971
          %v973 = vmul.f32 %v969, %v972
          %v974 = vmul.f32 %v970, %v972
          %s975 = sld [smem:[#allocation12 + $0x1]]
          %v976 = vstv %s975
          %v977 = vadd.f32 %v973, %v976
          %v978 = vadd.f32 %v974, %v976
          %s979 = scalar_lea.vmem [#allocation2], 16
          %980 = vst [vmem:[%s979] sm:$0xff] %v977
          %981 = vst [vmem:[%s979 + $0x8] sm:$0xff] %v978
          %982 = vst [vmem:[#allocation1] ss:$9 sm:$0xff] %v727
          %s983 = scalar_lea.vmem [#allocation1], 1
          %984 = vst [vmem:[%s983] ss:$9 sm:$0xff] %v728
          %s985 = scalar_lea.vmem [#allocation1], 2
          %986 = vst [vmem:[%s985] ss:$9 sm:$0xff] %v729
          %s987 = scalar_lea.vmem [#allocation1], 3
          %988 = vst [vmem:[%s987] ss:$9 sm:$0xff] %v730
          %s989 = scalar_lea.vmem [#allocation1], 4
          %990 = vst [vmem:[%s989] ss:$9 sm:$0xff] %v731
          %s991 = scalar_lea.vmem [#allocation1], 5
          %992 = vst [vmem:[%s991] ss:$9 sm:$0xff] %v732
          %s993 = scalar_lea.vmem [#allocation1], 6
          %994 = vst [vmem:[%s993] ss:$9 sm:$0xff] %v733
          %s995 = scalar_lea.vmem [#allocation1], 7
          %996 = vst [vmem:[%s995] ss:$9 sm:$0xff] %v734
          %v997 = vld [vmem:[#allocation1] sm:$0xff]
          %v998 = vld [vmem:[#allocation1 + $0x9] sm:$0xff]
          %1001 = vrot.lane.b32.xlu0 %v997, 2
          %v1002 = vpop.permute.xlu0 %1001
          %1003 = vrot.lane.b32.xlu0 %v998, 2
          %v1004 = vpop.permute.xlu0 %1003
          %v1005 = vsel %vm486, %v1002, %v1004
          %v1006 = vsel %vm486, %v1004, %v1002
          %v1007 = vsel %vm489, %v1006, 0.0
          %v1008 = vsel %vm490, %v1005, 0.0
          %1009 = vst [vmem:[#allocation1] ss:$9 sm:$0xff] %v727
          %s1010 = scalar_lea.vmem [#allocation1], 1
          %1011 = vst [vmem:[%s1010] ss:$9 sm:$0xff] %v728
          %s1012 = scalar_lea.vmem [#allocation1], 2
          %1013 = vst [vmem:[%s1012] ss:$9 sm:$0xff] %v729
          %s1014 = scalar_lea.vmem [#allocation1], 3
          %1015 = vst [vmem:[%s1014] ss:$9 sm:$0xff] %v730
          %s1016 = scalar_lea.vmem [#allocation1], 4
          %1017 = vst [vmem:[%s1016] ss:$9 sm:$0xff] %v731
          %s1018 = scalar_lea.vmem [#allocation1], 5
          %1019 = vst [vmem:[%s1018] ss:$9 sm:$0xff] %v732
          %s1020 = scalar_lea.vmem [#allocation1], 6
          %1021 = vst [vmem:[%s1020] ss:$9 sm:$0xff] %v733
          %s1022 = scalar_lea.vmem [#allocation1], 7
          %1023 = vst [vmem:[%s1022] ss:$9 sm:$0xff] %v734
          %v1024 = vld [vmem:[#allocation1] sm:$0xff]
          %v1025 = vld [vmem:[#allocation1 + $0x9] sm:$0xff]
          %1028 = vrot.lane.b32.xlu0 %v1024, 126
          %v1029 = vpop.permute.xlu0 %1028
          %1030 = vrot.lane.b32.xlu0 %v1025, 126
          %v1031 = vpop.permute.xlu0 %1030
          %v1032 = vsel %vm598, %v1029, %v1031
          %v1033 = vsel %vm598, %v1031, %v1029
          %v1034 = vsel %vm601, %v1032, 0.0
          %v1035 = vsel %vm602, %v1033, 0.0
          %v1036 = vmax.f32 %v1007, %v768
          %v1037 = vmax.f32 %v1008, %v769
          %v1040 = vrot.slane %v796, 7
          %vm1041 = vcmask 1040384
          %v1042 = vsel %vm1041, %v795, %v1040
          %vm1043 = vcmask 1041409
          %v1044 = vsel %vm1043, %v795, %v1040
          %v1045 = vrot.slane %v1044, 1
          %vm1046 = vcmask 1042434
          %v1047 = vsel %vm1046, %v795, %v1040
          %v1048 = vrot.slane %v1047, 2
          %vm1049 = vcmask 1043459
          %v1050 = vsel %vm1049, %v795, %v1040
          %v1051 = vrot.slane %v1050, 3
          %vm1052 = vcmask 1044484
          %v1053 = vsel %vm1052, %v795, %v1040
          %v1054 = vrot.slane %v1053, 4
          %vm1055 = vcmask 1045509
          %v1056 = vsel %vm1055, %v795, %v1040
          %v1057 = vrot.slane %v1056, 5
          %vm1058 = vcmask 1046534
          %v1059 = vsel %vm1058, %v795, %v1040
          %v1060 = vrot.slane %v1059, 6
          %vm1061 = vcmask 1046528
          %v1062 = vsel %vm1061, %v1040, %v795
          %v1063 = vrot.slane %v1062, 7
          %v1072 = vmax.f32 %v727, %v1042
          %v1073 = vmax.f32 %v728, %v1045
          %v1074 = vmax.f32 %v729, %v1048
          %v1075 = vmax.f32 %v730, %v1051
          %v1076 = vmax.f32 %v731, %v1054
          %v1077 = vmax.f32 %v732, %v1057
          %v1078 = vmax.f32 %v733, %v1060
          %v1079 = vmax.f32 %v734, %v1063
          %1088 = vst [vmem:[#allocation1] ss:$9 sm:$0xff] %v1072
          %s1089 = scalar_lea.vmem [#allocation1], 1
          %1090 = vst [vmem:[%s1089] ss:$9 sm:$0xff] %v1073
          %s1091 = scalar_lea.vmem [#allocation1], 2
          %1092 = vst [vmem:[%s1091] ss:$9 sm:$0xff] %v1074
          %s1093 = scalar_lea.vmem [#allocation1], 3
          %1094 = vst [vmem:[%s1093] ss:$9 sm:$0xff] %v1075
          %s1095 = scalar_lea.vmem [#allocation1], 4
          %1096 = vst [vmem:[%s1095] ss:$9 sm:$0xff] %v1076
          %s1097 = scalar_lea.vmem [#allocation1], 5
          %1098 = vst [vmem:[%s1097] ss:$9 sm:$0xff] %v1077
          %s1099 = scalar_lea.vmem [#allocation1], 6
          %1100 = vst [vmem:[%s1099] ss:$9 sm:$0xff] %v1078
          %s1101 = scalar_lea.vmem [#allocation1], 7
          %1102 = vst [vmem:[%s1101] ss:$9 sm:$0xff] %v1079
          %v1103 = vld [vmem:[#allocation1] sm:$0xff]
          %v1104 = vld [vmem:[#allocation1 + $0x9] sm:$0xff]
          %v1107 = vmax.f32 %v1036, %v1103
          %v1108 = vmax.f32 %v1037, %v1104
          %v1109 = vmax.f32 %v1107, %v1034
          %v1110 = vmax.f32 %v1108, %v1035
          %1111 = vrot.lane.b32.xlu0 %v1109, 2
          %v1112 = vpop.permute.xlu0 %1111
          %1113 = vrot.lane.b32.xlu0 %v1110, 2
          %v1114 = vpop.permute.xlu0 %1113
          %v1115 = vsel %vm486, %v1112, %v1114
          %v1116 = vsel %vm486, %v1114, %v1112
          %v1117 = vsel %vm489, %v1116, 0.0
          %v1118 = vsel %vm490, %v1115, 0.0
          %1119 = vrot.lane.b32.xlu0 %v1109, 1
          %v1120 = vpop.permute.xlu0 %1119
          %1121 = vrot.lane.b32.xlu0 %v1110, 1
          %v1122 = vpop.permute.xlu0 %1121
          %v1123 = vsel %vm520, %v1120, %v1122
          %v1124 = vsel %vm520, %v1122, %v1120
          %v1125 = vsel %vm523, %v1124, 0.0
          %v1126 = vsel %vm524, %v1123, 0.0
          %1127 = vrot.lane.b32.xlu0 %v1109, 127
          %v1128 = vpop.permute.xlu0 %1127
          %1129 = vrot.lane.b32.xlu0 %v1110, 127
          %v1130 = vpop.permute.xlu0 %1129
          %v1131 = vsel %vm564, %v1128, %v1130
          %v1132 = vsel %vm564, %v1130, %v1128
          %v1133 = vsel %vm567, %v1131, 0.0
          %v1134 = vsel %vm568, %v1132, 0.0
          %1135 = vrot.lane.b32.xlu0 %v1109, 126
          %v1136 = vpop.permute.xlu0 %1135
          %1137 = vrot.lane.b32.xlu0 %v1110, 126
          %v1138 = vpop.permute.xlu0 %1137
          %v1139 = vsel %vm598, %v1136, %v1138
          %v1140 = vsel %vm598, %v1138, %v1136
          %v1141 = vsel %vm601, %v1139, 0.0
          %v1142 = vsel %vm602, %v1140, 0.0
          %v1143 = vadd.f32 %v1117, %v1125
          %v1144 = vadd.f32 %v1118, %v1126
          %v1145 = vadd.f32 %v1109, %v1133
          %v1146 = vadd.f32 %v1110, %v1134
          %v1147 = vadd.f32 %v1143, %v1145
          %v1148 = vadd.f32 %v1144, %v1146
          %v1149 = vadd.f32 %v1147, %v1141
          %v1150 = vadd.f32 %v1148, %v1142
          %v1151 = vmul.f32 %v1149, 0.2
          %v1152 = vmul.f32 %v1150, 0.2
          %s1153 = sld [smem:[#allocation8 + $0x100]]
          %1154 = vrot.lane.b32.xlu0 %v1151, 9
          %v1155 = vpop.permute.xlu0 %1154
          %1156 = vrot.lane.b32.xlu0 %v1152, 9
          %v1157 = vpop.permute.xlu0 %1156
          %vm1158 = vcmp.lt.s32.totalorder %v418, 9
          %v1159 = vsel %vm1158, %v1155, %v1157
          %v1160 = vsel %vm1158, %v1157, %v1155
          %vm1161 = vcmp.ge.s32.totalorder %v418, 9
          %vm1162 = vcmp.ge.s32.totalorder %v419, 9
          %v1163 = vsel %vm1161, %v1160, 0.0
          %v1164 = vsel %vm1162, %v1159, 0.0
          %v1165 = vstv %s1153
          %v1166 = vmul.f32 %v1165, %v1163
          %v1167 = vmul.f32 %v1165, %v1164
          %s1168 = sld [smem:[#allocation8 + $0x101]]
          %1169 = vrot.lane.b32.xlu0 %v1151, 6
          %v1170 = vpop.permute.xlu0 %1169
          %1171 = vrot.lane.b32.xlu0 %v1152, 6
          %v1172 = vpop.permute.xlu0 %1171
          %v1173 = vsel %vm847, %v1170, %v1172
          %v1174 = vsel %vm847, %v1172, %v1170
          %v1175 = vsel %vm850, %v1174, 0.0
          %v1176 = vsel %vm851, %v1173, 0.0
          %v1177 = vstv %s1168
          %v1178 = vmul.f32 %v1177, %v1175
          %v1179 = vmul.f32 %v1177, %v1176
          %s1180 = sld [smem:[#allocation8 + $0x102]]
          %1181 = vrot.lane.b32.xlu0 %v1151, 3
          %v1182 = vpop.permute.xlu0 %1181
          %1183 = vrot.lane.b32.xlu0 %v1152, 3
          %v1184 = vpop.permute.xlu0 %1183
          %v1185 = vsel %vm452, %v1182, %v1184
          %v1186 = vsel %vm452, %v1184, %v1182
          %v1187 = vsel %vm455, %v1186, 0.0
          %v1188 = vsel %vm456, %v1185, 0.0
          %v1189 = vstv %s1180
          %v1190 = vmul.f32 %v1189, %v1187
          %v1191 = vmul.f32 %v1189, %v1188
          %s1192 = sld [smem:[#allocation8 + $0x103]]
          %v1193 = vstv %s1192
          %v1194 = vmul.f32 %v1193, %v1151
          %v1195 = vmul.f32 %v1193, %v1152
          %s1196 = sld [smem:[#allocation8 + $0x104]]
          %1197 = vrot.lane.b32.xlu0 %v1151, 125
          %v1198 = vpop.permute.xlu0 %1197
          %1199 = vrot.lane.b32.xlu0 %v1152, 125
          %v1200 = vpop.permute.xlu0 %1199
          %v1201 = vsel %vm632, %v1198, %v1200
          %v1202 = vsel %vm632, %v1200, %v1198
          %v1203 = vsel %vm635, %v1201, 0.0
          %v1204 = vsel %vm636, %v1202, 0.0
          %v1205 = vstv %s1196
          %v1206 = vmul.f32 %v1205, %v1203
          %v1207 = vmul.f32 %v1205, %v1204
          %s1208 = sld [smem:[#allocation8 + $0x105]]
          %1209 = vrot.lane.b32.xlu0 %v1151, 122
          %v1210 = vpop.permute.xlu0 %1209
          %1211 = vrot.lane.b32.xlu0 %v1152, 122
          %v1212 = vpop.permute.xlu0 %1211
          %v1213 = vsel %vm920, %v1210, %v1212
          %v1214 = vsel %vm920, %v1212, %v1210
          %v1215 = vsel %vm923, %v1213, 0.0
          %v1216 = vsel %vm924, %v1214, 0.0
          %v1217 = vstv %s1208
          %v1218 = vmul.f32 %v1217, %v1215
          %v1219 = vmul.f32 %v1217, %v1216
          %s1220 = sld [smem:[#allocation8 + $0x106]]
          %1221 = vrot.lane.b32.xlu0 %v1151, 119
          %v1222 = vpop.permute.xlu0 %1221
          %1223 = vrot.lane.b32.xlu0 %v1152, 119
          %v1224 = vpop.permute.xlu0 %1223
          %vm1225 = vcmp.lt.s32.totalorder %v418, 119
          %v1226 = vsel %vm1225, %v1222, %v1224
          %v1227 = vsel %vm1225, %v1224, %v1222
          %vm1228 = vcmp.lt.s32.totalorder %v418, 247
          %vm1229 = vcmp.lt.s32.totalorder %v419, 247
          %v1230 = vsel %vm1228, %v1226, 0.0
          %v1231 = vsel %vm1229, %v1227, 0.0
          %v1232 = vstv %s1220
          %v1233 = vmul.f32 %v1232, %v1230
          %v1234 = vmul.f32 %v1232, %v1231
          %v1235 = vadd.f32 %v1166, %v1178
          %v1236 = vadd.f32 %v1167, %v1179
          %v1237 = vadd.f32 %v1190, %v1194
          %v1238 = vadd.f32 %v1191, %v1195
          %v1239 = vadd.f32 %v1206, %v1218
          %v1240 = vadd.f32 %v1207, %v1219
          %v1241 = vadd.f32 %v1235, %v1237
          %v1242 = vadd.f32 %v1236, %v1238
          %v1243 = vadd.f32 %v1239, %v1233
          %v1244 = vadd.f32 %v1240, %v1234
          %v1245 = vadd.f32 %v1241, %v1243
          %v1246 = vadd.f32 %v1242, %v1244
          %s1247 = sld [smem:[#allocation9 + $0x2]]
          %v1248 = vstv %s1247
          %v1249 = vadd.f32 %v1245, %v1248
          %v1250 = vadd.f32 %v1246, %v1248
          %v1251 = vadd.f32 %v1249, %v1250
          %1252 = vadd.xlane.f32.xlu0 %v1251
          %v1253 = vpop.xlane.xlu0 %1252
          %v1254 = vmul.f32 %v1253, %v694
          %v1255 = vsub.f32 %v1249, %v1254
          %v1256 = vsub.f32 %v1250, %v1254
          %v1257 = vmul.f32 %v1255, %v1255
          %v1258 = vmul.f32 %v1256, %v1256
          %v1259 = vadd.f32 %v1257, %v1258
          %1260 = vadd.xlane.f32.xlu0 %v1259
          %v1261 = vpop.xlane.xlu0 %1260
          %v1262 = vmul.f32 %v1261, %v694
          %v1263 = vadd.f32 %v1262, 1e-05
          %v1264 = vrsqrt.pop %v1263
          %v1265 = vmul.f32 %v1264, %v1263
          %v1266 = vmul.f32 %v1265, %v1264
          %v1267 = vmul.f32 0.5, %v1266
          %v1268 = vsub.f32 1.5, %v1267
          %v1269 = vmul.f32 %v1264, %v1268
          %vm1270 = vweird.f32 %v1263
          %vm1271 = vweird.f32 %v1264
          %vm1272 = vmor %vm1270, %vm1271
          %v1273 = vsel %vm1272, %v1264, %v1269
          %v1274 = vmul.f32 %v1255, %v1273
          %v1275 = vmul.f32 %v1256, %v1273
          %s1276 = sld [smem:[#allocation11 + $0x2]]
          %v1277 = vstv %s1276
          %v1278 = vmul.f32 %v1274, %v1277
          %v1279 = vmul.f32 %v1275, %v1277
          %s1280 = sld [smem:[#allocation12 + $0x2]]
          %v1281 = vstv %s1280
          %v1282 = vadd.f32 %v1278, %v1281
          %v1283 = vadd.f32 %v1279, %v1281
          %s1284 = scalar_lea.vmem [#allocation2], 32
          %1285 = vst [vmem:[%s1284] sm:$0xff] %v1282
          %1286 = vst [vmem:[%s1284 + $0x8] sm:$0xff] %v1283
          %1287 = vst [vmem:[#allocation1] ss:$9 sm:$0xff] %v727
          %s1288 = scalar_lea.vmem [#allocation1], 1
          %1289 = vst [vmem:[%s1288] ss:$9 sm:$0xff] %v728
          %s1290 = scalar_lea.vmem [#allocation1], 2
          %1291 = vst [vmem:[%s1290] ss:$9 sm:$0xff] %v729
          %s1292 = scalar_lea.vmem [#allocation1], 3
          %1293 = vst [vmem:[%s1292] ss:$9 sm:$0xff] %v730
          %s1294 = scalar_lea.vmem [#allocation1], 4
          %1295 = vst [vmem:[%s1294] ss:$9 sm:$0xff] %v731
          %s1296 = scalar_lea.vmem [#allocation1], 5
          %1297 = vst [vmem:[%s1296] ss:$9 sm:$0xff] %v732
          %s1298 = scalar_lea.vmem [#allocation1], 6
          %1299 = vst [vmem:[%s1298] ss:$9 sm:$0xff] %v733
          %s1300 = scalar_lea.vmem [#allocation1], 7
          %1301 = vst [vmem:[%s1300] ss:$9 sm:$0xff] %v734
          %v1302 = vld [vmem:[#allocation1] sm:$0xff]
          %v1303 = vld [vmem:[#allocation1 + $0x9] sm:$0xff]
          %1306 = vrot.lane.b32.xlu0 %v1302, 4
          %v1307 = vpop.permute.xlu0 %1306
          %1308 = vrot.lane.b32.xlu0 %v1303, 4
          %v1309 = vpop.permute.xlu0 %1308
          %v1310 = vsel %vm862, %v1307, %v1309
          %v1311 = vsel %vm862, %v1309, %v1307
          %v1312 = vsel %vm865, %v1311, 0.0
          %v1313 = vsel %vm866, %v1310, 0.0
          %1314 = vst [vmem:[#allocation1] ss:$9 sm:$0xff] %v727
          %s1315 = scalar_lea.vmem [#allocation1], 1
          %1316 = vst [vmem:[%s1315] ss:$9 sm:$0xff] %v728
          %s1317 = scalar_lea.vmem [#allocation1], 2
          %1318 = vst [vmem:[%s1317] ss:$9 sm:$0xff] %v729
          %s1319 = scalar_lea.vmem [#allocation1], 3
          %1320 = vst [vmem:[%s1319] ss:$9 sm:$0xff] %v730
          %s1321 = scalar_lea.vmem [#allocation1], 4
          %1322 = vst [vmem:[%s1321] ss:$9 sm:$0xff] %v731
          %s1323 = scalar_lea.vmem [#allocation1], 5
          %1324 = vst [vmem:[%s1323] ss:$9 sm:$0xff] %v732
          %s1325 = scalar_lea.vmem [#allocation1], 6
          %1326 = vst [vmem:[%s1325] ss:$9 sm:$0xff] %v733
          %s1327 = scalar_lea.vmem [#allocation1], 7
          %1328 = vst [vmem:[%s1327] ss:$9 sm:$0xff] %v734
          %v1329 = vld [vmem:[#allocation1] sm:$0xff]
          %v1330 = vld [vmem:[#allocation1 + $0x9] sm:$0xff]
          %1333 = vrot.lane.b32.xlu0 %v1329, 3
          %v1334 = vpop.permute.xlu0 %1333
          %1335 = vrot.lane.b32.xlu0 %v1330, 3
          %v1336 = vpop.permute.xlu0 %1335
          %v1337 = vsel %vm452, %v1334, %v1336
          %v1338 = vsel %vm452, %v1336, %v1334
          %v1339 = vsel %vm455, %v1338, 0.0
          %v1340 = vsel %vm456, %v1337, 0.0
          %1341 = vst [vmem:[#allocation1] ss:$9 sm:$0xff] %v727
          %s1342 = scalar_lea.vmem [#allocation1], 1
          %1343 = vst [vmem:[%s1342] ss:$9 sm:$0xff] %v728
          %s1344 = scalar_lea.vmem [#allocation1], 2
          %1345 = vst [vmem:[%s1344] ss:$9 sm:$0xff] %v729
          %s1346 = scalar_lea.vmem [#allocation1], 3
          %1347 = vst [vmem:[%s1346] ss:$9 sm:$0xff] %v730
          %s1348 = scalar_lea.vmem [#allocation1], 4
          %1349 = vst [vmem:[%s1348] ss:$9 sm:$0xff] %v731
          %s1350 = scalar_lea.vmem [#allocation1], 5
          %1351 = vst [vmem:[%s1350] ss:$9 sm:$0xff] %v732
          %s1352 = scalar_lea.vmem [#allocation1], 6
          %1353 = vst [vmem:[%s1352] ss:$9 sm:$0xff] %v733
          %s1354 = scalar_lea.vmem [#allocation1], 7
          %1355 = vst [vmem:[%s1354] ss:$9 sm:$0xff] %v734
          %v1356 = vld [vmem:[#allocation1] sm:$0xff]
          %v1357 = vld [vmem:[#allocation1 + $0x9] sm:$0xff]
          %1360 = vrot.lane.b32.xlu0 %v1356, 125
          %v1361 = vpop.permute.xlu0 %1360
          %1362 = vrot.lane.b32.xlu0 %v1357, 125
          %v1363 = vpop.permute.xlu0 %1362
          %v1364 = vsel %vm632, %v1361, %v1363
          %v1365 = vsel %vm632, %v1363, %v1361
          %v1366 = vsel %vm635, %v1364, 0.0
          %v1367 = vsel %vm636, %v1365, 0.0
          %1368 = vst [vmem:[#allocation1] ss:$9 sm:$0xff] %v727
          %s1369 = scalar_lea.vmem [#allocation1], 1
          %1370 = vst [vmem:[%s1369] ss:$9 sm:$0xff] %v728
          %s1371 = scalar_lea.vmem [#allocation1], 2
          %1372 = vst [vmem:[%s1371] ss:$9 sm:$0xff] %v729
          %s1373 = scalar_lea.vmem [#allocation1], 3
          %1374 = vst [vmem:[%s1373] ss:$9 sm:$0xff] %v730
          %s1375 = scalar_lea.vmem [#allocation1], 4
          %1376 = vst [vmem:[%s1375] ss:$9 sm:$0xff] %v731
          %s1377 = scalar_lea.vmem [#allocation1], 5
          %1378 = vst [vmem:[%s1377] ss:$9 sm:$0xff] %v732
          %s1379 = scalar_lea.vmem [#allocation1], 6
          %1380 = vst [vmem:[%s1379] ss:$9 sm:$0xff] %v733
          %s1381 = scalar_lea.vmem [#allocation1], 7
          %1382 = vst [vmem:[%s1381] ss:$9 sm:$0xff] %v734
          %v1383 = vld [vmem:[#allocation1] sm:$0xff]
          %v1384 = vld [vmem:[#allocation1 + $0x9] sm:$0xff]
          %1387 = vrot.lane.b32.xlu0 %v1383, 124
          %v1388 = vpop.permute.xlu0 %1387
          %1389 = vrot.lane.b32.xlu0 %v1384, 124
          %v1390 = vpop.permute.xlu0 %1389
          %v1391 = vsel %vm905, %v1388, %v1390
          %v1392 = vsel %vm905, %v1390, %v1388
          %v1393 = vsel %vm908, %v1391, 0.0
          %v1394 = vsel %vm909, %v1392, 0.0
          %v1395 = vmax.f32 %v1312, %v1339
          %v1396 = vmax.f32 %v1313, %v1340
          %v1397 = vmax.f32 %v1034, %v1366
          %v1398 = vmax.f32 %v1035, %v1367
          %v1399 = vmax.f32 %v1395, %v1036
          %v1400 = vmax.f32 %v1396, %v1037
          %v1403 = vrot.slane %v1398, 7
          %v1404 = vsel %vm1041, %v1397, %v1403
          %v1405 = vsel %vm1043, %v1397, %v1403
          %v1406 = vrot.slane %v1405, 1
          %v1407 = vsel %vm1046, %v1397, %v1403
          %v1408 = vrot.slane %v1407, 2
          %v1409 = vsel %vm1049, %v1397, %v1403
          %v1410 = vrot.slane %v1409, 3
          %v1411 = vsel %vm1052, %v1397, %v1403
          %v1412 = vrot.slane %v1411, 4
          %v1413 = vsel %vm1055, %v1397, %v1403
          %v1414 = vrot.slane %v1413, 5
          %v1415 = vsel %vm1058, %v1397, %v1403
          %v1416 = vrot.slane %v1415, 6
          %v1417 = vsel %vm1061, %v1403, %v1397
          %v1418 = vrot.slane %v1417, 7
          %v1427 = vmax.f32 %v1072, %v1404
          %v1428 = vmax.f32 %v1073, %v1406
          %v1429 = vmax.f32 %v1074, %v1408
          %v1430 = vmax.f32 %v1075, %v1410
          %v1431 = vmax.f32 %v1076, %v1412
          %v1432 = vmax.f32 %v1077, %v1414
          %v1433 = vmax.f32 %v1078, %v1416
          %v1434 = vmax.f32 %v1079, %v1418
          %1443 = vst [vmem:[#allocation1] ss:$9 sm:$0xff] %v1427
          %s1444 = scalar_lea.vmem [#allocation1], 1
          %1445 = vst [vmem:[%s1444] ss:$9 sm:$0xff] %v1428
          %s1446 = scalar_lea.vmem [#allocation1], 2
          %1447 = vst [vmem:[%s1446] ss:$9 sm:$0xff] %v1429
          %s1448 = scalar_lea.vmem [#allocation1], 3
          %1449 = vst [vmem:[%s1448] ss:$9 sm:$0xff] %v1430
          %s1450 = scalar_lea.vmem [#allocation1], 4
          %1451 = vst [vmem:[%s1450] ss:$9 sm:$0xff] %v1431
          %s1452 = scalar_lea.vmem [#allocation1], 5
          %1453 = vst [vmem:[%s1452] ss:$9 sm:$0xff] %v1432
          %s1454 = scalar_lea.vmem [#allocation1], 6
          %1455 = vst [vmem:[%s1454] ss:$9 sm:$0xff] %v1433
          %s1456 = scalar_lea.vmem [#allocation1], 7
          %1457 = vst [vmem:[%s1456] ss:$9 sm:$0xff] %v1434
          %v1458 = vld [vmem:[#allocation1] sm:$0xff]
          %v1459 = vld [vmem:[#allocation1 + $0x9] sm:$0xff]
          %v1462 = vmax.f32 %v1399, %v1458
          %v1463 = vmax.f32 %v1400, %v1459
          %v1464 = vmax.f32 %v1462, %v1393
          %v1465 = vmax.f32 %v1463, %v1394
          %1466 = vrot.lane.b32.xlu0 %v1464, 4
          %v1467 = vpop.permute.xlu0 %1466
          %1468 = vrot.lane.b32.xlu0 %v1465, 4
          %v1469 = vpop.permute.xlu0 %1468
          %v1470 = vsel %vm862, %v1467, %v1469
          %v1471 = vsel %vm862, %v1469, %v1467
          %v1472 = vsel %vm865, %v1471, 0.0
          %v1473 = vsel %vm866, %v1470, 0.0
          %1474 = vrot.lane.b32.xlu0 %v1464, 3
          %v1475 = vpop.permute.xlu0 %1474
          %1476 = vrot.lane.b32.xlu0 %v1465, 3
          %v1477 = vpop.permute.xlu0 %1476
          %v1478 = vsel %vm452, %v1475, %v1477
          %v1479 = vsel %vm452, %v1477, %v1475
          %v1480 = vsel %vm455, %v1479, 0.0
          %v1481 = vsel %vm456, %v1478, 0.0
          %1482 = vrot.lane.b32.xlu0 %v1464, 2
          %v1483 = vpop.permute.xlu0 %1482
          %1484 = vrot.lane.b32.xlu0 %v1465, 2
          %v1485 = vpop.permute.xlu0 %1484
          %v1486 = vsel %vm486, %v1483, %v1485
          %v1487 = vsel %vm486, %v1485, %v1483
          %v1488 = vsel %vm489, %v1487, 0.0
          %v1489 = vsel %vm490, %v1486, 0.0
          %1490 = vrot.lane.b32.xlu0 %v1464, 1
          %v1491 = vpop.permute.xlu0 %1490
          %1492 = vrot.lane.b32.xlu0 %v1465, 1
          %v1493 = vpop.permute.xlu0 %1492
          %v1494 = vsel %vm520, %v1491, %v1493
          %v1495 = vsel %vm520, %v1493, %v1491
          %v1496 = vsel %vm523, %v1495, 0.0
          %v1497 = vsel %vm524, %v1494, 0.0
          %1498 = vrot.lane.b32.xlu0 %v1464, 127
          %v1499 = vpop.permute.xlu0 %1498
          %1500 = vrot.lane.b32.xlu0 %v1465, 127
          %v1501 = vpop.permute.xlu0 %1500
          %v1502 = vsel %vm564, %v1499, %v1501
          %v1503 = vsel %vm564, %v1501, %v1499
          %v1504 = vsel %vm567, %v1502, 0.0
          %v1505 = vsel %vm568, %v1503, 0.0
          %1506 = vrot.lane.b32.xlu0 %v1464, 126
          %v1507 = vpop.permute.xlu0 %1506
          %1508 = vrot.lane.b32.xlu0 %v1465, 126
          %v1509 = vpop.permute.xlu0 %1508
          %v1510 = vsel %vm598, %v1507, %v1509
          %v1511 = vsel %vm598, %v1509, %v1507
          %v1512 = vsel %vm601, %v1510, 0.0
          %v1513 = vsel %vm602, %v1511, 0.0
          %1514 = vrot.lane.b32.xlu0 %v1464, 125
          %v1515 = vpop.permute.xlu0 %1514
          %1516 = vrot.lane.b32.xlu0 %v1465, 125
          %v1517 = vpop.permute.xlu0 %1516
          %v1518 = vsel %vm632, %v1515, %v1517
          %v1519 = vsel %vm632, %v1517, %v1515
          %v1520 = vsel %vm635, %v1518, 0.0
          %v1521 = vsel %vm636, %v1519, 0.0
          %1522 = vrot.lane.b32.xlu0 %v1464, 124
          %v1523 = vpop.permute.xlu0 %1522
          %1524 = vrot.lane.b32.xlu0 %v1465, 124
          %v1525 = vpop.permute.xlu0 %1524
          %v1526 = vsel %vm905, %v1523, %v1525
          %v1527 = vsel %vm905, %v1525, %v1523
          %v1528 = vsel %vm908, %v1526, 0.0
          %v1529 = vsel %vm909, %v1527, 0.0
          %v1530 = vadd.f32 %v1472, %v1480
          %v1531 = vadd.f32 %v1473, %v1481
          %v1532 = vadd.f32 %v1488, %v1496
          %v1533 = vadd.f32 %v1489, %v1497
          %v1534 = vadd.f32 %v1464, %v1504
          %v1535 = vadd.f32 %v1465, %v1505
          %v1536 = vadd.f32 %v1512, %v1520
          %v1537 = vadd.f32 %v1513, %v1521
          %v1538 = vadd.f32 %v1530, %v1532
          %v1539 = vadd.f32 %v1531, %v1533
          %v1540 = vadd.f32 %v1534, %v1536
          %v1541 = vadd.f32 %v1535, %v1537
          %v1542 = vadd.f32 %v1538, %v1540
          %v1543 = vadd.f32 %v1539, %v1541
          %v1544 = vadd.f32 %v1542, %v1528
          %v1545 = vadd.f32 %v1543, %v1529
          %v1546 = vmul.f32 %v1544, 0.11111111
          %v1547 = vmul.f32 %v1545, 0.11111111
          %s1548 = sld [smem:[#allocation8 + $0x180]]
          %1549 = vrot.lane.b32.xlu0 %v1546, 15
          %v1550 = vpop.permute.xlu0 %1549
          %1551 = vrot.lane.b32.xlu0 %v1547, 15
          %v1552 = vpop.permute.xlu0 %1551
          %vm1553 = vcmp.lt.s32.totalorder %v418, 15
          %v1554 = vsel %vm1553, %v1550, %v1552
          %v1555 = vsel %vm1553, %v1552, %v1550
          %vm1556 = vcmp.ge.s32.totalorder %v418, 15
          %vm1557 = vcmp.ge.s32.totalorder %v419, 15
          %v1558 = vsel %vm1556, %v1555, 0.0
          %v1559 = vsel %vm1557, %v1554, 0.0
          %v1560 = vstv %s1548
          %v1561 = vmul.f32 %v1560, %v1558
          %v1562 = vmul.f32 %v1560, %v1559
          %s1563 = sld [smem:[#allocation8 + $0x181]]
          %1564 = vrot.lane.b32.xlu0 %v1546, 10
          %v1565 = vpop.permute.xlu0 %1564
          %1566 = vrot.lane.b32.xlu0 %v1547, 10
          %v1567 = vpop.permute.xlu0 %1566
          %vm1568 = vcmp.lt.s32.totalorder %v418, 10
          %v1569 = vsel %vm1568, %v1565, %v1567
          %v1570 = vsel %vm1568, %v1567, %v1565
          %vm1571 = vcmp.ge.s32.totalorder %v418, 10
          %vm1572 = vcmp.ge.s32.totalorder %v419, 10
          %v1573 = vsel %vm1571, %v1570, 0.0
          %v1574 = vsel %vm1572, %v1569, 0.0
          %v1575 = vstv %s1563
          %v1576 = vmul.f32 %v1575, %v1573
          %v1577 = vmul.f32 %v1575, %v1574
          %s1578 = sld [smem:[#allocation8 + $0x182]]
          %1579 = vrot.lane.b32.xlu0 %v1546, 5
          %v1580 = vpop.permute.xlu0 %1579
          %1581 = vrot.lane.b32.xlu0 %v1547, 5
          %v1582 = vpop.permute.xlu0 %1581
          %vm1583 = vcmp.lt.s32.totalorder %v418, 5
          %v1584 = vsel %vm1583, %v1580, %v1582
          %v1585 = vsel %vm1583, %v1582, %v1580
          %vm1586 = vcmp.ge.s32.totalorder %v418, 5
          %vm1587 = vcmp.ge.s32.totalorder %v419, 5
          %v1588 = vsel %vm1586, %v1585, 0.0
          %v1589 = vsel %vm1587, %v1584, 0.0
          %v1590 = vstv %s1578
          %v1591 = vmul.f32 %v1590, %v1588
          %v1592 = vmul.f32 %v1590, %v1589
          %s1593 = sld [smem:[#allocation8 + $0x183]]
          %v1594 = vstv %s1593
          %v1595 = vmul.f32 %v1594, %v1546
          %v1596 = vmul.f32 %v1594, %v1547
          %s1597 = sld [smem:[#allocation8 + $0x184]]
          %1598 = vrot.lane.b32.xlu0 %v1546, 123
          %v1599 = vpop.permute.xlu0 %1598
          %1600 = vrot.lane.b32.xlu0 %v1547, 123
          %v1601 = vpop.permute.xlu0 %1600
          %vm1602 = vcmp.lt.s32.totalorder %v418, 123
          %v1603 = vsel %vm1602, %v1599, %v1601
          %v1604 = vsel %vm1602, %v1601, %v1599
          %vm1605 = vcmp.lt.s32.totalorder %v418, 251
          %vm1606 = vcmp.lt.s32.totalorder %v419, 251
          %v1607 = vsel %vm1605, %v1603, 0.0
          %v1608 = vsel %vm1606, %v1604, 0.0
          %v1609 = vstv %s1597
          %v1610 = vmul.f32 %v1609, %v1607
          %v1611 = vmul.f32 %v1609, %v1608
          %s1612 = sld [smem:[#allocation8 + $0x185]]
          %1613 = vrot.lane.b32.xlu0 %v1546, 118
          %v1614 = vpop.permute.xlu0 %1613
          %1615 = vrot.lane.b32.xlu0 %v1547, 118
          %v1616 = vpop.permute.xlu0 %1615
          %vm1617 = vcmp.lt.s32.totalorder %v418, 118
          %v1618 = vsel %vm1617, %v1614, %v1616
          %v1619 = vsel %vm1617, %v1616, %v1614
          %vm1620 = vcmp.lt.s32.totalorder %v418, 246
          %vm1621 = vcmp.lt.s32.totalorder %v419, 246
          %v1622 = vsel %vm1620, %v1618, 0.0
          %v1623 = vsel %vm1621, %v1619, 0.0
          %v1624 = vstv %s1612
          %v1625 = vmul.f32 %v1624, %v1622
          %v1626 = vmul.f32 %v1624, %v1623
          %s1627 = sld [smem:[#allocation8 + $0x186]]
          %1628 = vrot.lane.b32.xlu0 %v1546, 113
          %v1629 = vpop.permute.xlu0 %1628
          %1630 = vrot.lane.b32.xlu0 %v1547, 113
          %v1631 = vpop.permute.xlu0 %1630
          %vm1632 = vcmp.lt.s32.totalorder %v418, 113
          %v1633 = vsel %vm1632, %v1629, %v1631
          %v1634 = vsel %vm1632, %v1631, %v1629
          %vm1635 = vcmp.lt.s32.totalorder %v418, 241
          %vm1636 = vcmp.lt.s32.totalorder %v419, 241
          %v1637 = vsel %vm1635, %v1633, 0.0
          %v1638 = vsel %vm1636, %v1634, 0.0
          %v1639 = vstv %s1627
          %v1640 = vmul.f32 %v1639, %v1637
          %v1641 = vmul.f32 %v1639, %v1638
          %v1642 = vadd.f32 %v1561, %v1576
          %v1643 = vadd.f32 %v1562, %v1577
          %v1644 = vadd.f32 %v1591, %v1595
          %v1645 = vadd.f32 %v1592, %v1596
          %v1646 = vadd.f32 %v1610, %v1625
          %v1647 = vadd.f32 %v1611, %v1626
          %v1648 = vadd.f32 %v1642, %v1644
          %v1649 = vadd.f32 %v1643, %v1645
          %v1650 = vadd.f32 %v1646, %v1640
          %v1651 = vadd.f32 %v1647, %v1641
          %v1652 = vadd.f32 %v1648, %v1650
          %v1653 = vadd.f32 %v1649, %v1651
          %s1654 = sld [smem:[#allocation9 + $0x3]]
          %v1655 = vstv %s1654
          %v1656 = vadd.f32 %v1652, %v1655
          %v1657 = vadd.f32 %v1653, %v1655
          %v1658 = vadd.f32 %v1656, %v1657
          %1659 = vadd.xlane.f32.xlu0 %v1658
          %v1660 = vpop.xlane.xlu0 %1659
          %v1661 = vmul.f32 %v1660, %v694
          %v1662 = vsub.f32 %v1656, %v1661
          %v1663 = vsub.f32 %v1657, %v1661
          %v1664 = vmul.f32 %v1662, %v1662
          %v1665 = vmul.f32 %v1663, %v1663
          %v1666 = vadd.f32 %v1664, %v1665
          %1667 = vadd.xlane.f32.xlu0 %v1666
          %v1668 = vpop.xlane.xlu0 %1667
          %v1669 = vmul.f32 %v1668, %v694
          %v1670 = vadd.f32 %v1669, 1e-05
          %v1671 = vrsqrt.pop %v1670
          %v1672 = vmul.f32 %v1671, %v1670
          %v1673 = vmul.f32 %v1672, %v1671
          %v1674 = vmul.f32 0.5, %v1673
          %v1675 = vsub.f32 1.5, %v1674
          %v1676 = vmul.f32 %v1671, %v1675
          %vm1677 = vweird.f32 %v1670
          %vm1678 = vweird.f32 %v1671
          %vm1679 = vmor %vm1677, %vm1678
          %v1680 = vsel %vm1679, %v1671, %v1676
          %v1681 = vmul.f32 %v1662, %v1680
          %v1682 = vmul.f32 %v1663, %v1680
          %s1683 = sld [smem:[#allocation11 + $0x3]]
          %v1684 = vstv %s1683
          %v1685 = vmul.f32 %v1681, %v1684
          %v1686 = vmul.f32 %v1682, %v1684
          %s1687 = sld [smem:[#allocation12 + $0x3]]
          %v1688 = vstv %s1687
          %v1689 = vadd.f32 %v1685, %v1688
          %v1690 = vadd.f32 %v1686, %v1688
          %s1691 = scalar_lea.vmem [#allocation2], 48
          %1692 = vst [vmem:[%s1691] sm:$0xff] %v1689
          %1693 = vst [vmem:[%s1691 + $0x8] sm:$0xff] %v1690
        $region80: #{tpu_custom_call.1} parent=47 // pred_fallthru
          _
        %v1694 = vld [vmem:[#allocation2] sm:$0xff]
        %v1695 = vld [vmem:[#allocation2 + $0x8] sm:$0xff]
        %s1696 = scalar_lea.vmem [#allocation2], 16
        %v1697 = vld [vmem:[%s1696] sm:$0xff]
        %v1698 = vld [vmem:[%s1696 + $0x8] sm:$0xff]
        %s1699 = scalar_lea.vmem [#allocation2], 32
        %v1700 = vld [vmem:[%s1699] sm:$0xff]
        %v1701 = vld [vmem:[%s1699 + $0x8] sm:$0xff]
        %s1702 = scalar_lea.vmem [#allocation2], 48
        %v1703 = vld [vmem:[%s1702] sm:$0xff]
        %v1704 = vld [vmem:[%s1702 + $0x8] sm:$0xff]
        %s1705 = smul.u32 %s34, 8
        %s1706 = sld [smem:[#allocation14 + %s1705]]
        %v1707 = vstv %s1706
        %v1708 = vmul.f32 %v1694, %v1707
        %v1709 = vmul.f32 %v1695, %v1707
        %s1710 = sshra.s32 %s1705, 7
        %s1711 = sand.u32 %s1705, 127
        %s1712 = sadd.s32 %s1710, 1
        %s1713 = smul.u32 %s1712, 128
        %s1714 = sshra.s32 %s1705, 7
        %s1715 = sand.u32 %s1705, 127
        %s1716 = sadd.s32 %s1713, %s1715
        %s1717 = sld [smem:[#allocation14 + %s1716]]
        %v1718 = vstv %s1717
        %v1719 = vmul.f32 %v1697, %v1718
        %v1720 = vmul.f32 %v1698, %v1718
        %v1721 = vadd.f32 %v1708, %v1719
        %v1722 = vadd.f32 %v1709, %v1720
        %s1723 = sadd.s32 %s1710, 2
        %s1724 = smul.u32 %s1723, 128
        %s1725 = sadd.s32 %s1724, %s1715
        %s1726 = sld [smem:[#allocation14 + %s1725]]
        %v1727 = vstv %s1726
        %v1728 = vmul.f32 %v1700, %v1727
        %v1729 = vmul.f32 %v1701, %v1727
        %s1730 = sadd.s32 %s1710, 3
        %s1731 = smul.u32 %s1730, 128
        %s1732 = sadd.s32 %s1731, %s1715
        %s1733 = sld [smem:[#allocation14 + %s1732]]
        %v1734 = vstv %s1733
        %v1735 = vmul.f32 %v1703, %v1734
        %v1736 = vmul.f32 %v1704, %v1734
        %v1737 = vadd.f32 %v1728, %v1735
        %v1738 = vadd.f32 %v1729, %v1736
        %v1739 = vadd.f32 %v1721, %v1737
        %v1740 = vadd.f32 %v1722, %v1738
        %s1741 = sld [smem:[#allocation15 + %s1705]]
        %v1742 = vstv %s1741
        %v1743 = vadd.f32 %v1739, %v1742
        %v1744 = vadd.f32 %v1740, %v1742
        %v1745 = vld [vmem:[%s333] ss:$8 sm:$0x3]
        %s1746 = scalar_lea.vmem %s333, 16 [#allocation3]
        %v1747 = vld [vmem:[%s1746] ss:$8 sm:$0x3]
        %s1748 = scalar_lea.vmem %s333, 32 [#allocation3]
        %v1749 = vld [vmem:[%s1748] ss:$8 sm:$0x3]
        %s1750 = scalar_lea.vmem %s333, 48 [#allocation3]
        %v1751 = vld [vmem:[%s1750] ss:$8 sm:$0x3]
        %s1752 = scalar_lea.vmem %s333, 64 [#allocation3]
        %v1753 = vld [vmem:[%s1752] ss:$8 sm:$0x3]
        %s1754 = scalar_lea.vmem %s333, 80 [#allocation3]
        %v1755 = vld [vmem:[%s1754] ss:$8 sm:$0x3]
        %s1756 = scalar_lea.vmem %s333, 96 [#allocation3]
        %v1757 = vld [vmem:[%s1756] ss:$8 sm:$0x3]
        %s1758 = scalar_lea.vmem %s333, 112 [#allocation3]
        %v1759 = vld [vmem:[%s1758] ss:$8 sm:$0x3]
        %1768 = vst [vmem:[#allocation1] ss:$9 sm:$0xff] %v1745
        %s1769 = scalar_lea.vmem [#allocation1], 1
        %1770 = vst [vmem:[%s1769] ss:$9 sm:$0xff] %v1747
        %s1771 = scalar_lea.vmem [#allocation1], 2
        %1772 = vst [vmem:[%s1771] ss:$9 sm:$0xff] %v1749
        %s1773 = scalar_lea.vmem [#allocation1], 3
        %1774 = vst [vmem:[%s1773] ss:$9 sm:$0xff] %v1751
        %s1775 = scalar_lea.vmem [#allocation1], 4
        %1776 = vst [vmem:[%s1775] ss:$9 sm:$0xff] %v1753
        %s1777 = scalar_lea.vmem [#allocation1], 5
        %1778 = vst [vmem:[%s1777] ss:$9 sm:$0xff] %v1755
        %s1779 = scalar_lea.vmem [#allocation1], 6
        %1780 = vst [vmem:[%s1779] ss:$9 sm:$0xff] %v1757
        %s1781 = scalar_lea.vmem [#allocation1], 7
        %1782 = vst [vmem:[%s1781] ss:$9 sm:$0xff] %v1759
        %v1783 = vld [vmem:[#allocation1] sm:$0xff]
        %v1784 = vld [vmem:[#allocation1 + $0x9] sm:$0xff]
        %v1787 = vmul.f32 %v1743, %v1783
        %v1788 = vmul.f32 %v1744, %v1784
        %v1791 = vrot.slane %v1788, 7
        %vm1792 = vcmask 1040384
        %v1793 = vsel %vm1792, %v1787, %v1791
        %vm1794 = vcmask 1041409
        %v1795 = vsel %vm1794, %v1787, %v1791
        %v1796 = vrot.slane %v1795, 1
        %vm1797 = vcmask 1042434
        %v1798 = vsel %vm1797, %v1787, %v1791
        %v1799 = vrot.slane %v1798, 2
        %vm1800 = vcmask 1043459
        %v1801 = vsel %vm1800, %v1787, %v1791
        %v1802 = vrot.slane %v1801, 3
        %vm1803 = vcmask 1044484
        %v1804 = vsel %vm1803, %v1787, %v1791
        %v1805 = vrot.slane %v1804, 4
        %vm1806 = vcmask 1045509
        %v1807 = vsel %vm1806, %v1787, %v1791
        %v1808 = vrot.slane %v1807, 5
        %vm1809 = vcmask 1046534
        %v1810 = vsel %vm1809, %v1787, %v1791
        %v1811 = vrot.slane %v1810, 6
        %vm1812 = vcmask 1046528
        %v1813 = vsel %vm1812, %v1791, %v1787
        %v1814 = vrot.slane %v1813, 7
        %v1823 = vadd.f32 %v1745, %v1793
        %v1824 = vadd.f32 %v1747, %v1796
        %v1825 = vadd.f32 %v1749, %v1799
        %v1826 = vadd.f32 %v1751, %v1802
        %v1827 = vadd.f32 %v1753, %v1805
        %v1828 = vadd.f32 %v1755, %v1808
        %v1829 = vadd.f32 %v1757, %v1811
        %v1830 = vadd.f32 %v1759, %v1814
        %v1831 = vlaneseq
        %vm1832 = vcmp.ge.s32.totalorder %v1831, 0
        %vm1833 = vcmp.lt.s32.totalorder %v1831, 256
        %vm1834 = vmand %vm1832, %vm1833
        %1835 = vst.msk [vmem:[%s395] ss:$8 sm:$0x3] %vm1834, %v1823
        %1836 = vst.msk [vmem:[%s395] ss:$8 sm:$0x0] %vm1834, %v1823
        %s1837 = scalar_lea.vmem %s395, 16 [#allocation17]
        %1838 = vst.msk [vmem:[%s1837] ss:$8 sm:$0x3] %vm1834, %v1824
        %1839 = vst.msk [vmem:[%s1837] ss:$8 sm:$0x0] %vm1834, %v1824
        %s1840 = scalar_lea.vmem %s395, 32 [#allocation17]
        %1841 = vst.msk [vmem:[%s1840] ss:$8 sm:$0x3] %vm1834, %v1825
        %1842 = vst.msk [vmem:[%s1840] ss:$8 sm:$0x0] %vm1834, %v1825
        %s1843 = scalar_lea.vmem %s395, 48 [#allocation17]
        %1844 = vst.msk [vmem:[%s1843] ss:$8 sm:$0x3] %vm1834, %v1826
        %1845 = vst.msk [vmem:[%s1843] ss:$8 sm:$0x0] %vm1834, %v1826
        %s1846 = scalar_lea.vmem %s395, 64 [#allocation17]
        %1847 = vst.msk [vmem:[%s1846] ss:$8 sm:$0x3] %vm1834, %v1827
        %1848 = vst.msk [vmem:[%s1846] ss:$8 sm:$0x0] %vm1834, %v1827
        %s1849 = scalar_lea.vmem %s395, 80 [#allocation17]
        %1850 = vst.msk [vmem:[%s1849] ss:$8 sm:$0x3] %vm1834, %v1828
        %1851 = vst.msk [vmem:[%s1849] ss:$8 sm:$0x0] %vm1834, %v1828
        %s1852 = scalar_lea.vmem %s395, 96 [#allocation17]
        %1853 = vst.msk [vmem:[%s1852] ss:$8 sm:$0x3] %vm1834, %v1829
        %1854 = vst.msk [vmem:[%s1852] ss:$8 sm:$0x0] %vm1834, %v1829
        %s1855 = scalar_lea.vmem %s395, 112 [#allocation17]
        %1856 = vst.msk [vmem:[%s1855] ss:$8 sm:$0x3] %vm1834, %v1830
        %1857 = vst.msk [vmem:[%s1855] ss:$8 sm:$0x0] %vm1834, %v1830
        %s1858 = sadd.s32 %s1705, 1
        %s1859 = sld [smem:[#allocation14 + %s1858]]
        %v1860 = vstv %s1859
        %v1861 = vmul.f32 %v1694, %v1860
        %v1862 = vmul.f32 %v1695, %v1860
        %s1863 = sshra.s32 %s1858, 7
        %s1864 = sand.u32 %s1858, 127
        %s1865 = sadd.s32 %s1863, 1
        %s1866 = smul.u32 %s1865, 128
        %s1867 = sshra.s32 %s1858, 7
        %s1868 = sand.u32 %s1858, 127
        %s1869 = sadd.s32 %s1866, %s1868
        %s1870 = sld [smem:[#allocation14 + %s1869]]
        %v1871 = vstv %s1870
        %v1872 = vmul.f32 %v1697, %v1871
        %v1873 = vmul.f32 %v1698, %v1871
        %v1874 = vadd.f32 %v1861, %v1872
        %v1875 = vadd.f32 %v1862, %v1873
        %s1876 = sadd.s32 %s1863, 2
        %s1877 = smul.u32 %s1876, 128
        %s1878 = sadd.s32 %s1877, %s1868
        %s1879 = sld [smem:[#allocation14 + %s1878]]
        %v1880 = vstv %s1879
        %v1881 = vmul.f32 %v1700, %v1880
        %v1882 = vmul.f32 %v1701, %v1880
        %s1883 = sadd.s32 %s1863, 3
        %s1884 = smul.u32 %s1883, 128
        %s1885 = sadd.s32 %s1884, %s1868
        %s1886 = sld [smem:[#allocation14 + %s1885]]
        %v1887 = vstv %s1886
        %v1888 = vmul.f32 %v1703, %v1887
        %v1889 = vmul.f32 %v1704, %v1887
        %v1890 = vadd.f32 %v1881, %v1888
        %v1891 = vadd.f32 %v1882, %v1889
        %v1892 = vadd.f32 %v1874, %v1890
        %v1893 = vadd.f32 %v1875, %v1891
        %s1894 = sld [smem:[#allocation15 + %s1858]]
        %v1895 = vstv %s1894
        %v1896 = vadd.f32 %v1892, %v1895
        %v1897 = vadd.f32 %v1893, %v1895
        %s1898 = scalar_lea.vmem %s333, 1 [#allocation3]
        %v1899 = vld [vmem:[%s1898] ss:$8 sm:$0x3]
        %s1900 = scalar_lea.vmem %s333, 17 [#allocation3]
        %v1901 = vld [vmem:[%s1900] ss:$8 sm:$0x3]
        %s1902 = scalar_lea.vmem %s333, 33 [#allocation3]
        %v1903 = vld [vmem:[%s1902] ss:$8 sm:$0x3]
        %s1904 = scalar_lea.vmem %s333, 49 [#allocation3]
        %v1905 = vld [vmem:[%s1904] ss:$8 sm:$0x3]
        %s1906 = scalar_lea.vmem %s333, 65 [#allocation3]
        %v1907 = vld [vmem:[%s1906] ss:$8 sm:$0x3]
        %s1908 = scalar_lea.vmem %s333, 81 [#allocation3]
        %v1909 = vld [vmem:[%s1908] ss:$8 sm:$0x3]
        %s1910 = scalar_lea.vmem %s333, 97 [#allocation3]
        %v1911 = vld [vmem:[%s1910] ss:$8 sm:$0x3]
        %s1912 = scalar_lea.vmem %s333, 113 [#allocation3]
        %v1913 = vld [vmem:[%s1912] ss:$8 sm:$0x3]
        %1922 = vst [vmem:[#allocation1] ss:$9 sm:$0xff] %v1899
        %s1923 = scalar_lea.vmem [#allocation1], 1
        %1924 = vst [vmem:[%s1923] ss:$9 sm:$0xff] %v1901
        %s1925 = scalar_lea.vmem [#allocation1], 2
        %1926 = vst [vmem:[%s1925] ss:$9 sm:$0xff] %v1903
        %s1927 = scalar_lea.vmem [#allocation1], 3
        %1928 = vst [vmem:[%s1927] ss:$9 sm:$0xff] %v1905
        %s1929 = scalar_lea.vmem [#allocation1], 4
        %1930 = vst [vmem:[%s1929] ss:$9 sm:$0xff] %v1907
        %s1931 = scalar_lea.vmem [#allocation1], 5
        %1932 = vst [vmem:[%s1931] ss:$9 sm:$0xff] %v1909
        %s1933 = scalar_lea.vmem [#allocation1], 6
        %1934 = vst [vmem:[%s1933] ss:$9 sm:$0xff] %v1911
        %s1935 = scalar_lea.vmem [#allocation1], 7
        %1936 = vst [vmem:[%s1935] ss:$9 sm:$0xff] %v1913
        %v1937 = vld [vmem:[#allocation1] sm:$0xff]
        %v1938 = vld [vmem:[#allocation1 + $0x9] sm:$0xff]
        %v1941 = vmul.f32 %v1896, %v1937
        %v1942 = vmul.f32 %v1897, %v1938
        %v1945 = vrot.slane %v1942, 7
        %v1946 = vsel %vm1792, %v1941, %v1945
        %v1947 = vsel %vm1794, %v1941, %v1945
        %v1948 = vrot.slane %v1947, 1
        %v1949 = vsel %vm1797, %v1941, %v1945
        %v1950 = vrot.slane %v1949, 2
        %v1951 = vsel %vm1800, %v1941, %v1945
        %v1952 = vrot.slane %v1951, 3
        %v1953 = vsel %vm1803, %v1941, %v1945
        %v1954 = vrot.slane %v1953, 4
        %v1955 = vsel %vm1806, %v1941, %v1945
        %v1956 = vrot.slane %v1955, 5
        %v1957 = vsel %vm1809, %v1941, %v1945
        %v1958 = vrot.slane %v1957, 6
        %v1959 = vsel %vm1812, %v1945, %v1941
        %v1960 = vrot.slane %v1959, 7
        %v1969 = vadd.f32 %v1899, %v1946
        %v1970 = vadd.f32 %v1901, %v1948
        %v1971 = vadd.f32 %v1903, %v1950
        %v1972 = vadd.f32 %v1905, %v1952
        %v1973 = vadd.f32 %v1907, %v1954
        %v1974 = vadd.f32 %v1909, %v1956
        %v1975 = vadd.f32 %v1911, %v1958
        %v1976 = vadd.f32 %v1913, %v1960
        %s1977 = scalar_lea.vmem %s395, 1 [#allocation17]
        %1978 = vst.msk [vmem:[%s1977] ss:$8 sm:$0x3] %vm1834, %v1969
        %1979 = vst.msk [vmem:[%s1977] ss:$8 sm:$0x0] %vm1834, %v1969
        %s1980 = scalar_lea.vmem %s395, 17 [#allocation17]
        %1981 = vst.msk [vmem:[%s1980] ss:$8 sm:$0x3] %vm1834, %v1970
        %1982 = vst.msk [vmem:[%s1980] ss:$8 sm:$0x0] %vm1834, %v1970
        %s1983 = scalar_lea.vmem %s395, 33 [#allocation17]
        %1984 = vst.msk [vmem:[%s1983] ss:$8 sm:$0x3] %vm1834, %v1971
        %1985 = vst.msk [vmem:[%s1983] ss:$8 sm:$0x0] %vm1834, %v1971
        %s1986 = scalar_lea.vmem %s395, 49 [#allocation17]
        %1987 = vst.msk [vmem:[%s1986] ss:$8 sm:$0x3] %vm1834, %v1972
        %1988 = vst.msk [vmem:[%s1986] ss:$8 sm:$0x0] %vm1834, %v1972
        %s1989 = scalar_lea.vmem %s395, 65 [#allocation17]
        %1990 = vst.msk [vmem:[%s1989] ss:$8 sm:$0x3] %vm1834, %v1973
        %1991 = vst.msk [vmem:[%s1989] ss:$8 sm:$0x0] %vm1834, %v1973
        %s1992 = scalar_lea.vmem %s395, 81 [#allocation17]
        %1993 = vst.msk [vmem:[%s1992] ss:$8 sm:$0x3] %vm1834, %v1974
        %1994 = vst.msk [vmem:[%s1992] ss:$8 sm:$0x0] %vm1834, %v1974
        %s1995 = scalar_lea.vmem %s395, 97 [#allocation17]
        %1996 = vst.msk [vmem:[%s1995] ss:$8 sm:$0x3] %vm1834, %v1975
        %1997 = vst.msk [vmem:[%s1995] ss:$8 sm:$0x0] %vm1834, %v1975
        %s1998 = scalar_lea.vmem %s395, 113 [#allocation17]
        %1999 = vst.msk [vmem:[%s1998] ss:$8 sm:$0x3] %vm1834, %v1976
        %2000 = vst.msk [vmem:[%s1998] ss:$8 sm:$0x0] %vm1834, %v1976
        %s2001 = sadd.s32 %s1705, 2
        %s2002 = sld [smem:[#allocation14 + %s2001]]
        %v2003 = vstv %s2002
        %v2004 = vmul.f32 %v1694, %v2003
        %v2005 = vmul.f32 %v1695, %v2003
        %s2006 = sshra.s32 %s2001, 7
        %s2007 = sand.u32 %s2001, 127
        %s2008 = sadd.s32 %s2006, 1
        %s2009 = smul.u32 %s2008, 128
        %s2010 = sshra.s32 %s2001, 7
        %s2011 = sand.u32 %s2001, 127
        %s2012 = sadd.s32 %s2009, %s2011
        %s2013 = sld [smem:[#allocation14 + %s2012]]
        %v2014 = vstv %s2013
        %v2015 = vmul.f32 %v1697, %v2014
        %v2016 = vmul.f32 %v1698, %v2014
        %v2017 = vadd.f32 %v2004, %v2015
        %v2018 = vadd.f32 %v2005, %v2016
        %s2019 = sadd.s32 %s2006, 2
        %s2020 = smul.u32 %s2019, 128
        %s2021 = sadd.s32 %s2020, %s2011
        %s2022 = sld [smem:[#allocation14 + %s2021]]
        %v2023 = vstv %s2022
        %v2024 = vmul.f32 %v1700, %v2023
        %v2025 = vmul.f32 %v1701, %v2023
        %s2026 = sadd.s32 %s2006, 3
        %s2027 = smul.u32 %s2026, 128
        %s2028 = sadd.s32 %s2027, %s2011
        %s2029 = sld [smem:[#allocation14 + %s2028]]
        %v2030 = vstv %s2029
        %v2031 = vmul.f32 %v1703, %v2030
        %v2032 = vmul.f32 %v1704, %v2030
        %v2033 = vadd.f32 %v2024, %v2031
        %v2034 = vadd.f32 %v2025, %v2032
        %v2035 = vadd.f32 %v2017, %v2033
        %v2036 = vadd.f32 %v2018, %v2034
        %s2037 = sld [smem:[#allocation15 + %s2001]]
        %v2038 = vstv %s2037
        %v2039 = vadd.f32 %v2035, %v2038
        %v2040 = vadd.f32 %v2036, %v2038
        %s2041 = scalar_lea.vmem %s333, 2 [#allocation3]
        %v2042 = vld [vmem:[%s2041] ss:$8 sm:$0x3]
        %s2043 = scalar_lea.vmem %s333, 18 [#allocation3]
        %v2044 = vld [vmem:[%s2043] ss:$8 sm:$0x3]
        %s2045 = scalar_lea.vmem %s333, 34 [#allocation3]
        %v2046 = vld [vmem:[%s2045] ss:$8 sm:$0x3]
        %s2047 = scalar_lea.vmem %s333, 50 [#allocation3]
        %v2048 = vld [vmem:[%s2047] ss:$8 sm:$0x3]
        %s2049 = scalar_lea.vmem %s333, 66 [#allocation3]
        %v2050 = vld [vmem:[%s2049] ss:$8 sm:$0x3]
        %s2051 = scalar_lea.vmem %s333, 82 [#allocation3]
        %v2052 = vld [vmem:[%s2051] ss:$8 sm:$0x3]
        %s2053 = scalar_lea.vmem %s333, 98 [#allocation3]
        %v2054 = vld [vmem:[%s2053] ss:$8 sm:$0x3]
        %s2055 = scalar_lea.vmem %s333, 114 [#allocation3]
        %v2056 = vld [vmem:[%s2055] ss:$8 sm:$0x3]
        %2065 = vst [vmem:[#allocation1] ss:$9 sm:$0xff] %v2042
        %s2066 = scalar_lea.vmem [#allocation1], 1
        %2067 = vst [vmem:[%s2066] ss:$9 sm:$0xff] %v2044
        %s2068 = scalar_lea.vmem [#allocation1], 2
        %2069 = vst [vmem:[%s2068] ss:$9 sm:$0xff] %v2046
        %s2070 = scalar_lea.vmem [#allocation1], 3
        %2071 = vst [vmem:[%s2070] ss:$9 sm:$0xff] %v2048
        %s2072 = scalar_lea.vmem [#allocation1], 4
        %2073 = vst [vmem:[%s2072] ss:$9 sm:$0xff] %v2050
        %s2074 = scalar_lea.vmem [#allocation1], 5
        %2075 = vst [vmem:[%s2074] ss:$9 sm:$0xff] %v2052
        %s2076 = scalar_lea.vmem [#allocation1], 6
        %2077 = vst [vmem:[%s2076] ss:$9 sm:$0xff] %v2054
        %s2078 = scalar_lea.vmem [#allocation1], 7
        %2079 = vst [vmem:[%s2078] ss:$9 sm:$0xff] %v2056
        %v2080 = vld [vmem:[#allocation1] sm:$0xff]
        %v2081 = vld [vmem:[#allocation1 + $0x9] sm:$0xff]
        %v2084 = vmul.f32 %v2039, %v2080
        %v2085 = vmul.f32 %v2040, %v2081
        %v2088 = vrot.slane %v2085, 7
        %v2089 = vsel %vm1792, %v2084, %v2088
        %v2090 = vsel %vm1794, %v2084, %v2088
        %v2091 = vrot.slane %v2090, 1
        %v2092 = vsel %vm1797, %v2084, %v2088
        %v2093 = vrot.slane %v2092, 2
        %v2094 = vsel %vm1800, %v2084, %v2088
        %v2095 = vrot.slane %v2094, 3
        %v2096 = vsel %vm1803, %v2084, %v2088
        %v2097 = vrot.slane %v2096, 4
        %v2098 = vsel %vm1806, %v2084, %v2088
        %v2099 = vrot.slane %v2098, 5
        %v2100 = vsel %vm1809, %v2084, %v2088
        %v2101 = vrot.slane %v2100, 6
        %v2102 = vsel %vm1812, %v2088, %v2084
        %v2103 = vrot.slane %v2102, 7
        %v2112 = vadd.f32 %v2042, %v2089
        %v2113 = vadd.f32 %v2044, %v2091
        %v2114 = vadd.f32 %v2046, %v2093
        %v2115 = vadd.f32 %v2048, %v2095
        %v2116 = vadd.f32 %v2050, %v2097
        %v2117 = vadd.f32 %v2052, %v2099
        %v2118 = vadd.f32 %v2054, %v2101
        %v2119 = vadd.f32 %v2056, %v2103
        %s2120 = scalar_lea.vmem %s395, 2 [#allocation17]
        %2121 = vst.msk [vmem:[%s2120] ss:$8 sm:$0x3] %vm1834, %v2112
        %2122 = vst.msk [vmem:[%s2120] ss:$8 sm:$0x0] %vm1834, %v2112
        %s2123 = scalar_lea.vmem %s395, 18 [#allocation17]
        %2124 = vst.msk [vmem:[%s2123] ss:$8 sm:$0x3] %vm1834, %v2113
        %2125 = vst.msk [vmem:[%s2123] ss:$8 sm:$0x0] %vm1834, %v2113
        %s2126 = scalar_lea.vmem %s395, 34 [#allocation17]
        %2127 = vst.msk [vmem:[%s2126] ss:$8 sm:$0x3] %vm1834, %v2114
        %2128 = vst.msk [vmem:[%s2126] ss:$8 sm:$0x0] %vm1834, %v2114
        %s2129 = scalar_lea.vmem %s395, 50 [#allocation17]
        %2130 = vst.msk [vmem:[%s2129] ss:$8 sm:$0x3] %vm1834, %v2115
        %2131 = vst.msk [vmem:[%s2129] ss:$8 sm:$0x0] %vm1834, %v2115
        %s2132 = scalar_lea.vmem %s395, 66 [#allocation17]
        %2133 = vst.msk [vmem:[%s2132] ss:$8 sm:$0x3] %vm1834, %v2116
        %2134 = vst.msk [vmem:[%s2132] ss:$8 sm:$0x0] %vm1834, %v2116
        %s2135 = scalar_lea.vmem %s395, 82 [#allocation17]
        %2136 = vst.msk [vmem:[%s2135] ss:$8 sm:$0x3] %vm1834, %v2117
        %2137 = vst.msk [vmem:[%s2135] ss:$8 sm:$0x0] %vm1834, %v2117
        %s2138 = scalar_lea.vmem %s395, 98 [#allocation17]
        %2139 = vst.msk [vmem:[%s2138] ss:$8 sm:$0x3] %vm1834, %v2118
        %2140 = vst.msk [vmem:[%s2138] ss:$8 sm:$0x0] %vm1834, %v2118
        %s2141 = scalar_lea.vmem %s395, 114 [#allocation17]
        %2142 = vst.msk [vmem:[%s2141] ss:$8 sm:$0x3] %vm1834, %v2119
        %2143 = vst.msk [vmem:[%s2141] ss:$8 sm:$0x0] %vm1834, %v2119
        %s2144 = sadd.s32 %s1705, 3
        %s2145 = sld [smem:[#allocation14 + %s2144]]
        %v2146 = vstv %s2145
        %v2147 = vmul.f32 %v1694, %v2146
        %v2148 = vmul.f32 %v1695, %v2146
        %s2149 = sshra.s32 %s2144, 7
        %s2150 = sand.u32 %s2144, 127
        %s2151 = sadd.s32 %s2149, 1
        %s2152 = smul.u32 %s2151, 128
        %s2153 = sshra.s32 %s2144, 7
        %s2154 = sand.u32 %s2144, 127
        %s2155 = sadd.s32 %s2152, %s2154
        %s2156 = sld [smem:[#allocation14 + %s2155]]
        %v2157 = vstv %s2156
        %v2158 = vmul.f32 %v1697, %v2157
        %v2159 = vmul.f32 %v1698, %v2157
        %v2160 = vadd.f32 %v2147, %v2158
        %v2161 = vadd.f32 %v2148, %v2159
        %s2162 = sadd.s32 %s2149, 2
        %s2163 = smul.u32 %s2162, 128
        %s2164 = sadd.s32 %s2163, %s2154
        %s2165 = sld [smem:[#allocation14 + %s2164]]
        %v2166 = vstv %s2165
        %v2167 = vmul.f32 %v1700, %v2166
        %v2168 = vmul.f32 %v1701, %v2166
        %s2169 = sadd.s32 %s2149, 3
        %s2170 = smul.u32 %s2169, 128
        %s2171 = sadd.s32 %s2170, %s2154
        %s2172 = sld [smem:[#allocation14 + %s2171]]
        %v2173 = vstv %s2172
        %v2174 = vmul.f32 %v1703, %v2173
        %v2175 = vmul.f32 %v1704, %v2173
        %v2176 = vadd.f32 %v2167, %v2174
        %v2177 = vadd.f32 %v2168, %v2175
        %v2178 = vadd.f32 %v2160, %v2176
        %v2179 = vadd.f32 %v2161, %v2177
        %s2180 = sld [smem:[#allocation15 + %s2144]]
        %v2181 = vstv %s2180
        %v2182 = vadd.f32 %v2178, %v2181
        %v2183 = vadd.f32 %v2179, %v2181
        %s2184 = scalar_lea.vmem %s333, 3 [#allocation3]
        %v2185 = vld [vmem:[%s2184] ss:$8 sm:$0x3]
        %s2186 = scalar_lea.vmem %s333, 19 [#allocation3]
        %v2187 = vld [vmem:[%s2186] ss:$8 sm:$0x3]
        %s2188 = scalar_lea.vmem %s333, 35 [#allocation3]
        %v2189 = vld [vmem:[%s2188] ss:$8 sm:$0x3]
        %s2190 = scalar_lea.vmem %s333, 51 [#allocation3]
        %v2191 = vld [vmem:[%s2190] ss:$8 sm:$0x3]
        %s2192 = scalar_lea.vmem %s333, 67 [#allocation3]
        %v2193 = vld [vmem:[%s2192] ss:$8 sm:$0x3]
        %s2194 = scalar_lea.vmem %s333, 83 [#allocation3]
        %v2195 = vld [vmem:[%s2194] ss:$8 sm:$0x3]
        %s2196 = scalar_lea.vmem %s333, 99 [#allocation3]
        %v2197 = vld [vmem:[%s2196] ss:$8 sm:$0x3]
        %s2198 = scalar_lea.vmem %s333, 115 [#allocation3]
        %v2199 = vld [vmem:[%s2198] ss:$8 sm:$0x3]
        %2208 = vst [vmem:[#allocation1] ss:$9 sm:$0xff] %v2185
        %s2209 = scalar_lea.vmem [#allocation1], 1
        %2210 = vst [vmem:[%s2209] ss:$9 sm:$0xff] %v2187
        %s2211 = scalar_lea.vmem [#allocation1], 2
        %2212 = vst [vmem:[%s2211] ss:$9 sm:$0xff] %v2189
        %s2213 = scalar_lea.vmem [#allocation1], 3
        %2214 = vst [vmem:[%s2213] ss:$9 sm:$0xff] %v2191
        %s2215 = scalar_lea.vmem [#allocation1], 4
        %2216 = vst [vmem:[%s2215] ss:$9 sm:$0xff] %v2193
        %s2217 = scalar_lea.vmem [#allocation1], 5
        %2218 = vst [vmem:[%s2217] ss:$9 sm:$0xff] %v2195
        %s2219 = scalar_lea.vmem [#allocation1], 6
        %2220 = vst [vmem:[%s2219] ss:$9 sm:$0xff] %v2197
        %s2221 = scalar_lea.vmem [#allocation1], 7
        %2222 = vst [vmem:[%s2221] ss:$9 sm:$0xff] %v2199
        %v2223 = vld [vmem:[#allocation1] sm:$0xff]
        %v2224 = vld [vmem:[#allocation1 + $0x9] sm:$0xff]
        %v2227 = vmul.f32 %v2182, %v2223
        %v2228 = vmul.f32 %v2183, %v2224
        %v2231 = vrot.slane %v2228, 7
        %v2232 = vsel %vm1792, %v2227, %v2231
        %v2233 = vsel %vm1794, %v2227, %v2231
        %v2234 = vrot.slane %v2233, 1
        %v2235 = vsel %vm1797, %v2227, %v2231
        %v2236 = vrot.slane %v2235, 2
        %v2237 = vsel %vm1800, %v2227, %v2231
        %v2238 = vrot.slane %v2237, 3
        %v2239 = vsel %vm1803, %v2227, %v2231
        %v2240 = vrot.slane %v2239, 4
        %v2241 = vsel %vm1806, %v2227, %v2231
        %v2242 = vrot.slane %v2241, 5
        %v2243 = vsel %vm1809, %v2227, %v2231
        %v2244 = vrot.slane %v2243, 6
        %v2245 = vsel %vm1812, %v2231, %v2227
        %v2246 = vrot.slane %v2245, 7
        %v2255 = vadd.f32 %v2185, %v2232
        %v2256 = vadd.f32 %v2187, %v2234
        %v2257 = vadd.f32 %v2189, %v2236
        %v2258 = vadd.f32 %v2191, %v2238
        %v2259 = vadd.f32 %v2193, %v2240
        %v2260 = vadd.f32 %v2195, %v2242
        %v2261 = vadd.f32 %v2197, %v2244
        %v2262 = vadd.f32 %v2199, %v2246
        %s2263 = scalar_lea.vmem %s395, 3 [#allocation17]
        %2264 = vst.msk [vmem:[%s2263] ss:$8 sm:$0x3] %vm1834, %v2255
        %2265 = vst.msk [vmem:[%s2263] ss:$8 sm:$0x0] %vm1834, %v2255
        %s2266 = scalar_lea.vmem %s395, 19 [#allocation17]
        %2267 = vst.msk [vmem:[%s2266] ss:$8 sm:$0x3] %vm1834, %v2256
        %2268 = vst.msk [vmem:[%s2266] ss:$8 sm:$0x0] %vm1834, %v2256
        %s2269 = scalar_lea.vmem %s395, 35 [#allocation17]
        %2270 = vst.msk [vmem:[%s2269] ss:$8 sm:$0x3] %vm1834, %v2257
        %2271 = vst.msk [vmem:[%s2269] ss:$8 sm:$0x0] %vm1834, %v2257
        %s2272 = scalar_lea.vmem %s395, 51 [#allocation17]
        %2273 = vst.msk [vmem:[%s2272] ss:$8 sm:$0x3] %vm1834, %v2258
        %2274 = vst.msk [vmem:[%s2272] ss:$8 sm:$0x0] %vm1834, %v2258
        %s2275 = scalar_lea.vmem %s395, 67 [#allocation17]
        %2276 = vst.msk [vmem:[%s2275] ss:$8 sm:$0x3] %vm1834, %v2259
        %2277 = vst.msk [vmem:[%s2275] ss:$8 sm:$0x0] %vm1834, %v2259
        %s2278 = scalar_lea.vmem %s395, 83 [#allocation17]
        %2279 = vst.msk [vmem:[%s2278] ss:$8 sm:$0x3] %vm1834, %v2260
        %2280 = vst.msk [vmem:[%s2278] ss:$8 sm:$0x0] %vm1834, %v2260
        %s2281 = scalar_lea.vmem %s395, 99 [#allocation17]
        %2282 = vst.msk [vmem:[%s2281] ss:$8 sm:$0x3] %vm1834, %v2261
        %2283 = vst.msk [vmem:[%s2281] ss:$8 sm:$0x0] %vm1834, %v2261
        %s2284 = scalar_lea.vmem %s395, 115 [#allocation17]
        %2285 = vst.msk [vmem:[%s2284] ss:$8 sm:$0x3] %vm1834, %v2262
        %2286 = vst.msk [vmem:[%s2284] ss:$8 sm:$0x0] %vm1834, %v2262
        %s2287 = sadd.s32 %s1705, 4
        %s2288 = sld [smem:[#allocation14 + %s2287]]
        %v2289 = vstv %s2288
        %v2290 = vmul.f32 %v1694, %v2289
        %v2291 = vmul.f32 %v1695, %v2289
        %s2292 = sshra.s32 %s2287, 7
        %s2293 = sand.u32 %s2287, 127
        %s2294 = sadd.s32 %s2292, 1
        %s2295 = smul.u32 %s2294, 128
        %s2296 = sshra.s32 %s2287, 7
        %s2297 = sand.u32 %s2287, 127
        %s2298 = sadd.s32 %s2295, %s2297
        %s2299 = sld [smem:[#allocation14 + %s2298]]
        %v2300 = vstv %s2299
        %v2301 = vmul.f32 %v1697, %v2300
        %v2302 = vmul.f32 %v1698, %v2300
        %v2303 = vadd.f32 %v2290, %v2301
        %v2304 = vadd.f32 %v2291, %v2302
        %s2305 = sadd.s32 %s2292, 2
        %s2306 = smul.u32 %s2305, 128
        %s2307 = sadd.s32 %s2306, %s2297
        %s2308 = sld [smem:[#allocation14 + %s2307]]
        %v2309 = vstv %s2308
        %v2310 = vmul.f32 %v1700, %v2309
        %v2311 = vmul.f32 %v1701, %v2309
        %s2312 = sadd.s32 %s2292, 3
        %s2313 = smul.u32 %s2312, 128
        %s2314 = sadd.s32 %s2313, %s2297
        %s2315 = sld [smem:[#allocation14 + %s2314]]
        %v2316 = vstv %s2315
        %v2317 = vmul.f32 %v1703, %v2316
        %v2318 = vmul.f32 %v1704, %v2316
        %v2319 = vadd.f32 %v2310, %v2317
        %v2320 = vadd.f32 %v2311, %v2318
        %v2321 = vadd.f32 %v2303, %v2319
        %v2322 = vadd.f32 %v2304, %v2320
        %s2323 = sld [smem:[#allocation15 + %s2287]]
        %v2324 = vstv %s2323
        %v2325 = vadd.f32 %v2321, %v2324
        %v2326 = vadd.f32 %v2322, %v2324
        %s2327 = scalar_lea.vmem %s333, 4 [#allocation3]
        %v2328 = vld [vmem:[%s2327] ss:$8 sm:$0x3]
        %s2329 = scalar_lea.vmem %s333, 20 [#allocation3]
        %v2330 = vld [vmem:[%s2329] ss:$8 sm:$0x3]
        %s2331 = scalar_lea.vmem %s333, 36 [#allocation3]
        %v2332 = vld [vmem:[%s2331] ss:$8 sm:$0x3]
        %s2333 = scalar_lea.vmem %s333, 52 [#allocation3]
        %v2334 = vld [vmem:[%s2333] ss:$8 sm:$0x3]
        %s2335 = scalar_lea.vmem %s333, 68 [#allocation3]
        %v2336 = vld [vmem:[%s2335] ss:$8 sm:$0x3]
        %s2337 = scalar_lea.vmem %s333, 84 [#allocation3]
        %v2338 = vld [vmem:[%s2337] ss:$8 sm:$0x3]
        %s2339 = scalar_lea.vmem %s333, 100 [#allocation3]
        %v2340 = vld [vmem:[%s2339] ss:$8 sm:$0x3]
        %s2341 = scalar_lea.vmem %s333, 116 [#allocation3]
        %v2342 = vld [vmem:[%s2341] ss:$8 sm:$0x3]
        %2351 = vst [vmem:[#allocation1] ss:$9 sm:$0xff] %v2328
        %s2352 = scalar_lea.vmem [#allocation1], 1
        %2353 = vst [vmem:[%s2352] ss:$9 sm:$0xff] %v2330
        %s2354 = scalar_lea.vmem [#allocation1], 2
        %2355 = vst [vmem:[%s2354] ss:$9 sm:$0xff] %v2332
        %s2356 = scalar_lea.vmem [#allocation1], 3
        %2357 = vst [vmem:[%s2356] ss:$9 sm:$0xff] %v2334
        %s2358 = scalar_lea.vmem [#allocation1], 4
        %2359 = vst [vmem:[%s2358] ss:$9 sm:$0xff] %v2336
        %s2360 = scalar_lea.vmem [#allocation1], 5
        %2361 = vst [vmem:[%s2360] ss:$9 sm:$0xff] %v2338
        %s2362 = scalar_lea.vmem [#allocation1], 6
        %2363 = vst [vmem:[%s2362] ss:$9 sm:$0xff] %v2340
        %s2364 = scalar_lea.vmem [#allocation1], 7
        %2365 = vst [vmem:[%s2364] ss:$9 sm:$0xff] %v2342
        %v2366 = vld [vmem:[#allocation1] sm:$0xff]
        %v2367 = vld [vmem:[#allocation1 + $0x9] sm:$0xff]
        %v2370 = vmul.f32 %v2325, %v2366
        %v2371 = vmul.f32 %v2326, %v2367
        %v2374 = vrot.slane %v2371, 7
        %v2375 = vsel %vm1792, %v2370, %v2374
        %v2376 = vsel %vm1794, %v2370, %v2374
        %v2377 = vrot.slane %v2376, 1
        %v2378 = vsel %vm1797, %v2370, %v2374
        %v2379 = vrot.slane %v2378, 2
        %v2380 = vsel %vm1800, %v2370, %v2374
        %v2381 = vrot.slane %v2380, 3
        %v2382 = vsel %vm1803, %v2370, %v2374
        %v2383 = vrot.slane %v2382, 4
        %v2384 = vsel %vm1806, %v2370, %v2374
        %v2385 = vrot.slane %v2384, 5
        %v2386 = vsel %vm1809, %v2370, %v2374
        %v2387 = vrot.slane %v2386, 6
        %v2388 = vsel %vm1812, %v2374, %v2370
        %v2389 = vrot.slane %v2388, 7
        %v2398 = vadd.f32 %v2328, %v2375
        %v2399 = vadd.f32 %v2330, %v2377
        %v2400 = vadd.f32 %v2332, %v2379
        %v2401 = vadd.f32 %v2334, %v2381
        %v2402 = vadd.f32 %v2336, %v2383
        %v2403 = vadd.f32 %v2338, %v2385
        %v2404 = vadd.f32 %v2340, %v2387
        %v2405 = vadd.f32 %v2342, %v2389
        %s2406 = scalar_lea.vmem %s395, 4 [#allocation17]
        %2407 = vst.msk [vmem:[%s2406] ss:$8 sm:$0x3] %vm1834, %v2398
        %2408 = vst.msk [vmem:[%s2406] ss:$8 sm:$0x0] %vm1834, %v2398
        %s2409 = scalar_lea.vmem %s395, 20 [#allocation17]
        %2410 = vst.msk [vmem:[%s2409] ss:$8 sm:$0x3] %vm1834, %v2399
        %2411 = vst.msk [vmem:[%s2409] ss:$8 sm:$0x0] %vm1834, %v2399
        %s2412 = scalar_lea.vmem %s395, 36 [#allocation17]
        %2413 = vst.msk [vmem:[%s2412] ss:$8 sm:$0x3] %vm1834, %v2400
        %2414 = vst.msk [vmem:[%s2412] ss:$8 sm:$0x0] %vm1834, %v2400
        %s2415 = scalar_lea.vmem %s395, 52 [#allocation17]
        %2416 = vst.msk [vmem:[%s2415] ss:$8 sm:$0x3] %vm1834, %v2401
        %2417 = vst.msk [vmem:[%s2415] ss:$8 sm:$0x0] %vm1834, %v2401
        %s2418 = scalar_lea.vmem %s395, 68 [#allocation17]
        %2419 = vst.msk [vmem:[%s2418] ss:$8 sm:$0x3] %vm1834, %v2402
        %2420 = vst.msk [vmem:[%s2418] ss:$8 sm:$0x0] %vm1834, %v2402
        %s2421 = scalar_lea.vmem %s395, 84 [#allocation17]
        %2422 = vst.msk [vmem:[%s2421] ss:$8 sm:$0x3] %vm1834, %v2403
        %2423 = vst.msk [vmem:[%s2421] ss:$8 sm:$0x0] %vm1834, %v2403
        %s2424 = scalar_lea.vmem %s395, 100 [#allocation17]
        %2425 = vst.msk [vmem:[%s2424] ss:$8 sm:$0x3] %vm1834, %v2404
        %2426 = vst.msk [vmem:[%s2424] ss:$8 sm:$0x0] %vm1834, %v2404
        %s2427 = scalar_lea.vmem %s395, 116 [#allocation17]
        %2428 = vst.msk [vmem:[%s2427] ss:$8 sm:$0x3] %vm1834, %v2405
        %2429 = vst.msk [vmem:[%s2427] ss:$8 sm:$0x0] %vm1834, %v2405
        %s2430 = sadd.s32 %s1705, 5
        %s2431 = sld [smem:[#allocation14 + %s2430]]
        %v2432 = vstv %s2431
        %v2433 = vmul.f32 %v1694, %v2432
        %v2434 = vmul.f32 %v1695, %v2432
        %s2435 = sshra.s32 %s2430, 7
        %s2436 = sand.u32 %s2430, 127
        %s2437 = sadd.s32 %s2435, 1
        %s2438 = smul.u32 %s2437, 128
        %s2439 = sshra.s32 %s2430, 7
        %s2440 = sand.u32 %s2430, 127
        %s2441 = sadd.s32 %s2438, %s2440
        %s2442 = sld [smem:[#allocation14 + %s2441]]
        %v2443 = vstv %s2442
        %v2444 = vmul.f32 %v1697, %v2443
        %v2445 = vmul.f32 %v1698, %v2443
        %v2446 = vadd.f32 %v2433, %v2444
        %v2447 = vadd.f32 %v2434, %v2445
        %s2448 = sadd.s32 %s2435, 2
        %s2449 = smul.u32 %s2448, 128
        %s2450 = sadd.s32 %s2449, %s2440
        %s2451 = sld [smem:[#allocation14 + %s2450]]
        %v2452 = vstv %s2451
        %v2453 = vmul.f32 %v1700, %v2452
        %v2454 = vmul.f32 %v1701, %v2452
        %s2455 = sadd.s32 %s2435, 3
        %s2456 = smul.u32 %s2455, 128
        %s2457 = sadd.s32 %s2456, %s2440
        %s2458 = sld [smem:[#allocation14 + %s2457]]
        %v2459 = vstv %s2458
        %v2460 = vmul.f32 %v1703, %v2459
        %v2461 = vmul.f32 %v1704, %v2459
        %v2462 = vadd.f32 %v2453, %v2460
        %v2463 = vadd.f32 %v2454, %v2461
        %v2464 = vadd.f32 %v2446, %v2462
        %v2465 = vadd.f32 %v2447, %v2463
        %s2466 = sld [smem:[#allocation15 + %s2430]]
        %v2467 = vstv %s2466
        %v2468 = vadd.f32 %v2464, %v2467
        %v2469 = vadd.f32 %v2465, %v2467
        %s2470 = scalar_lea.vmem %s333, 5 [#allocation3]
        %v2471 = vld [vmem:[%s2470] ss:$8 sm:$0x3]
        %s2472 = scalar_lea.vmem %s333, 21 [#allocation3]
        %v2473 = vld [vmem:[%s2472] ss:$8 sm:$0x3]
        %s2474 = scalar_lea.vmem %s333, 37 [#allocation3]
        %v2475 = vld [vmem:[%s2474] ss:$8 sm:$0x3]
        %s2476 = scalar_lea.vmem %s333, 53 [#allocation3]
        %v2477 = vld [vmem:[%s2476] ss:$8 sm:$0x3]
        %s2478 = scalar_lea.vmem %s333, 69 [#allocation3]
        %v2479 = vld [vmem:[%s2478] ss:$8 sm:$0x3]
        %s2480 = scalar_lea.vmem %s333, 85 [#allocation3]
        %v2481 = vld [vmem:[%s2480] ss:$8 sm:$0x3]
        %s2482 = scalar_lea.vmem %s333, 101 [#allocation3]
        %v2483 = vld [vmem:[%s2482] ss:$8 sm:$0x3]
        %s2484 = scalar_lea.vmem %s333, 117 [#allocation3]
        %v2485 = vld [vmem:[%s2484] ss:$8 sm:$0x3]
        %2494 = vst [vmem:[#allocation1] ss:$9 sm:$0xff] %v2471
        %s2495 = scalar_lea.vmem [#allocation1], 1
        %2496 = vst [vmem:[%s2495] ss:$9 sm:$0xff] %v2473
        %s2497 = scalar_lea.vmem [#allocation1], 2
        %2498 = vst [vmem:[%s2497] ss:$9 sm:$0xff] %v2475
        %s2499 = scalar_lea.vmem [#allocation1], 3
        %2500 = vst [vmem:[%s2499] ss:$9 sm:$0xff] %v2477
        %s2501 = scalar_lea.vmem [#allocation1], 4
        %2502 = vst [vmem:[%s2501] ss:$9 sm:$0xff] %v2479
        %s2503 = scalar_lea.vmem [#allocation1], 5
        %2504 = vst [vmem:[%s2503] ss:$9 sm:$0xff] %v2481
        %s2505 = scalar_lea.vmem [#allocation1], 6
        %2506 = vst [vmem:[%s2505] ss:$9 sm:$0xff] %v2483
        %s2507 = scalar_lea.vmem [#allocation1], 7
        %2508 = vst [vmem:[%s2507] ss:$9 sm:$0xff] %v2485
        %v2509 = vld [vmem:[#allocation1] sm:$0xff]
        %v2510 = vld [vmem:[#allocation1 + $0x9] sm:$0xff]
        %v2513 = vmul.f32 %v2468, %v2509
        %v2514 = vmul.f32 %v2469, %v2510
        %v2517 = vrot.slane %v2514, 7
        %v2518 = vsel %vm1792, %v2513, %v2517
        %v2519 = vsel %vm1794, %v2513, %v2517
        %v2520 = vrot.slane %v2519, 1
        %v2521 = vsel %vm1797, %v2513, %v2517
        %v2522 = vrot.slane %v2521, 2
        %v2523 = vsel %vm1800, %v2513, %v2517
        %v2524 = vrot.slane %v2523, 3
        %v2525 = vsel %vm1803, %v2513, %v2517
        %v2526 = vrot.slane %v2525, 4
        %v2527 = vsel %vm1806, %v2513, %v2517
        %v2528 = vrot.slane %v2527, 5
        %v2529 = vsel %vm1809, %v2513, %v2517
        %v2530 = vrot.slane %v2529, 6
        %v2531 = vsel %vm1812, %v2517, %v2513
        %v2532 = vrot.slane %v2531, 7
        %v2541 = vadd.f32 %v2471, %v2518
        %v2542 = vadd.f32 %v2473, %v2520
        %v2543 = vadd.f32 %v2475, %v2522
        %v2544 = vadd.f32 %v2477, %v2524
        %v2545 = vadd.f32 %v2479, %v2526
        %v2546 = vadd.f32 %v2481, %v2528
        %v2547 = vadd.f32 %v2483, %v2530
        %v2548 = vadd.f32 %v2485, %v2532
        %s2549 = scalar_lea.vmem %s395, 5 [#allocation17]
        %2550 = vst.msk [vmem:[%s2549] ss:$8 sm:$0x3] %vm1834, %v2541
        %2551 = vst.msk [vmem:[%s2549] ss:$8 sm:$0x0] %vm1834, %v2541
        %s2552 = scalar_lea.vmem %s395, 21 [#allocation17]
        %2553 = vst.msk [vmem:[%s2552] ss:$8 sm:$0x3] %vm1834, %v2542
        %2554 = vst.msk [vmem:[%s2552] ss:$8 sm:$0x0] %vm1834, %v2542
        %s2555 = scalar_lea.vmem %s395, 37 [#allocation17]
        %2556 = vst.msk [vmem:[%s2555] ss:$8 sm:$0x3] %vm1834, %v2543
        %2557 = vst.msk [vmem:[%s2555] ss:$8 sm:$0x0] %vm1834, %v2543
        %s2558 = scalar_lea.vmem %s395, 53 [#allocation17]
        %2559 = vst.msk [vmem:[%s2558] ss:$8 sm:$0x3] %vm1834, %v2544
        %2560 = vst.msk [vmem:[%s2558] ss:$8 sm:$0x0] %vm1834, %v2544
        %s2561 = scalar_lea.vmem %s395, 69 [#allocation17]
        %2562 = vst.msk [vmem:[%s2561] ss:$8 sm:$0x3] %vm1834, %v2545
        %2563 = vst.msk [vmem:[%s2561] ss:$8 sm:$0x0] %vm1834, %v2545
        %s2564 = scalar_lea.vmem %s395, 85 [#allocation17]
        %2565 = vst.msk [vmem:[%s2564] ss:$8 sm:$0x3] %vm1834, %v2546
        %2566 = vst.msk [vmem:[%s2564] ss:$8 sm:$0x0] %vm1834, %v2546
        %s2567 = scalar_lea.vmem %s395, 101 [#allocation17]
        %2568 = vst.msk [vmem:[%s2567] ss:$8 sm:$0x3] %vm1834, %v2547
        %2569 = vst.msk [vmem:[%s2567] ss:$8 sm:$0x0] %vm1834, %v2547
        %s2570 = scalar_lea.vmem %s395, 117 [#allocation17]
        %2571 = vst.msk [vmem:[%s2570] ss:$8 sm:$0x3] %vm1834, %v2548
        %2572 = vst.msk [vmem:[%s2570] ss:$8 sm:$0x0] %vm1834, %v2548
        %s2573 = sadd.s32 %s1705, 6
        %s2574 = sld [smem:[#allocation14 + %s2573]]
        %v2575 = vstv %s2574
        %v2576 = vmul.f32 %v1694, %v2575
        %v2577 = vmul.f32 %v1695, %v2575
        %s2578 = sshra.s32 %s2573, 7
        %s2579 = sand.u32 %s2573, 127
        %s2580 = sadd.s32 %s2578, 1
        %s2581 = smul.u32 %s2580, 128
        %s2582 = sshra.s32 %s2573, 7
        %s2583 = sand.u32 %s2573, 127
        %s2584 = sadd.s32 %s2581, %s2583
        %s2585 = sld [smem:[#allocation14 + %s2584]]
        %v2586 = vstv %s2585
        %v2587 = vmul.f32 %v1697, %v2586
        %v2588 = vmul.f32 %v1698, %v2586
        %v2589 = vadd.f32 %v2576, %v2587
        %v2590 = vadd.f32 %v2577, %v2588
        %s2591 = sadd.s32 %s2578, 2
        %s2592 = smul.u32 %s2591, 128
        %s2593 = sadd.s32 %s2592, %s2583
        %s2594 = sld [smem:[#allocation14 + %s2593]]
        %v2595 = vstv %s2594
        %v2596 = vmul.f32 %v1700, %v2595
        %v2597 = vmul.f32 %v1701, %v2595
        %s2598 = sadd.s32 %s2578, 3
        %s2599 = smul.u32 %s2598, 128
        %s2600 = sadd.s32 %s2599, %s2583
        %s2601 = sld [smem:[#allocation14 + %s2600]]
        %v2602 = vstv %s2601
        %v2603 = vmul.f32 %v1703, %v2602
        %v2604 = vmul.f32 %v1704, %v2602
        %v2605 = vadd.f32 %v2596, %v2603
        %v2606 = vadd.f32 %v2597, %v2604
        %v2607 = vadd.f32 %v2589, %v2605
        %v2608 = vadd.f32 %v2590, %v2606
        %s2609 = sld [smem:[#allocation15 + %s2573]]
        %v2610 = vstv %s2609
        %v2611 = vadd.f32 %v2607, %v2610
        %v2612 = vadd.f32 %v2608, %v2610
        %s2613 = scalar_lea.vmem %s333, 6 [#allocation3]
        %v2614 = vld [vmem:[%s2613] ss:$8 sm:$0x3]
        %s2615 = scalar_lea.vmem %s333, 22 [#allocation3]
        %v2616 = vld [vmem:[%s2615] ss:$8 sm:$0x3]
        %s2617 = scalar_lea.vmem %s333, 38 [#allocation3]
        %v2618 = vld [vmem:[%s2617] ss:$8 sm:$0x3]
        %s2619 = scalar_lea.vmem %s333, 54 [#allocation3]
        %v2620 = vld [vmem:[%s2619] ss:$8 sm:$0x3]
        %s2621 = scalar_lea.vmem %s333, 70 [#allocation3]
        %v2622 = vld [vmem:[%s2621] ss:$8 sm:$0x3]
        %s2623 = scalar_lea.vmem %s333, 86 [#allocation3]
        %v2624 = vld [vmem:[%s2623] ss:$8 sm:$0x3]
        %s2625 = scalar_lea.vmem %s333, 102 [#allocation3]
        %v2626 = vld [vmem:[%s2625] ss:$8 sm:$0x3]
        %s2627 = scalar_lea.vmem %s333, 118 [#allocation3]
        %v2628 = vld [vmem:[%s2627] ss:$8 sm:$0x3]
        %2637 = vst [vmem:[#allocation1] ss:$9 sm:$0xff] %v2614
        %s2638 = scalar_lea.vmem [#allocation1], 1
        %2639 = vst [vmem:[%s2638] ss:$9 sm:$0xff] %v2616
        %s2640 = scalar_lea.vmem [#allocation1], 2
        %2641 = vst [vmem:[%s2640] ss:$9 sm:$0xff] %v2618
        %s2642 = scalar_lea.vmem [#allocation1], 3
        %2643 = vst [vmem:[%s2642] ss:$9 sm:$0xff] %v2620
        %s2644 = scalar_lea.vmem [#allocation1], 4
        %2645 = vst [vmem:[%s2644] ss:$9 sm:$0xff] %v2622
        %s2646 = scalar_lea.vmem [#allocation1], 5
        %2647 = vst [vmem:[%s2646] ss:$9 sm:$0xff] %v2624
        %s2648 = scalar_lea.vmem [#allocation1], 6
        %2649 = vst [vmem:[%s2648] ss:$9 sm:$0xff] %v2626
        %s2650 = scalar_lea.vmem [#allocation1], 7
        %2651 = vst [vmem:[%s2650] ss:$9 sm:$0xff] %v2628
        %v2652 = vld [vmem:[#allocation1] sm:$0xff]
        %v2653 = vld [vmem:[#allocation1 + $0x9] sm:$0xff]
        %v2656 = vmul.f32 %v2611, %v2652
        %v2657 = vmul.f32 %v2612, %v2653
        %v2660 = vrot.slane %v2657, 7
        %v2661 = vsel %vm1792, %v2656, %v2660
        %v2662 = vsel %vm1794, %v2656, %v2660
        %v2663 = vrot.slane %v2662, 1
        %v2664 = vsel %vm1797, %v2656, %v2660
        %v2665 = vrot.slane %v2664, 2
        %v2666 = vsel %vm1800, %v2656, %v2660
        %v2667 = vrot.slane %v2666, 3
        %v2668 = vsel %vm1803, %v2656, %v2660
        %v2669 = vrot.slane %v2668, 4
        %v2670 = vsel %vm1806, %v2656, %v2660
        %v2671 = vrot.slane %v2670, 5
        %v2672 = vsel %vm1809, %v2656, %v2660
        %v2673 = vrot.slane %v2672, 6
        %v2674 = vsel %vm1812, %v2660, %v2656
        %v2675 = vrot.slane %v2674, 7
        %v2684 = vadd.f32 %v2614, %v2661
        %v2685 = vadd.f32 %v2616, %v2663
        %v2686 = vadd.f32 %v2618, %v2665
        %v2687 = vadd.f32 %v2620, %v2667
        %v2688 = vadd.f32 %v2622, %v2669
        %v2689 = vadd.f32 %v2624, %v2671
        %v2690 = vadd.f32 %v2626, %v2673
        %v2691 = vadd.f32 %v2628, %v2675
        %s2692 = scalar_lea.vmem %s395, 6 [#allocation17]
        %2693 = vst.msk [vmem:[%s2692] ss:$8 sm:$0x3] %vm1834, %v2684
        %2694 = vst.msk [vmem:[%s2692] ss:$8 sm:$0x0] %vm1834, %v2684
        %s2695 = scalar_lea.vmem %s395, 22 [#allocation17]
        %2696 = vst.msk [vmem:[%s2695] ss:$8 sm:$0x3] %vm1834, %v2685
        %2697 = vst.msk [vmem:[%s2695] ss:$8 sm:$0x0] %vm1834, %v2685
        %s2698 = scalar_lea.vmem %s395, 38 [#allocation17]
        %2699 = vst.msk [vmem:[%s2698] ss:$8 sm:$0x3] %vm1834, %v2686
        %2700 = vst.msk [vmem:[%s2698] ss:$8 sm:$0x0] %vm1834, %v2686
        %s2701 = scalar_lea.vmem %s395, 54 [#allocation17]
        %2702 = vst.msk [vmem:[%s2701] ss:$8 sm:$0x3] %vm1834, %v2687
        %2703 = vst.msk [vmem:[%s2701] ss:$8 sm:$0x0] %vm1834, %v2687
        %s2704 = scalar_lea.vmem %s395, 70 [#allocation17]
        %2705 = vst.msk [vmem:[%s2704] ss:$8 sm:$0x3] %vm1834, %v2688
        %2706 = vst.msk [vmem:[%s2704] ss:$8 sm:$0x0] %vm1834, %v2688
        %s2707 = scalar_lea.vmem %s395, 86 [#allocation17]
        %2708 = vst.msk [vmem:[%s2707] ss:$8 sm:$0x3] %vm1834, %v2689
        %2709 = vst.msk [vmem:[%s2707] ss:$8 sm:$0x0] %vm1834, %v2689
        %s2710 = scalar_lea.vmem %s395, 102 [#allocation17]
        %2711 = vst.msk [vmem:[%s2710] ss:$8 sm:$0x3] %vm1834, %v2690
        %2712 = vst.msk [vmem:[%s2710] ss:$8 sm:$0x0] %vm1834, %v2690
        %s2713 = scalar_lea.vmem %s395, 118 [#allocation17]
        %2714 = vst.msk [vmem:[%s2713] ss:$8 sm:$0x3] %vm1834, %v2691
        %2715 = vst.msk [vmem:[%s2713] ss:$8 sm:$0x0] %vm1834, %v2691
        %s2716 = sadd.s32 %s1705, 7
        %s2717 = sld [smem:[#allocation14 + %s2716]]
        %v2718 = vstv %s2717
        %v2719 = vmul.f32 %v1694, %v2718
        %v2720 = vmul.f32 %v1695, %v2718
        %s2721 = sshra.s32 %s2716, 7
        %s2722 = sand.u32 %s2716, 127
        %s2723 = sadd.s32 %s2721, 1
        %s2724 = smul.u32 %s2723, 128
        %s2725 = sshra.s32 %s2716, 7
        %s2726 = sand.u32 %s2716, 127
        %s2727 = sadd.s32 %s2724, %s2726
        %s2728 = sld [smem:[#allocation14 + %s2727]]
        %v2729 = vstv %s2728
        %v2730 = vmul.f32 %v1697, %v2729
        %v2731 = vmul.f32 %v1698, %v2729
        %v2732 = vadd.f32 %v2719, %v2730
        %v2733 = vadd.f32 %v2720, %v2731
        %s2734 = sadd.s32 %s2721, 2
        %s2735 = smul.u32 %s2734, 128
        %s2736 = sadd.s32 %s2735, %s2726
        %s2737 = sld [smem:[#allocation14 + %s2736]]
        %v2738 = vstv %s2737
        %v2739 = vmul.f32 %v1700, %v2738
        %v2740 = vmul.f32 %v1701, %v2738
        %s2741 = sadd.s32 %s2721, 3
        %s2742 = smul.u32 %s2741, 128
        %s2743 = sadd.s32 %s2742, %s2726
        %s2744 = sld [smem:[#allocation14 + %s2743]]
        %v2745 = vstv %s2744
        %v2746 = vmul.f32 %v1703, %v2745
        %v2747 = vmul.f32 %v1704, %v2745
        %v2748 = vadd.f32 %v2739, %v2746
        %v2749 = vadd.f32 %v2740, %v2747
        %v2750 = vadd.f32 %v2732, %v2748
        %v2751 = vadd.f32 %v2733, %v2749
        %s2752 = sld [smem:[#allocation15 + %s2716]]
        %v2753 = vstv %s2752
        %v2754 = vadd.f32 %v2750, %v2753
        %v2755 = vadd.f32 %v2751, %v2753
        %s2756 = scalar_lea.vmem %s333, 7 [#allocation3]
        %v2757 = vld [vmem:[%s2756] ss:$8 sm:$0x3]
        %s2758 = scalar_lea.vmem %s333, 23 [#allocation3]
        %v2759 = vld [vmem:[%s2758] ss:$8 sm:$0x3]
        %s2760 = scalar_lea.vmem %s333, 39 [#allocation3]
        %v2761 = vld [vmem:[%s2760] ss:$8 sm:$0x3]
        %s2762 = scalar_lea.vmem %s333, 55 [#allocation3]
        %v2763 = vld [vmem:[%s2762] ss:$8 sm:$0x3]
        %s2764 = scalar_lea.vmem %s333, 71 [#allocation3]
        %v2765 = vld [vmem:[%s2764] ss:$8 sm:$0x3]
        %s2766 = scalar_lea.vmem %s333, 87 [#allocation3]
        %v2767 = vld [vmem:[%s2766] ss:$8 sm:$0x3]
        %s2768 = scalar_lea.vmem %s333, 103 [#allocation3]
        %v2769 = vld [vmem:[%s2768] ss:$8 sm:$0x3]
        %s2770 = scalar_lea.vmem %s333, 119 [#allocation3]
        %v2771 = vld [vmem:[%s2770] ss:$8 sm:$0x3]
        %2780 = vst [vmem:[#allocation1] ss:$9 sm:$0xff] %v2757
        %s2781 = scalar_lea.vmem [#allocation1], 1
        %2782 = vst [vmem:[%s2781] ss:$9 sm:$0xff] %v2759
        %s2783 = scalar_lea.vmem [#allocation1], 2
        %2784 = vst [vmem:[%s2783] ss:$9 sm:$0xff] %v2761
        %s2785 = scalar_lea.vmem [#allocation1], 3
        %2786 = vst [vmem:[%s2785] ss:$9 sm:$0xff] %v2763
        %s2787 = scalar_lea.vmem [#allocation1], 4
        %2788 = vst [vmem:[%s2787] ss:$9 sm:$0xff] %v2765
        %s2789 = scalar_lea.vmem [#allocation1], 5
        %2790 = vst [vmem:[%s2789] ss:$9 sm:$0xff] %v2767
        %s2791 = scalar_lea.vmem [#allocation1], 6
        %2792 = vst [vmem:[%s2791] ss:$9 sm:$0xff] %v2769
        %s2793 = scalar_lea.vmem [#allocation1], 7
        %2794 = vst [vmem:[%s2793] ss:$9 sm:$0xff] %v2771
        %v2795 = vld [vmem:[#allocation1] sm:$0xff]
        %v2796 = vld [vmem:[#allocation1 + $0x9] sm:$0xff]
        %v2799 = vmul.f32 %v2754, %v2795
        %v2800 = vmul.f32 %v2755, %v2796
        %v2803 = vrot.slane %v2800, 7
        %v2804 = vsel %vm1792, %v2799, %v2803
        %v2805 = vsel %vm1794, %v2799, %v2803
        %v2806 = vrot.slane %v2805, 1
        %v2807 = vsel %vm1797, %v2799, %v2803
        %v2808 = vrot.slane %v2807, 2
        %v2809 = vsel %vm1800, %v2799, %v2803
        %v2810 = vrot.slane %v2809, 3
        %v2811 = vsel %vm1803, %v2799, %v2803
        %v2812 = vrot.slane %v2811, 4
        %v2813 = vsel %vm1806, %v2799, %v2803
        %v2814 = vrot.slane %v2813, 5
        %v2815 = vsel %vm1809, %v2799, %v2803
        %v2816 = vrot.slane %v2815, 6
        %v2817 = vsel %vm1812, %v2803, %v2799
        %v2818 = vrot.slane %v2817, 7
        %v2827 = vadd.f32 %v2757, %v2804
        %v2828 = vadd.f32 %v2759, %v2806
        %v2829 = vadd.f32 %v2761, %v2808
        %v2830 = vadd.f32 %v2763, %v2810
        %v2831 = vadd.f32 %v2765, %v2812
        %v2832 = vadd.f32 %v2767, %v2814
        %v2833 = vadd.f32 %v2769, %v2816
        %v2834 = vadd.f32 %v2771, %v2818
        %s2835 = scalar_lea.vmem %s395, 7 [#allocation17]
        %2836 = vst.msk [vmem:[%s2835] ss:$8 sm:$0x3] %vm1834, %v2827
        %2837 = vst.msk [vmem:[%s2835] ss:$8 sm:$0x0] %vm1834, %v2827
        %s2838 = scalar_lea.vmem %s395, 23 [#allocation17]
        %2839 = vst.msk [vmem:[%s2838] ss:$8 sm:$0x3] %vm1834, %v2828
        %2840 = vst.msk [vmem:[%s2838] ss:$8 sm:$0x0] %vm1834, %v2828
        %s2841 = scalar_lea.vmem %s395, 39 [#allocation17]
        %2842 = vst.msk [vmem:[%s2841] ss:$8 sm:$0x3] %vm1834, %v2829
        %2843 = vst.msk [vmem:[%s2841] ss:$8 sm:$0x0] %vm1834, %v2829
        %s2844 = scalar_lea.vmem %s395, 55 [#allocation17]
        %2845 = vst.msk [vmem:[%s2844] ss:$8 sm:$0x3] %vm1834, %v2830
        %2846 = vst.msk [vmem:[%s2844] ss:$8 sm:$0x0] %vm1834, %v2830
        %s2847 = scalar_lea.vmem %s395, 71 [#allocation17]
        %2848 = vst.msk [vmem:[%s2847] ss:$8 sm:$0x3] %vm1834, %v2831
        %2849 = vst.msk [vmem:[%s2847] ss:$8 sm:$0x0] %vm1834, %v2831
        %s2850 = scalar_lea.vmem %s395, 87 [#allocation17]
        %2851 = vst.msk [vmem:[%s2850] ss:$8 sm:$0x3] %vm1834, %v2832
        %2852 = vst.msk [vmem:[%s2850] ss:$8 sm:$0x0] %vm1834, %v2832
        %s2853 = scalar_lea.vmem %s395, 103 [#allocation17]
        %2854 = vst.msk [vmem:[%s2853] ss:$8 sm:$0x3] %vm1834, %v2833
        %2855 = vst.msk [vmem:[%s2853] ss:$8 sm:$0x0] %vm1834, %v2833
        %s2856 = scalar_lea.vmem %s395, 119 [#allocation17]
        %2857 = vst.msk [vmem:[%s2856] ss:$8 sm:$0x3] %vm1834, %v2834
        %2858 = vst.msk [vmem:[%s2856] ss:$8 sm:$0x0] %vm1834, %v2834
        %s2859 = sand.u32 %s205, 1
        %s2860 = scalar_lea.sflag [#allocation5], %s2859
        %s2861 = sand.u32 %s205, 1
        %s2862 = smul.addr %s2861, 128
        %s2863 = scalar_lea.vmem [#allocation17], %s2862
        // Predicated region
        $region81: #{tpu_custom_call.1} parent=47 // pred_check
          %p2864 = pneg %p215
        $region82: #{tpu_custom_call.1} parent=47 // pred_check_branch
          %2866 = sbr.rel (%p2864) target = $region84
        $region83: #{tpu_custom_call.1} parent=47 // pred_region
          %s2867 = smul.u32 8, %s33
          %2869 = vsyncadd %s2860, 0
          %s2870 = smul.addr %s34, 2
          %s2871 = smul.addr %s2867, 4
          %s2872 = sadd.s32 %s2870, %s2871
          %s2873 = smul.addr %s2872, 8
          %s2874 = scalar_lea.hbm %s7, %s2873
          %s2875 = sshll.u32 %s2863, 4
          %s2876 = int_to_ptr.vmem [resolvable:$true] %s2875
          %s2877 = sshll.u32 %s2874, 4
          %s2878 = int_to_ptr.hbm [resolvable:$true] %s2877
          %2883 = dma.vmem_to_hbm [thread:$0]  %s2876, 2048, %s2878, %s2860, 256, 512, 16
        $region84: #{tpu_custom_call.1} parent=47 // pred_fallthru
          _
      $region48: #{tpu_custom_call.1} parent=5 // pred_fallthru
        _
      %p2884 = scmp.le.s32.totalorder 2, %s24
      // Predicated region
      $region85: #{tpu_custom_call.1} parent=5 // pred_check
        %p2885 = pneg %p2884
      $region86: #{tpu_custom_call.1} parent=5 // pred_check_branch
        %2887 = sbr.rel (%p2885) target = $region88
      $region87: #{tpu_custom_call.1} parent=5 // pred_region
        %s2888 = ssub.s32 %s24, 2
        // Predicated region
        $region89: #{tpu_custom_call.1} parent=87 // pred_check
          %p2889 = pneg %p221
        $region90: #{tpu_custom_call.1} parent=87 // pred_check_branch
          %2891 = sbr.rel (%p2889) target = $region92
        $region91: #{tpu_custom_call.1} parent=87 // pred_region
          %s2892 = sand.u32 %s206, 1
          %s2893 = scalar_lea.sflag [#allocation5], %s2892
          %s2894 = sand.u32 %s206, 1
          %s2895 = smul.addr %s2894, 128
          %s2896 = scalar_lea.vmem [#allocation17], %s2895
          %2898 = dma.done %s2893, 2048
        $region92: #{tpu_custom_call.1} parent=87 // pred_fallthru
          _
      $region88: #{tpu_custom_call.1} parent=5 // pred_fallthru
        _
    $region6: #{tpu_custom_call.1} parent=1 // loop_footer
      %s28 = sadd.s32 1, %s24
    $region7: #{tpu_custom_call.1} parent=1 // loop_footer_branch
      %23 = sbr.rel target = $region3
    $region8: #{tpu_custom_call.1} parent=1 // loop_exit
      _
    %2899 = vsyncpa [#allocation4], 1
    %s2900 = scalar_lea.sflag [#allocation4], 1
    %2901 = vsyncpa %s2900, 1
    %2902 = vsyncpa [#allocation5], 1
    %s2903 = scalar_lea.sflag [#allocation5], 1
    %2904 = vsyncpa %s2903, 1
    %2905 = vsyncpa [#allocation6], 1
    %s2906 = scalar_lea.sflag [#allocation6], 1
    %2907 = vsyncpa %s2906, 1
    %2908 = vsyncpa [#allocation10], 1
    %2909 = vsyncpa [#allocation13], 1
    %2910 = vsyncpa [#allocation7], 1
    %s2911 = scalar_lea.sflag [#allocation7], 1
    %2912 = vsyncpa %s2911, 1
    %2913 = vsyncpa [#allocation16], 1

</llo_original>
